<compile_context>
chip_gen: v7x
topology: tpu7x:2x2x1
jax: 0.10.0
libtpu: 0.0.40
codegen_flags: <defaults>
</compile_context>

<pallas_src>
import math

import jax
import jax.numpy as jnp
from jax import lax
from jax.experimental import pallas as pl
from jax.experimental.pallas import tpu as pltpu

MATMUL_DTYPE = jnp.bfloat16            # MXU-native operands, f32 accumulation


def _detect_vmem_bytes():
    try:
        info = pltpu.get_tpu_info()
        for attr in ("vmem_capacity_bytes", "vmem_size_bytes", "vmem_bytes"):
            v = getattr(info, attr, None)
            if v:
                return int(v)
    except Exception:
        pass
    return 64 * 1024 * 1024            # conservative (v7x-sized) fallback


_VMEM_CAP = _detect_vmem_bytes()
_BIG_VMEM = _VMEM_CAP >= 100 * 1024 * 1024          # v5e / v6e (128 MiB)
_VMEM_LIMIT = (100 if _BIG_VMEM else 48) * 1024 * 1024
_LIN_TM = 512 if _BIG_VMEM else 256
_LIN_TN = 512 if _BIG_VMEM else 256
_LIN_TK = 512
_MOE_TM = 512 if _BIG_VMEM else 256                 # v6e: weight-stream bound at 256
_RMS_BM = 1024 if _BIG_VMEM else 512


def _cparams(dims):
    return pltpu.CompilerParams(dimension_semantics=dims,
                                vmem_limit_bytes=_VMEM_LIMIT)


def _pick_tile(n, target, align):
    """Largest aligned divisor of n that is <= target, else full n."""
    if n <= target:
        return n
    t = (target // align) * align
    while t >= align:
        if n % t == 0:
            return t
        t -= align
    return n


# ------------------------------ tiled linear ---------------------------------

def _linear_kernel(x_ref, w_ref, o_ref, acc_ref):
    k = pl.program_id(2)

    @pl.when(k == 0)
    def _():
        acc_ref[...] = jnp.zeros_like(acc_ref)

    acc_ref[...] += jnp.dot(x_ref[...], w_ref[...],
                            preferred_element_type=jnp.float32)

    @pl.when(k == pl.num_programs(2) - 1)
    def _():
        o_ref[...] = acc_ref[...].astype(o_ref.dtype)


def _linear_bias_kernel(x_ref, w_ref, b_ref, o_ref, acc_ref):
    k = pl.program_id(2)

    @pl.when(k == 0)
    def _():
        acc_ref[...] = jnp.zeros_like(acc_ref)

    acc_ref[...] += jnp.dot(x_ref[...], w_ref[...],
                            preferred_element_type=jnp.float32)

    @pl.when(k == pl.num_programs(2) - 1)
    def _():
        o_ref[...] = (acc_ref[...] + b_ref[...]).astype(o_ref.dtype)


def linear(x, w, b=None, *, out_dtype=MATMUL_DTYPE):
    """y = x @ w (+ b).  bf16 operands, f32 accumulate, tiled (M, N, K) grid.
    Output dtype defaults to bf16 (inter-kernel activations)."""
    M, K = x.shape
    N = w.shape[1]
    bm = _pick_tile(M, _LIN_TM, 16)        # bf16 packs 2 rows/sublane -> 16-align
    bn = _pick_tile(N, _LIN_TN, 128)
    bk = _pick_tile(K, _LIN_TK, 128)
    grid = (M // bm, N // bn, K // bk)
    xb = x.astype(MATMUL_DTYPE)
    wb = w.astype(MATMUL_DTYPE)

    in_specs = [pl.BlockSpec((bm, bk), lambda i, j, k: (i, k)),
                pl.BlockSpec((bk, bn), lambda i, j, k: (k, j))]
    args = (xb, wb)
    kernel = _linear_kernel
    if b is not None:
        in_specs.append(pl.BlockSpec((1, bn), lambda i, j, k: (0, j)))
        args = (xb, wb, b.astype(jnp.float32))
        kernel = _linear_bias_kernel

    return pl.pallas_call(
        kernel,
        out_shape=jax.ShapeDtypeStruct((M, N), out_dtype),
        grid=grid,
        in_specs=in_specs,
        out_specs=pl.BlockSpec((bm, bn), lambda i, j, k: (i, j)),
        scratch_shapes=[pltpu.VMEM((bm, bn), jnp.float32)],
        compiler_params=_cparams(("parallel", "parallel", "arbitrary")),
    )(*args)


# ------------------- fused Mamba inner kernel (per batch row) ----------------
# conv1d(causal, depthwise)+SiLU -> x_proj -> dt_proj -> softplus ->
# selective scan (h kept lane-dense as (n, d_in)) -> +u*D -> *SiLU(res)

def _mamba_inner_kernel(xc_ref, res_ref, cw_ref, cb_ref, wdt_ref, wB_ref, wC_ref,
                        dtw_ref, dtb_ref, A_ref, D_ref, o_ref,
                        u_sc, dlt_sc, du_sc, Bm_sc, Cm_sc):
    L, d_in = xc_ref.shape
    K = cw_ref.shape[0]
    n = A_ref.shape[0]

    # ---- causal depthwise conv1d + SiLU (XLU roll + mask; no pad/concat) -----
    xc = xc_ref[...].astype(jnp.float32)
    t_col = lax.broadcasted_iota(jnp.int32, (L, 1), 0)
    acc = jnp.zeros((L, d_in), jnp.float32)
    for s in range(K):                                   # static unroll over taps
        shifted = pltpu.roll(xc, shift=s, axis=0) if s > 0 else xc
        shifted = jnp.where(t_col >= s, shifted, 0.0)
        acc = acc + shifted * cw_ref[K - 1 - s:K - s, :]
    yc = acc + cb_ref[...]
    u = yc * jax.nn.sigmoid(yc)                          # SiLU, (L, d_in) f32
    u_sc[...] = u
    u_b = u.astype(wdt_ref.dtype)                        # bf16 MXU operands

    # ---- x_proj (weights pre-split) + dt_proj + softplus (torch thresh=20) ---
    dt_r = jnp.dot(u_b, wdt_ref[...], preferred_element_type=jnp.float32)
    Bm_sc[...] = jnp.dot(u_b, wB_ref[...], preferred_element_type=jnp.float32)
    Cm_sc[...] = jnp.dot(u_b, wC_ref[...], preferred_element_type=jnp.float32)
    dt = jnp.dot(dt_r.astype(dtw_ref.dtype), dtw_ref[...],
                 preferred_element_type=jnp.float32) + dtb_ref[...]
    exp_dt = jnp.exp(jnp.minimum(dt, 20.0))
    # TODO(synk): uses log(1+exp) (guaranteed Mosaic lowering) with an exp(x)
    # branch for x < -20 to recover log1p-level accuracy at very negative dt.
    delta = jnp.where(dt > 20.0, dt,
                      jnp.where(dt < -20.0, exp_dt, jnp.log(1.0 + exp_dt)))
    dlt_sc[...] = delta
    du_sc[...] = delta * u

    # ---- selective scan: state h is (n, d_in) so d_in is the lane axis -------
    A = A_ref[...]                                       # (n, d_in)
    D = D_ref[...]                                       # (1, d_in)

    CH = 8 if L % 8 == 0 else (4 if L % 4 == 0 else (2 if L % 2 == 0 else 1))

    def chunk_body(c, h):
        c0 = pl.multiple_of(c * CH, CH)
        dlt_c = dlt_sc[pl.ds(c0, CH), :]                 # (CH, d_in)
        du_c = du_sc[pl.ds(c0, CH), :]                   # (CH, d_in)
        Bm_c = Bm_sc[pl.ds(c0, CH), :]                   # (CH, n)
        Cm_c = Cm_sc[pl.ds(c0, CH), :]                   # (CH, n)
        u_c = u_sc[pl.ds(c0, CH), :]                     # (CH, d_in)
        r_c = res_ref[pl.ds(c0, CH), :].astype(jnp.float32)

        # h-independent work hoisted off the serial chain, batched per chunk.
        dA_c = jnp.exp(dlt_c[:, None, :] * A[None, :, :])       # (CH, n, d_in)
        dBu_c = Bm_c[:, :, None] * du_c[:, None, :]             # (CH, n, d_in)

        hs = []
        for t in range(CH):                              # static unroll: FMA chain
            h = dA_c[t] * h + dBu_c[t]
            hs.append(h[None])
        H_c = jnp.concatenate(hs, axis=0)                # (CH, n, d_in)
        y_c = jnp.sum(Cm_c[:, :, None] * H_c, axis=1)    # (CH, d_in) VPU+XLU, no MXU

        # skip connection + output gate, one full-tile store per chunk
        out_c = (y_c + u_c * D) * (r_c * jax.nn.sigmoid(r_c))
        o_ref[pl.ds(c0, CH), :] = out_c.astype(o_ref.dtype)
        return h

    lax.fori_loop(0, L // CH, chunk_body, jnp.zeros((n, d_in), jnp.float32))


def mamba_inner(xc, res, conv_w, conv_b, w_dt, w_B, w_C, dt_w, dt_b, A_T, D):
    B, L, d_in = xc.shape
    K = conv_w.shape[0]
    n = A_T.shape[0]
    dt_rank = w_dt.shape[1]
    per_b = pl.BlockSpec((None, L, d_in), lambda b: (b, 0, 0))
    # TODO(synk): for long sequences, add an L-chunk grid axis (arbitrary) with
    # h and the last K-1 conv rows carried in scratch to bound VMEM (v7x 64MiB).
    # TODO(synk): split projection (parallel over B*L) from the scan (parallel
    # over B x d_in-chunks) to use both v7x TensorCores on the recurrence.
    return pl.pallas_call(
        _mamba_inner_kernel,
        out_shape=jax.ShapeDtypeStruct((B, L, d_in), MATMUL_DTYPE),
        grid=(B,),
        in_specs=[per_b, per_b,
                  pl.BlockSpec((K, d_in), lambda b: (0, 0)),
                  pl.BlockSpec((1, d_in), lambda b: (0, 0)),
                  pl.BlockSpec((d_in, dt_rank), lambda b: (0, 0)),
                  pl.BlockSpec((d_in, n), lambda b: (0, 0)),
                  pl.BlockSpec((d_in, n), lambda b: (0, 0)),
                  pl.BlockSpec((dt_rank, d_in), lambda b: (0, 0)),
                  pl.BlockSpec((1, d_in), lambda b: (0, 0)),
                  pl.BlockSpec((n, d_in), lambda b: (0, 0)),
                  pl.BlockSpec((1, d_in), lambda b: (0, 0))],
        out_specs=per_b,
        scratch_shapes=[pltpu.VMEM((L, d_in), jnp.float32),   # u
                        pltpu.VMEM((L, d_in), jnp.float32),   # delta
                        pltpu.VMEM((L, d_in), jnp.float32),   # delta*u
                        pltpu.VMEM((L, n), jnp.float32),      # B
                        pltpu.VMEM((L, n), jnp.float32)],     # C
        compiler_params=_cparams(("parallel",)),
    )(xc.astype(MATMUL_DTYPE), res.astype(MATMUL_DTYPE),
      conv_w.astype(jnp.float32), conv_b.astype(jnp.float32),
      w_dt.astype(MATMUL_DTYPE), w_B.astype(MATMUL_DTYPE),
      w_C.astype(MATMUL_DTYPE), dt_w.astype(MATMUL_DTYPE),
      dt_b.astype(jnp.float32), A_T.astype(jnp.float32), D.astype(jnp.float32))


# --------------- fused SwitchMoE experts (w1 -> GELU -> w2 -> combine) --------

def _gelu_tanh(x):
    # tanh-form GELU: one EUP transcendental per element (vs exp+div for erf).
    c = 0.7978845608028654  # sqrt(2/pi)
    return 0.5 * x * (1.0 + jnp.tanh(c * (x + 0.044715 * x * x * x)))


def _moe_expert_kernel(x_ref, g_ref, w1_ref, b1_ref, w2_ref, b2_ref, o_ref, acc_ref):
    e = pl.program_id(1)

    @pl.when(e == 0)
    def _():
        acc_ref[...] = jnp.zeros_like(acc_ref)

    h = jnp.dot(x_ref[...], w1_ref[...],
                preferred_element_type=jnp.float32) + b1_ref[...]
    h = _gelu_tanh(h)
    y = jnp.dot(h.astype(w2_ref.dtype), w2_ref[...],
                preferred_element_type=jnp.float32) + b2_ref[...]
    y = jnp.where(jnp.isnan(y), 0.0, y)                  # torch NaN->0 on experts

    g = g_ref[...]                                       # (tm, 1) lane-dense column
    g = jnp.where(jnp.isnan(g), 0.0, g)                  # torch NaN->0 on gates
    acc_ref[...] += g * y

    @pl.when(e == pl.num_programs(1) - 1)
    def _():
        o_ref[...] = acc_ref[...].astype(o_ref.dtype)


def moe_experts(x, gate, w1, b1, w2, b2):
    M, dim = x.shape
    E, _, inner = w1.shape
    tm = _pick_tile(M, _MOE_TM, 16)
    xb = x.astype(MATMUL_DTYPE)
    # deliver gate column directly: (E, M, 1), sliced (tm, 1) per (m, e) step
    gate_cols = jnp.transpose(gate.astype(jnp.float32))[..., None]
    w1b = w1.astype(MATMUL_DTYPE)
    w2b = w2.astype(MATMUL_DTYPE)
    return pl.pallas_call(
        _moe_expert_kernel,
        out_shape=jax.ShapeDtypeStruct((M, dim), MATMUL_DTYPE),
        grid=(M // tm, E),
        in_specs=[pl.BlockSpec((tm, dim), lambda m, e: (m, 0)),      # x resident over E
                  pl.BlockSpec((None, tm, 1), lambda m, e: (e, m, 0)),
                  pl.BlockSpec((None, dim, inner), lambda m, e: (e, 0, 0)),
                  pl.BlockSpec((None, 1, inner), lambda m, e: (e, 0, 0)),
                  pl.BlockSpec((None, inner, dim), lambda m, e: (e, 0, 0)),
                  pl.BlockSpec((None, 1, dim), lambda m, e: (e, 0, 0))],
        out_specs=pl.BlockSpec((tm, dim), lambda m, e: (m, 0)),
        scratch_shapes=[pltpu.VMEM((tm, dim), jnp.float32)],
        compiler_params=_cparams(("parallel", "arbitrary")),
    )(xb, gate_cols, w1b, b1.astype(jnp.float32), w2b, b2.astype(jnp.float32))


# ---------------------------------- RMSNorm -----------------------------------

def _rmsnorm_kernel(x_ref, g_ref, o_ref):
    # zeta RMSNorm: F.normalize(x, dim=-1) * sqrt(dim) * g
    x = x_ref[...].astype(jnp.float32)
    ss = jnp.sum(x * x, axis=-1, keepdims=True)
    inv = lax.rsqrt(jnp.maximum(ss, 1e-24))        # == 1 / max(||x||, 1e-12)
    o_ref[...] = (x * inv * (float(x.shape[-1]) ** 0.5) * g_ref[...]).astype(o_ref.dtype)


def rmsnorm(x, g):
    M, D = x.shape
    bm = _pick_tile(M, _RMS_BM, 16)
    return pl.pallas_call(
        _rmsnorm_kernel,
        out_shape=jax.ShapeDtypeStruct((M, D), MATMUL_DTYPE),
        grid=(M // bm,),
        in_specs=[pl.BlockSpec((bm, D), lambda i: (i, 0)),
                  pl.BlockSpec((1, D), lambda i: (0, 0))],
        out_specs=pl.BlockSpec((bm, D), lambda i: (i, 0)),
        compiler_params=_cparams(("parallel",)),
    )(x, g.astype(jnp.float32))


# ------------------------------- model (glue) ---------------------------------

def init_params(key, num_tokens, dim, depth, d_state, num_experts,
                expand=2, d_conv=4, ffn_mult=4):
    d_in = dim * expand
    dt_rank = math.ceil(dim / 16)
    inner = dim * ffn_mult
    keys = iter(jax.random.split(key, 256))

    def nrm(shape, scale=0.05):
        return (scale * jax.random.normal(next(keys), shape)).astype(jnp.float32)

    params = {'emb': nrm((num_tokens, dim), 1.0), 'layers': []}
    for _ in range(depth):
        n_arange = jnp.arange(1, d_state + 1, dtype=jnp.float32)
        lp = {
            # --- MambaBlock (zeta simple_mamba defaults: expand=2, d_conv=4) ---
            'in_w': nrm((dim, 2 * d_in)),                    # in_proj (bias=False)
            'conv_w': nrm((d_conv, d_in)),                   # depthwise conv taps
            'conv_b': nrm((1, d_in)),
            'xproj_w': nrm((d_in, dt_rank + 2 * d_state)),   # bias=False
            'dt_w': nrm((dt_rank, d_in)),
            'dt_b': nrm((1, d_in)),
            'A': -jnp.tile(n_arange[None, :], (d_in, 1)),    # -exp(A_log)
            'D': jnp.ones((1, d_in), jnp.float32),
            'out_w': nrm((d_in, dim)),                       # bias=False
            # --- SwitchMoE ---
            'gate_w': nrm((dim, num_experts)),
            'gate_b': nrm((1, num_experts)),
            'exp_w1': nrm((num_experts, dim, inner)),
            'exp_b1': nrm((num_experts, 1, inner)),
            'exp_w2': nrm((num_experts, inner, dim)),
            'exp_b2': nrm((num_experts, 1, dim)),
        }
        params['layers'].append(lp)
    params['g'] = jnp.ones((1, dim), jnp.float32)            # RMSNorm gain
    params['lm_w'] = nrm((dim, num_tokens))
    params['lm_b'] = nrm((1, num_tokens))
    return params


def switch_gate(x, gate_w, gate_b, capacity_factor=1.0, eps=1e-6):
    """SwitchGate.forward reproduced exactly, including torch's scatter_(dim=1)
    behavior on a 3-D (B, L, E) tensor (only the expert-0 column of the mask is
    populated, at seq positions equal to each token's argmax expert index)."""
    B, L, dim = x.shape
    logits = linear(x.reshape(B * L, dim), gate_w, gate_b,
                    out_dtype=jnp.float32).reshape(B, L, -1)
    E = logits.shape[-1]
    scores = jax.nn.softmax(logits, axis=-1)
    capacity = int(capacity_factor * B)                      # x.size(0)
    top_idx = jnp.argmax(scores, axis=-1)                    # topk(1) indices, (B, L)
    # O(B*L) scatter replaces the old O(L^2) position-comparison tensor.
    mask0 = jnp.zeros((B, L), scores.dtype).at[
        jnp.arange(B)[:, None], top_idx].set(1.0)            # (B, L)
    mask = jnp.concatenate(
        [mask0[:, :, None], jnp.zeros((B, L, E - 1), scores.dtype)], axis=-1)
    masked = scores * mask
    denom = jnp.sum(masked, axis=0, keepdims=True) + eps     # sum over batch
    return masked / denom * capacity


def mamba_block(x, lp):
    B, L, dim = x.shape
    d_in, d_state = lp['A'].shape
    dt_rank = lp['dt_w'].shape[0]

    xz = linear(x.reshape(B * L, dim), lp['in_w']).reshape(B, L, 2 * d_in)  # bf16
    xc, res = xz[..., :d_in], xz[..., d_in:]
    w_dt = lp['xproj_w'][:, :dt_rank]
    w_B = lp['xproj_w'][:, dt_rank:dt_rank + d_state]
    w_C = lp['xproj_w'][:, dt_rank + d_state:]
    y = mamba_inner(xc, res, lp['conv_w'], lp['conv_b'], w_dt, w_B, w_C,
                    lp['dt_w'], lp['dt_b'], lp['A'].T, lp['D'])             # bf16
    return linear(y.reshape(B * L, d_in), lp['out_w']).reshape(B, L, dim)   # bf16


def switch_moe(x, lp):
    B, L, dim = x.shape
    gate = switch_gate(x, lp['gate_w'], lp['gate_b'])        # (B, L, E), f32
    out = moe_experts(x.reshape(B * L, dim), gate.reshape(B * L, -1),
                      lp['exp_w1'], lp['exp_b1'], lp['exp_w2'], lp['exp_b2'])
    return out.reshape(B, L, dim)


def moe_mamba_forward(tokens, params):
    B, L = tokens.shape
    dim = params['emb'].shape[1]
    x = jnp.take(params['emb'], tokens, axis=0)              # embedding gather
    for lp in params['layers']:
        x = mamba_block(x, lp)
        x = switch_moe(x, lp)
    x = rmsnorm(x.reshape(B * L, dim), params['g']).reshape(B, L, dim)
    logits = linear(x.reshape(B * L, dim), params['lm_w'], params['lm_b'],
                    out_dtype=jnp.float32)                    # final logits f32
    return logits.reshape(B, L, -1)


# ------------------------------------ main ------------------------------------

if __name__ == "__main__":
    num_tokens, dim, depth, d_state, num_experts = 64, 32, 2, 8, 4
    B, L = 2, 8

    key = jax.random.PRNGKey(0)
    pkey, tkey = jax.random.split(key)
    params = init_params(pkey, num_tokens, dim, depth, d_state, num_experts)
    tokens = jax.random.randint(tkey, (B, L), 0, num_tokens, dtype=jnp.int32)

    fwd = jax.jit(moe_mamba_forward)
    out = jax.block_until_ready(fwd(tokens, params))

    assert out.shape == (B, L, num_tokens), out.shape
    assert out.dtype == jnp.float32
    assert bool(jnp.all(jnp.isfinite(out)))
    print("KERNEL_OK")
</pallas_src>

<mosaic_0001>
module attributes {stable_mosaic.version = 11 : i64} {
  func.func @_linear_kernel(%arg0: i32, %arg1: i32, %arg2: i32, %arg3: memref<16x32xbf16, #tpu.memory_space<vmem>>, %arg4: memref<32x128xbf16, #tpu.memory_space<vmem>>, %arg5: memref<16x128xbf16, #tpu.memory_space<vmem>>, %arg6: memref<16x128xf32, #tpu.memory_space<vmem>>) attributes {dimension_semantics = [#tpu.dimension_semantics<parallel>, #tpu.dimension_semantics<parallel>, #tpu.dimension_semantics<arbitrary>], iteration_bounds = array<i64: 1, 1, 1>, scalar_prefetch = 0 : i64, scratch_operands = 1 : i64, tpu.core_type = #tpu.core_type<tc>, window_params = [{transform_indices = @transform_0, window_bounds = array<i64: 16, 32>}, {transform_indices = @transform_1, window_bounds = array<i64: 32, 128>}, {transform_indices = @transform_2, window_bounds = array<i64: 16, 128>}]} {
    %c0_i32 = arith.constant 0 : i32
    %0 = arith.cmpi eq, %arg2, %c0_i32 : i32
    %1 = arith.extui %0 : i1 to i32
    %c0_i32_0 = arith.constant 0 : i32
    %2 = arith.cmpi ne, %1, %c0_i32_0 : i32
    scf.if %2 {
      %cst_10 = arith.constant 0.000000e+00 : f32
      %12 = vector.broadcast %cst_10 : f32 to vector<16x128xf32>
      %c0_11 = arith.constant 0 : index
      %c0_12 = arith.constant 0 : index
      %13 = vector.load %arg6[%c0_11, %c0_12] : memref<16x128xf32, #tpu.memory_space<vmem>>, vector<16x128xf32>
      tpu.vector_store %arg6[%c0_11, %c0_12], %12 {strides = array<i32>} : memref<16x128xf32, #tpu.memory_space<vmem>>, vector<16x128xf32>,
    } else {
    }
    %c0 = arith.constant 0 : index
    %c0_1 = arith.constant 0 : index
    %3 = vector.load %arg6[%c0, %c0_1] : memref<16x128xf32, #tpu.memory_space<vmem>>, vector<16x128xf32>
    %c0_2 = arith.constant 0 : index
    %c0_3 = arith.constant 0 : index
    %4 = vector.load %arg3[%c0_2, %c0_3] : memref<16x32xbf16, #tpu.memory_space<vmem>>, vector<16x32xbf16>
    %c0_4 = arith.constant 0 : index
    %c0_5 = arith.constant 0 : index
    %5 = vector.load %arg4[%c0_4, %c0_5] : memref<32x128xbf16, #tpu.memory_space<vmem>>, vector<32x128xbf16>
    %cst = arith.constant dense<0.000000e+00> : vector<16x128xf32>
    %6 = tpu.matmul %4, %5, %cst {dimension_numbers = #tpu.dot_dimension_numbers<[1], [0], [0], [1], [0, 0, 1, 1], [], []>} : vector<16x32xbf16>, vector<32x128xbf16>, vector<16x128xf32> -> vector<16x128xf32>
    %7 = arith.addf %3, %6 : vector<16x128xf32>
    %c0_6 = arith.constant 0 : index
    %c0_7 = arith.constant 0 : index
    %8 = vector.load %arg6[%c0_6, %c0_7] : memref<16x128xf32, #tpu.memory_space<vmem>>, vector<16x128xf32>
    tpu.vector_store %arg6[%c0_6, %c0_7], %7 {strides = array<i32>} : memref<16x128xf32, #tpu.memory_space<vmem>>, vector<16x128xf32>,
    %c0_i32_8 = arith.constant 0 : i32
    %9 = arith.cmpi eq, %arg2, %c0_i32_8 : i32
    %10 = arith.extui %9 : i1 to i32
    %c0_i32_9 = arith.constant 0 : i32
    %11 = arith.cmpi ne, %10, %c0_i32_9 : i32
    scf.if %11 {
      %c0_10 = arith.constant 0 : index
      %c0_11 = arith.constant 0 : index
      %12 = vector.load %arg6[%c0_10, %c0_11] : memref<16x128xf32, #tpu.memory_space<vmem>>, vector<16x128xf32>
      %13 = arith.truncf %12 : vector<16x128xf32> to vector<16x128xbf16>
      %c0_12 = arith.constant 0 : index
      %c0_13 = arith.constant 0 : index
      %14 = vector.load %arg5[%c0_12, %c0_13] : memref<16x128xbf16, #tpu.memory_space<vmem>>, vector<16x128xbf16>
      tpu.vector_store %arg5[%c0_12, %c0_13], %13 {strides = array<i32>} : memref<16x128xbf16, #tpu.memory_space<vmem>>, vector<16x128xbf16>,
    } else {
    }
    return
  }
  func.func @transform_0(%arg0: i32, %arg1: i32, %arg2: i32) -> (i32, i32) {
    %c0_i32 = arith.constant 0 : i32
    return %arg0, %arg2 : i32, i32
  }
  func.func @transform_1(%arg0: i32, %arg1: i32, %arg2: i32) -> (i32, i32) {
    %c0_i32 = arith.constant 0 : i32
    return %arg2, %arg1 : i32, i32
  }
  func.func @transform_2(%arg0: i32, %arg1: i32, %arg2: i32) -> (i32, i32) {
    %c0_i32 = arith.constant 0 : i32
    return %arg0, %arg1 : i32, i32
  }
}

module attributes {stable_mosaic.version = 11 : i64} {
  func.func @_mamba_inner_kernel(%arg0: i32, %arg1: memref<1x8x64xbf16, #tpu.memory_space<vmem>>, %arg2: memref<1x8x64xbf16, #tpu.memory_space<vmem>>, %arg3: memref<4x64xf32, #tpu.memory_space<vmem>>, %arg4: memref<1x64xf32, #tpu.memory_space<vmem>>, %arg5: memref<64x2xbf16, #tpu.memory_space<vmem>>, %arg6: memref<64x8xbf16, #tpu.memory_space<vmem>>, %arg7: memref<64x8xbf16, #tpu.memory_space<vmem>>, %arg8: memref<2x64xbf16, #tpu.memory_space<vmem>>, %arg9: memref<1x64xf32, #tpu.memory_space<vmem>>, %arg10: memref<8x64xf32, #tpu.memory_space<vmem>>, %arg11: memref<1x64xf32, #tpu.memory_space<vmem>>, %arg12: memref<1x8x64xbf16, #tpu.memory_space<vmem>>, %arg13: memref<8x64xf32, #tpu.memory_space<vmem>>, %arg14: memref<8x64xf32, #tpu.memory_space<vmem>>, %arg15: memref<8x64xf32, #tpu.memory_space<vmem>>, %arg16: memref<8x8xf32, #tpu.memory_space<vmem>>, %arg17: memref<8x8xf32, #tpu.memory_space<vmem>>) attributes {dimension_semantics = [#tpu.dimension_semantics<parallel>], iteration_bounds = array<i64: 2>, scalar_prefetch = 0 : i64, scratch_operands = 5 : i64, tpu.core_type = #tpu.core_type<tc>, window_params = [{transform_indices = @transform_0, window_bounds = array<i64: 1, 8, 64>}, {transform_indices = @transform_1, window_bounds = array<i64: 1, 8, 64>}, {pipeline_mode = #tpu.pipeline_mode<synchronous>, transform_indices = @transform_2, window_bounds = array<i64: 4, 64>}, {pipeline_mode = #tpu.pipeline_mode<synchronous>, transform_indices = @transform_3, window_bounds = array<i64: 1, 64>}, {pipeline_mode = #tpu.pipeline_mode<synchronous>, transform_indices = @transform_4, window_bounds = array<i64: 64, 2>}, {pipeline_mode = #tpu.pipeline_mode<synchronous>, transform_indices = @transform_5, window_bounds = array<i64: 64, 8>}, {pipeline_mode = #tpu.pipeline_mode<synchronous>, transform_indices = @transform_6, window_bounds = array<i64: 64, 8>}, {pipeline_mode = #tpu.pipeline_mode<synchronous>, transform_indices = @transform_7, window_bounds = array<i64: 2, 64>}, {pipeline_mode = #tpu.pipeline_mode<synchronous>, transform_indices = @transform_8, window_bounds = array<i64: 1, 64>}, {pipeline_mode = #tpu.pipeline_mode<synchronous>, transform_indices = @transform_9, window_bounds = array<i64: 8, 64>}, {pipeline_mode = #tpu.pipeline_mode<synchronous>, transform_indices = @transform_10, window_bounds = array<i64: 1, 64>}, {transform_indices = @transform_11, window_bounds = array<i64: 1, 8, 64>}]} {
    %c0 = arith.constant 0 : index
    %c0_0 = arith.constant 0 : index
    %c0_1 = arith.constant 0 : index
    %0 = vector.load %arg1[%c0, %c0_0, %c0_1] : memref<1x8x64xbf16, #tpu.memory_space<vmem>>, vector<1x8x64xbf16>
    %1 = vector.shape_cast %0 : vector<1x8x64xbf16> to vector<8x64xbf16>
    %2 = arith.extf %1 : vector<8x64xbf16> to vector<8x64xf32>
    %3 = tpu.iota {dimensions = array<i32: 0>} : vector<8x1xi32>
    %cst = arith.constant 0.000000e+00 : f32
    %4 = vector.broadcast %cst : f32 to vector<8x64xf32>
    %c0_i32 = arith.constant 0 : i32
    %5 = vector.broadcast %c0_i32 : i32 to vector<8x1xi32>
    %6 = arith.cmpi sge, %3, %5 : vector<8x1xi32>
    %cst_2 = arith.constant 0.000000e+00 : f32
    %7 = vector.shape_cast %6 : vector<8x1xi1> to vector<8x1xi1>
    %8 = vector.broadcast %7 : vector<8x1xi1> to vector<8x64xi1>
    %9 = vector.broadcast %cst_2 : f32 to vector<8x64xf32>
    %10 = arith.select %8, %2, %9 : vector<8x64xi1>, vector<8x64xf32>
    %c3 = arith.constant 3 : index
    %c0_3 = arith.constant 0 : index
    %11 = vector.load %arg3[%c3, %c0_3] : memref<4x64xf32, #tpu.memory_space<vmem>>, vector<1x64xf32>
    %12 = vector.broadcast %11 : vector<1x64xf32> to vector<8x64xf32>
    %13 = arith.mulf %10, %12 : vector<8x64xf32>
    %14 = arith.addf %4, %13 : vector<8x64xf32>
    %c1_i32 = arith.constant 1 : i32
    %15 = tpu.dynamic_rotate %2 by %c1_i32 dim 0 : vector<8x64xf32>, i32 -> vector<8x64xf32>
    %c1_i32_4 = arith.constant 1 : i32
    %16 = vector.broadcast %c1_i32_4 : i32 to vector<8x1xi32>
    %17 = arith.cmpi sge, %3, %16 : vector<8x1xi32>
    %cst_5 = arith.constant 0.000000e+00 : f32
    %18 = vector.shape_cast %17 : vector<8x1xi1> to vector<8x1xi1>
    %19 = vector.broadcast %18 : vector<8x1xi1> to vector<8x64xi1>
    %20 = vector.broadcast %cst_5 : f32 to vector<8x64xf32>
    %21 = arith.select %19, %15, %20 : vector<8x64xi1>, vector<8x64xf32>
    %c2 = arith.constant 2 : index
    %c0_6 = arith.constant 0 : index
    %22 = vector.load %arg3[%c2, %c0_6] : memref<4x64xf32, #tpu.memory_space<vmem>>, vector<1x64xf32>
    %23 = vector.broadcast %22 : vector<1x64xf32> to vector<8x64xf32>
    %24 = arith.mulf %21, %23 : vector<8x64xf32>
    %25 = arith.addf %14, %24 : vector<8x64xf32>
    %c2_i32 = arith.constant 2 : i32
    %26 = tpu.dynamic_rotate %2 by %c2_i32 dim 0 : vector<8x64xf32>, i32 -> vector<8x64xf32>
    %c2_i32_7 = arith.constant 2 : i32
    %27 = vector.broadcast %c2_i32_7 : i32 to vector<8x1xi32>
    %28 = arith.cmpi sge, %3, %27 : vector<8x1xi32>
    %cst_8 = arith.constant 0.000000e+00 : f32
    %29 = vector.shape_cast %28 : vector<8x1xi1> to vector<8x1xi1>
    %30 = vector.broadcast %29 : vector<8x1xi1> to vector<8x64xi1>
    %31 = vector.broadcast %cst_8 : f32 to vector<8x64xf32>
    %32 = arith.select %30, %26, %31 : vector<8x64xi1>, vector<8x64xf32>
    %c1 = arith.constant 1 : index
    %c0_9 = arith.constant 0 : index
    %33 = vector.load %arg3[%c1, %c0_9] : memref<4x64xf32, #tpu.memory_space<vmem>>, vector<1x64xf32>
    %34 = vector.broadcast %33 : vector<1x64xf32> to vector<8x64xf32>
    %35 = arith.mulf %32, %34 : vector<8x64xf32>
    %36 = arith.addf %25, %35 : vector<8x64xf32>
    %c3_i32 = arith.constant 3 : i32
    %37 = tpu.dynamic_rotate %2 by %c3_i32 dim 0 : vector<8x64xf32>, i32 -> vector<8x64xf32>
    %c3_i32_10 = arith.constant 3 : i32
    %38 = vector.broadcast %c3_i32_10 : i32 to vector<8x1xi32>
    %39 = arith.cmpi sge, %3, %38 : vector<8x1xi32>
    %cst_11 = arith.constant 0.000000e+00 : f32
    %40 = vector.shape_cast %39 : vector<8x1xi1> to vector<8x1xi1>
    %41 = vector.broadcast %40 : vector<8x1xi1> to vector<8x64xi1>
    %42 = vector.broadcast %cst_11 : f32 to vector<8x64xf32>
    %43 = arith.select %41, %37, %42 : vector<8x64xi1>, vector<8x64xf32>
    %c0_12 = arith.constant 0 : index
    %c0_13 = arith.constant 0 : index
    %44 = vector.load %arg3[%c0_12, %c0_13] : memref<4x64xf32, #tpu.memory_space<vmem>>, vector<1x64xf32>
    %45 = vector.broadcast %44 : vector<1x64xf32> to vector<8x64xf32>
    %46 = arith.mulf %43, %45 : vector<8x64xf32>
    %47 = arith.addf %36, %46 : vector<8x64xf32>
    %c0_14 = arith.constant 0 : index
    %c0_15 = arith.constant 0 : index
    %48 = vector.load %arg4[%c0_14, %c0_15] : memref<1x64xf32, #tpu.memory_space<vmem>>, vector<1x64xf32>
    %49 = vector.broadcast %48 : vector<1x64xf32> to vector<8x64xf32>
    %50 = arith.addf %47, %49 : vector<8x64xf32>
    %51 = arith.negf %50 : vector<8x64xf32>
    %52 = math.exp %51 : vector<8x64xf32>
    %cst_16 = arith.constant 1.000000e+00 : f32
    %53 = vector.broadcast %cst_16 : f32 to vector<8x64xf32>
    %54 = arith.addf %53, %52 : vector<8x64xf32>
    %55 = arith.divf %53, %54 : vector<8x64xf32>
    %56 = arith.mulf %50, %55 : vector<8x64xf32>
    %c0_17 = arith.constant 0 : index
    %c0_18 = arith.constant 0 : index
    %57 = vector.load %arg13[%c0_17, %c0_18] : memref<8x64xf32, #tpu.memory_space<vmem>>, vector<8x64xf32>
    tpu.vector_store %arg13[%c0_17, %c0_18], %56 {strides = array<i32>} : memref<8x64xf32, #tpu.memory_space<vmem>>, vector<8x64xf32>,
    %58 = arith.truncf %56 : vector<8x64xf32> to vector<8x64xbf16>
    %c0_19 = arith.constant 0 : index
    %c0_20 = arith.constant 0 : index
    %59 = vector.load %arg5[%c0_19, %c0_20] : memref<64x2xbf16, #tpu.memory_space<vmem>>, vector<64x2xbf16>
    %cst_21 = arith.constant dense<0.000000e+00> : vector<8x2xf32>
    %60 = tpu.matmul %58, %59, %cst_21 {dimension_numbers = #tpu.dot_dimension_numbers<[1], [0], [0], [1], [0, 0, 1, 1], [], []>} : vector<8x64xbf16>, vector<64x2xbf16>, vector<8x2xf32> -> vector<8x2xf32>
    %c0_22 = arith.constant 0 : index
    %c0_23 = arith.constant 0 : index
    %61 = vector.load %arg6[%c0_22, %c0_23] : memref<64x8xbf16, #tpu.memory_space<vmem>>, vector<64x8xbf16>
    %cst_24 = arith.constant dense<0.000000e+00> : vector<8x8xf32>
    %62 = tpu.matmul %58, %61, %cst_24 {dimension_numbers = #tpu.dot_dimension_numbers<[1], [0], [0], [1], [0, 0, 1, 1], [], []>} : vector<8x64xbf16>, vector<64x8xbf16>, vector<8x8xf32> -> vector<8x8xf32>
    %c0_25 = arith.constant 0 : index
    %c0_26 = arith.constant 0 : index
    %63 = vector.load %arg16[%c0_25, %c0_26] : memref<8x8xf32, #tpu.memory_space<vmem>>, vector<8x8xf32>
    tpu.vector_store %arg16[%c0_25, %c0_26], %62 {strides = array<i32>} : memref<8x8xf32, #tpu.memory_space<vmem>>, vector<8x8xf32>,
    %c0_27 = arith.constant 0 : index
    %c0_28 = arith.constant 0 : index
    %64 = vector.load %arg7[%c0_27, %c0_28] : memref<64x8xbf16, #tpu.memory_space<vmem>>, vector<64x8xbf16>
    %cst_29 = arith.constant dense<0.000000e+00> : vector<8x8xf32>
    %65 = tpu.matmul %58, %64, %cst_29 {dimension_numbers = #tpu.dot_dimension_numbers<[1], [0], [0], [1], [0, 0, 1, 1], [], []>} : vector<8x64xbf16>, vector<64x8xbf16>, vector<8x8xf32> -> vector<8x8xf32>
    %c0_30 = arith.constant 0 : index
    %c0_31 = arith.constant 0 : index
    %66 = vector.load %arg17[%c0_30, %c0_31] : memref<8x8xf32, #tpu.memory_space<vmem>>, vector<8x8xf32>
    tpu.vector_store %arg17[%c0_30, %c0_31], %65 {strides = array<i32>} : memref<8x8xf32, #tpu.memory_space<vmem>>, vector<8x8xf32>,
    %67 = arith.truncf %60 : vector<8x2xf32> to vector<8x2xbf16>
    %c0_32 = arith.constant 0 : index
    %c0_33 = arith.constant 0 : index
    %68 = vector.load %arg8[%c0_32, %c0_33] : memref<2x64xbf16, #tpu.memory_space<vmem>>, vector<2x64xbf16>
    %cst_34 = arith.constant dense<0.000000e+00> : vector<8x64xf32>
    %69 = tpu.matmul %67, %68, %cst_34 {dimension_numbers = #tpu.dot_dimension_numbers<[1], [0], [0], [1], [0, 0, 1, 1], [], []>} : vector<8x2xbf16>, vector<2x64xbf16>, vector<8x64xf32> -> vector<8x64xf32>
    %c0_35 = arith.constant 0 : index
    %c0_36 = arith.constant 0 : index
    %70 = vector.load %arg9[%c0_35, %c0_36] : memref<1x64xf32, #tpu.memory_space<vmem>>, vector<1x64xf32>
    %71 = vector.broadcast %70 : vector<1x64xf32> to vector<8x64xf32>
    %72 = arith.addf %69, %71 : vector<8x64xf32>
    %cst_37 = arith.constant 2.000000e+01 : f32
    %73 = vector.broadcast %cst_37 : f32 to vector<8x64xf32>
    %74 = arith.minimumf %72, %73 : vector<8x64xf32>
    %75 = math.exp %74 : vector<8x64xf32>
    %cst_38 = arith.constant 2.000000e+01 : f32
    %76 = vector.broadcast %cst_38 : f32 to vector<8x64xf32>
    %77 = arith.cmpf ogt, %72, %76 : vector<8x64xf32>
    %cst_39 = arith.constant -2.000000e+01 : f32
    %78 = vector.broadcast %cst_39 : f32 to vector<8x64xf32>
    %79 = arith.cmpf olt, %72, %78 : vector<8x64xf32>
    %cst_40 = arith.constant 1.000000e+00 : f32
    %80 = vector.broadcast %cst_40 : f32 to vector<8x64xf32>
    %81 = arith.addf %80, %75 : vector<8x64xf32>
    %82 = math.log %81 : vector<8x64xf32>
    %83 = arith.select %79, %75, %82 : vector<8x64xi1>, vector<8x64xf32>
    %84 = arith.select %77, %72, %83 : vector<8x64xi1>, vector<8x64xf32>
    %c0_41 = arith.constant 0 : index
    %c0_42 = arith.constant 0 : index
    %85 = vector.load %arg14[%c0_41, %c0_42] : memref<8x64xf32, #tpu.memory_space<vmem>>, vector<8x64xf32>
    tpu.vector_store %arg14[%c0_41, %c0_42], %84 {strides = array<i32>} : memref<8x64xf32, #tpu.memory_space<vmem>>, vector<8x64xf32>,
    %86 = arith.mulf %84, %56 : vector<8x64xf32>
    %c0_43 = arith.constant 0 : index
    %c0_44 = arith.constant 0 : index
    %87 = vector.load %arg15[%c0_43, %c0_44] : memref<8x64xf32, #tpu.memory_space<vmem>>, vector<8x64xf32>
    tpu.vector_store %arg15[%c0_43, %c0_44], %86 {strides = array<i32>} : memref<8x64xf32, #tpu.memory_space<vmem>>, vector<8x64xf32>,
    %c0_45 = arith.constant 0 : index
    %c0_46 = arith.constant 0 : index
    %88 = vector.load %arg10[%c0_45, %c0_46] : memref<8x64xf32, #tpu.memory_space<vmem>>, vector<8x64xf32>
    %c0_47 = arith.constant 0 : index
    %c0_48 = arith.constant 0 : index
    %89 = vector.load %arg11[%c0_47, %c0_48] : memref<1x64xf32, #tpu.memory_space<vmem>>, vector<1x64xf32>
    %cst_49 = arith.constant 0.000000e+00 : f32
    %90 = vector.broadcast %cst_49 : f32 to vector<8x64xf32>
    %c0_i32_50 = arith.constant 0 : i32
    %c8_i32 = arith.constant 8 : i32
    %91 = arith.muli %c0_i32_50, %c8_i32 : i32
    %92 = tpu.assume_multiple %91, 8 : i32
    %93 = arith.index_cast %92 : i32 to index
    %c0_51 = arith.constant 0 : index
    %94 = vector.load %arg14[%93, %c0_51] : memref<8x64xf32, #tpu.memory_space<vmem>>, vector<8x64xf32>
    %95 = arith.index_cast %92 : i32 to index
    %c0_52 = arith.constant 0 : index
    %96 = vector.load %arg15[%95, %c0_52] : memref<8x64xf32, #tpu.memory_space<vmem>>, vector<8x64xf32>
    %97 = arith.index_cast %92 : i32 to index
    %c0_53 = arith.constant 0 : index
    %98 = vector.load %arg16[%97, %c0_53] : memref<8x8xf32, #tpu.memory_space<vmem>>, vector<8x8xf32>
    %99 = arith.index_cast %92 : i32 to index
    %c0_54 = arith.constant 0 : index
    %100 = vector.load %arg17[%99, %c0_54] : memref<8x8xf32, #tpu.memory_space<vmem>>, vector<8x8xf32>
    %101 = arith.index_cast %92 : i32 to index
    %c0_55 = arith.constant 0 : index
    %102 = vector.load %arg13[%101, %c0_55] : memref<8x64xf32, #tpu.memory_space<vmem>>, vector<8x64xf32>
    %c0_56 = arith.constant 0 : index
    %103 = arith.index_cast %92 : i32 to index
    %c0_57 = arith.constant 0 : index
    %104 = vector.load %arg2[%c0_56, %103, %c0_57] : memref<1x8x64xbf16, #tpu.memory_space<vmem>>, vector<1x8x64xbf16>
    %105 = vector.shape_cast %104 : vector<1x8x64xbf16> to vector<8x64xbf16>
    %106 = arith.extf %105 : vector<8x64xbf16> to vector<8x64xf32>
    %107 = vector.shape_cast %94 : vector<8x64xf32> to vector<8x1x64xf32>
    %108 = vector.shape_cast %88 : vector<8x64xf32> to vector<1x8x64xf32>
    %109 = vector.broadcast %107 : vector<8x1x64xf32> to vector<8x8x64xf32>
    %110 = vector.broadcast %108 : vector<1x8x64xf32> to vector<8x8x64xf32>
    %111 = arith.mulf %109, %110 : vector<8x8x64xf32>
    %112 = math.exp %111 : vector<8x8x64xf32>
    %113 = vector.shape_cast %98 : vector<8x8xf32> to vector<8x8x1xf32>
    %114 = vector.shape_cast %96 : vector<8x64xf32> to vector<8x1x64xf32>
    %115 = vector.broadcast %113 : vector<8x8x1xf32> to vector<8x8x64xf32>
    %116 = vector.broadcast %114 : vector<8x1x64xf32> to vector<8x8x64xf32>
    %117 = arith.mulf %115, %116 : vector<8x8x64xf32>
    %118 = vector.extract_strided_slice %112 {offsets = [0, 0, 0], sizes = [1, 8, 64], strides = [1, 1, 1]} : vector<8x8x64xf32> to vector<1x8x64xf32>
    %119 = vector.shape_cast %118 : vector<1x8x64xf32> to vector<8x64xf32>
    %120 = arith.mulf %119, %90 : vector<8x64xf32>
    %121 = vector.extract_strided_slice %117 {offsets = [0, 0, 0], sizes = [1, 8, 64], strides = [1, 1, 1]} : vector<8x8x64xf32> to vector<1x8x64xf32>
    %122 = vector.shape_cast %121 : vector<1x8x64xf32> to vector<8x64xf32>
    %123 = arith.addf %120, %122 : vector<8x64xf32>
    %124 = vector.shape_cast %123 : vector<8x64xf32> to vector<1x8x64xf32>
    %125 = vector.extract_strided_slice %112 {offsets = [1, 0, 0], sizes = [1, 8, 64], strides = [1, 1, 1]} : vector<8x8x64xf32> to vector<1x8x64xf32>
    %126 = vector.shape_cast %125 : vector<1x8x64xf32> to vector<8x64xf32>
    %127 = arith.mulf %126, %123 : vector<8x64xf32>
    %128 = vector.extract_strided_slice %117 {offsets = [1, 0, 0], sizes = [1, 8, 64], strides = [1, 1, 1]} : vector<8x8x64xf32> to vector<1x8x64xf32>
    %129 = vector.shape_cast %128 : vector<1x8x64xf32> to vector<8x64xf32>
    %130 = arith.addf %127, %129 : vector<8x64xf32>
    %131 = vector.shape_cast %130 : vector<8x64xf32> to vector<1x8x64xf32>
    %132 = vector.extract_strided_slice %112 {offsets = [2, 0, 0], sizes = [1, 8, 64], strides = [1, 1, 1]} : vector<8x8x64xf32> to vector<1x8x64xf32>
    %133 = vector.shape_cast %132 : vector<1x8x64xf32> to vector<8x64xf32>
    %134 = arith.mulf %133, %130 : vector<8x64xf32>
    %135 = vector.extract_strided_slice %117 {offsets = [2, 0, 0], sizes = [1, 8, 64], strides = [1, 1, 1]} : vector<8x8x64xf32> to vector<1x8x64xf32>
    %136 = vector.shape_cast %135 : vector<1x8x64xf32> to vector<8x64xf32>
    %137 = arith.addf %134, %136 : vector<8x64xf32>
    %138 = vector.shape_cast %137 : vector<8x64xf32> to vector<1x8x64xf32>
    %139 = vector.extract_strided_slice %112 {offsets = [3, 0, 0], sizes = [1, 8, 64], strides = [1, 1, 1]} : vector<8x8x64xf32> to vector<1x8x64xf32>
    %140 = vector.shape_cast %139 : vector<1x8x64xf32> to vector<8x64xf32>
    %141 = arith.mulf %140, %137 : vector<8x64xf32>
    %142 = vector.extract_strided_slice %117 {offsets = [3, 0, 0], sizes = [1, 8, 64], strides = [1, 1, 1]} : vector<8x8x64xf32> to vector<1x8x64xf32>
    %143 = vector.shape_cast %142 : vector<1x8x64xf32> to vector<8x64xf32>
    %144 = arith.addf %141, %143 : vector<8x64xf32>
    %145 = vector.shape_cast %144 : vector<8x64xf32> to vector<1x8x64xf32>
    %146 = vector.extract_strided_slice %112 {offsets = [4, 0, 0], sizes = [1, 8, 64], strides = [1, 1, 1]} : vector<8x8x64xf32> to vector<1x8x64xf32>
    %147 = vector.shape_cast %146 : vector<1x8x64xf32> to vector<8x64xf32>
    %148 = arith.mulf %147, %144 : vector<8x64xf32>
    %149 = vector.extract_strided_slice %117 {offsets = [4, 0, 0], sizes = [1, 8, 64], strides = [1, 1, 1]} : vector<8x8x64xf32> to vector<1x8x64xf32>
    %150 = vector.shape_cast %149 : vector<1x8x64xf32> to vector<8x64xf32>
    %151 = arith.addf %148, %150 : vector<8x64xf32>
    %152 = vector.shape_cast %151 : vector<8x64xf32> to vector<1x8x64xf32>
    %153 = vector.extract_strided_slice %112 {offsets = [5, 0, 0], sizes = [1, 8, 64], strides = [1, 1, 1]} : vector<8x8x64xf32> to vector<1x8x64xf32>
    %154 = vector.shape_cast %153 : vector<1x8x64xf32> to vector<8x64xf32>
    %155 = arith.mulf %154, %151 : vector<8x64xf32>
    %156 = vector.extract_strided_slice %117 {offsets = [5, 0, 0], sizes = [1, 8, 64], strides = [1, 1, 1]} : vector<8x8x64xf32> to vector<1x8x64xf32>
    %157 = vector.shape_cast %156 : vector<1x8x64xf32> to vector<8x64xf32>
    %158 = arith.addf %155, %157 : vector<8x64xf32>
    %159 = vector.shape_cast %158 : vector<8x64xf32> to vector<1x8x64xf32>
    %160 = vector.extract_strided_slice %112 {offsets = [6, 0, 0], sizes = [1, 8, 64], strides = [1, 1, 1]} : vector<8x8x64xf32> to vector<1x8x64xf32>
    %161 = vector.shape_cast %160 : vector<1x8x64xf32> to vector<8x64xf32>
    %162 = arith.mulf %161, %158 : vector<8x64xf32>
    %163 = vector.extract_strided_slice %117 {offsets = [6, 0, 0], sizes = [1, 8, 64], strides = [1, 1, 1]} : vector<8x8x64xf32> to vector<1x8x64xf32>
    %164 = vector.shape_cast %163 : vector<1x8x64xf32> to vector<8x64xf32>
    %165 = arith.addf %162, %164 : vector<8x64xf32>
    %166 = vector.shape_cast %165 : vector<8x64xf32> to vector<1x8x64xf32>
    %167 = vector.extract_strided_slice %112 {offsets = [7, 0, 0], sizes = [1, 8, 64], strides = [1, 1, 1]} : vector<8x8x64xf32> to vector<1x8x64xf32>
    %168 = vector.shape_cast %167 : vector<1x8x64xf32> to vector<8x64xf32>
    %169 = arith.mulf %168, %165 : vector<8x64xf32>
    %170 = vector.extract_strided_slice %117 {offsets = [7, 0, 0], sizes = [1, 8, 64], strides = [1, 1, 1]} : vector<8x8x64xf32> to vector<1x8x64xf32>
    %171 = vector.shape_cast %170 : vector<1x8x64xf32> to vector<8x64xf32>
    %172 = arith.addf %169, %171 : vector<8x64xf32>
    %173 = vector.shape_cast %172 : vector<8x64xf32> to vector<1x8x64xf32>
    %174 = tpu.concatenate %124, %131, %138, %145, %152, %159, %166, %173 in 0 : vector<1x8x64xf32>, vector<1x8x64xf32>, vector<1x8x64xf32>, vector<1x8x64xf32>, vector<1x8x64xf32>, vector<1x8x64xf32>, vector<1x8x64xf32>, vector<1x8x64xf32> -> vector<8x8x64xf32>
    %175 = vector.shape_cast %100 : vector<8x8xf32> to vector<8x8x1xf32>
    %176 = vector.broadcast %175 : vector<8x8x1xf32> to vector<8x8x64xf32>
    %177 = arith.mulf %176, %174 : vector<8x8x64xf32>
    %cst_58 = arith.constant dense<0.000000e+00> : vector<8x64xf32>
    %178 = vector.multi_reduction <add>, %177, %cst_58 [1] : vector<8x8x64xf32> to vector<8x64xf32>
    %179 = vector.broadcast %89 : vector<1x64xf32> to vector<8x64xf32>
    %180 = arith.mulf %102, %179 : vector<8x64xf32>
    %181 = arith.addf %178, %180 : vector<8x64xf32>
    %182 = arith.negf %106 : vector<8x64xf32>
    %183 = math.exp %182 : vector<8x64xf32>
    %cst_59 = arith.constant 1.000000e+00 : f32
    %184 = vector.broadcast %cst_59 : f32 to vector<8x64xf32>
    %185 = arith.addf %184, %183 : vector<8x64xf32>
    %186 = arith.divf %184, %185 : vector<8x64xf32>
    %187 = arith.mulf %106, %186 : vector<8x64xf32>
    %188 = arith.mulf %181, %187 : vector<8x64xf32>
    %189 = arith.truncf %188 : vector<8x64xf32> to vector<8x64xbf16>
    %c0_60 = arith.constant 0 : index
    %190 = arith.index_cast %92 : i32 to index
    %c0_61 = arith.constant 0 : index
    %191 = vector.load %arg12[%c0_60, %190, %c0_61] : memref<1x8x64xbf16, #tpu.memory_space<vmem>>, vector<1x8x64xbf16>
    %192 = vector.shape_cast %191 : vector<1x8x64xbf16> to vector<8x64xbf16>
    %193 = vector.shape_cast %189 : vector<8x64xbf16> to vector<1x8x64xbf16>
    tpu.vector_store %arg12[%c0_60, %190, %c0_61], %193 {strides = array<i32>} : memref<1x8x64xbf16, #tpu.memory_space<vmem>>, vector<1x8x64xbf16>,
    %c1_i32_62 = arith.constant 1 : i32
    return
  }
  func.func @transform_0(%arg0: i32) -> (i32, i32, i32) {
    %c0_i32 = arith.constant 0 : i32
    %c0_i32_0 = arith.constant 0 : i32
    %c0_i32_1 = arith.constant 0 : i32
    return %arg0, %c0_i32, %c0_i32_0 : i32, i32, i32
  }
  func.func @transform_1(%arg0: i32) -> (i32, i32, i32) {
    %c0_i32 = arith.constant 0 : i32
    %c0_i32_0 = arith.constant 0 : i32
    %c0_i32_1 = arith.constant 0 : i32
    return %arg0, %c0_i32, %c0_i32_0 : i32, i32, i32
  }
  func.func @transform_2(%arg0: i32) -> (i32, i32) {
    %c0_i32 = arith.constant 0 : i32
    %c0_i32_0 = arith.constant 0 : i32
    %c0_i32_1 = arith.constant 0 : i32
    return %c0_i32, %c0_i32_0 : i32, i32
  }
  func.func @transform_3(%arg0: i32) -> (i32, i32) {
    %c0_i32 = arith.constant 0 : i32
    %c0_i32_0 = arith.constant 0 : i32
    %c0_i32_1 = arith.constant 0 : i32
    return %c0_i32, %c0_i32_0 : i32, i32
  }
  func.func @transform_4(%arg0: i32) -> (i32, i32) {
    %c0_i32 = arith.constant 0 : i32
    %c0_i32_0 = arith.constant 0 : i32
    %c0_i32_1 = arith.constant 0 : i32
    return %c0_i32, %c0_i32_0 : i32, i32
  }
  func.func @transform_5(%arg0: i32) -> (i32, i32) {
    %c0_i32 = arith.constant 0 : i32
    %c0_i32_0 = arith.constant 0 : i32
    %c0_i32_1 = arith.constant 0 : i32
    return %c0_i32, %c0_i32_0 : i32, i32
  }
  func.func @transform_6(%arg0: i32) -> (i32, i32) {
    %c0_i32 = arith.constant 0 : i32
    %c0_i32_0 = arith.constant 0 : i32
    %c0_i32_1 = arith.constant 0 : i32
    return %c0_i32, %c0_i32_0 : i32, i32
  }
  func.func @transform_7(%arg0: i32) -> (i32, i32) {
    %c0_i32 = arith.constant 0 : i32
    %c0_i32_0 = arith.constant 0 : i32
    %c0_i32_1 = arith.constant 0 : i32
    return %c0_i32, %c0_i32_0 : i32, i32
  }
  func.func @transform_8(%arg0: i32) -> (i32, i32) {
    %c0_i32 = arith.constant 0 : i32
    %c0_i32_0 = arith.constant 0 : i32
    %c0_i32_1 = arith.constant 0 : i32
    return %c0_i32, %c0_i32_0 : i32, i32
  }
  func.func @transform_9(%arg0: i32) -> (i32, i32) {
    %c0_i32 = arith.constant 0 : i32
    %c0_i32_0 = arith.constant 0 : i32
    %c0_i32_1 = arith.constant 0 : i32
    return %c0_i32, %c0_i32_0 : i32, i32
  }
  func.func @transform_10(%arg0: i32) -> (i32, i32) {
    %c0_i32 = arith.constant 0 : i32
    %c0_i32_0 = arith.constant 0 : i32
    %c0_i32_1 = arith.constant 0 : i32
    return %c0_i32, %c0_i32_0 : i32, i32
  }
  func.func @transform_11(%arg0: i32) -> (i32, i32, i32) {
    %c0_i32 = arith.constant 0 : i32
    %c0_i32_0 = arith.constant 0 : i32
    %c0_i32_1 = arith.constant 0 : i32
    return %arg0, %c0_i32, %c0_i32_0 : i32, i32, i32
  }
}

module attributes {stable_mosaic.version = 11 : i64} {
  func.func @_linear_kernel(%arg0: i32, %arg1: i32, %arg2: i32, %arg3: memref<16x64xbf16, #tpu.memory_space<vmem>>, %arg4: memref<64x32xbf16, #tpu.memory_space<vmem>>, %arg5: memref<16x32xbf16, #tpu.memory_space<vmem>>, %arg6: memref<16x32xf32, #tpu.memory_space<vmem>>) attributes {dimension_semantics = [#tpu.dimension_semantics<parallel>, #tpu.dimension_semantics<parallel>, #tpu.dimension_semantics<arbitrary>], iteration_bounds = array<i64: 1, 1, 1>, scalar_prefetch = 0 : i64, scratch_operands = 1 : i64, tpu.core_type = #tpu.core_type<tc>, window_params = [{transform_indices = @transform_0, window_bounds = array<i64: 16, 64>}, {transform_indices = @transform_1, window_bounds = array<i64: 64, 32>}, {transform_indices = @transform_2, window_bounds = array<i64: 16, 32>}]} {
    %c0_i32 = arith.constant 0 : i32
    %0 = arith.cmpi eq, %arg2, %c0_i32 : i32
    %1 = arith.extui %0 : i1 to i32
    %c0_i32_0 = arith.constant 0 : i32
    %2 = arith.cmpi ne, %1, %c0_i32_0 : i32
    scf.if %2 {
      %cst_10 = arith.constant 0.000000e+00 : f32
      %12 = vector.broadcast %cst_10 : f32 to vector<16x32xf32>
      %c0_11 = arith.constant 0 : index
      %c0_12 = arith.constant 0 : index
      %13 = vector.load %arg6[%c0_11, %c0_12] : memref<16x32xf32, #tpu.memory_space<vmem>>, vector<16x32xf32>
      tpu.vector_store %arg6[%c0_11, %c0_12], %12 {strides = array<i32>} : memref<16x32xf32, #tpu.memory_space<vmem>>, vector<16x32xf32>,
    } else {
    }
    %c0 = arith.constant 0 : index
    %c0_1 = arith.constant 0 : index
    %3 = vector.load %arg6[%c0, %c0_1] : memref<16x32xf32, #tpu.memory_space<vmem>>, vector<16x32xf32>
    %c0_2 = arith.constant 0 : index
    %c0_3 = arith.constant 0 : index
    %4 = vector.load %arg3[%c0_2, %c0_3] : memref<16x64xbf16, #tpu.memory_space<vmem>>, vector<16x64xbf16>
    %c0_4 = arith.constant 0 : index
    %c0_5 = arith.constant 0 : index
    %5 = vector.load %arg4[%c0_4, %c0_5] : memref<64x32xbf16, #tpu.memory_space<vmem>>, vector<64x32xbf16>
    %cst = arith.constant dense<0.000000e+00> : vector<16x32xf32>
    %6 = tpu.matmul %4, %5, %cst {dimension_numbers = #tpu.dot_dimension_numbers<[1], [0], [0], [1], [0, 0, 1, 1], [], []>} : vector<16x64xbf16>, vector<64x32xbf16>, vector<16x32xf32> -> vector<16x32xf32>
    %7 = arith.addf %3, %6 : vector<16x32xf32>
    %c0_6 = arith.constant 0 : index
    %c0_7 = arith.constant 0 : index
    %8 = vector.load %arg6[%c0_6, %c0_7] : memref<16x32xf32, #tpu.memory_space<vmem>>, vector<16x32xf32>
    tpu.vector_store %arg6[%c0_6, %c0_7], %7 {strides = array<i32>} : memref<16x32xf32, #tpu.memory_space<vmem>>, vector<16x32xf32>,
    %c0_i32_8 = arith.constant 0 : i32
    %9 = arith.cmpi eq, %arg2, %c0_i32_8 : i32
    %10 = arith.extui %9 : i1 to i32
    %c0_i32_9 = arith.constant 0 : i32
    %11 = arith.cmpi ne, %10, %c0_i32_9 : i32
    scf.if %11 {
      %c0_10 = arith.constant 0 : index
      %c0_11 = arith.constant 0 : index
      %12 = vector.load %arg6[%c0_10, %c0_11] : memref<16x32xf32, #tpu.memory_space<vmem>>, vector<16x32xf32>
      %13 = arith.truncf %12 : vector<16x32xf32> to vector<16x32xbf16>
      %c0_12 = arith.constant 0 : index
      %c0_13 = arith.constant 0 : index
      %14 = vector.load %arg5[%c0_12, %c0_13] : memref<16x32xbf16, #tpu.memory_space<vmem>>, vector<16x32xbf16>
      tpu.vector_store %arg5[%c0_12, %c0_13], %13 {strides = array<i32>} : memref<16x32xbf16, #tpu.memory_space<vmem>>, vector<16x32xbf16>,
    } else {
    }
    return
  }
  func.func @transform_0(%arg0: i32, %arg1: i32, %arg2: i32) -> (i32, i32) {
    %c0_i32 = arith.constant 0 : i32
    return %arg0, %arg2 : i32, i32
  }
  func.func @transform_1(%arg0: i32, %arg1: i32, %arg2: i32) -> (i32, i32) {
    %c0_i32 = arith.constant 0 : i32
    return %arg2, %arg1 : i32, i32
  }
  func.func @transform_2(%arg0: i32, %arg1: i32, %arg2: i32) -> (i32, i32) {
    %c0_i32 = arith.constant 0 : i32
    return %arg0, %arg1 : i32, i32
  }
}

module attributes {stable_mosaic.version = 11 : i64} {
  func.func @_linear_bias_kernel(%arg0: i32, %arg1: i32, %arg2: i32, %arg3: memref<16x32xbf16, #tpu.memory_space<vmem>>, %arg4: memref<32x4xbf16, #tpu.memory_space<vmem>>, %arg5: memref<1x4xf32, #tpu.memory_space<vmem>>, %arg6: memref<16x4xf32, #tpu.memory_space<vmem>>, %arg7: memref<16x4xf32, #tpu.memory_space<vmem>>) attributes {dimension_semantics = [#tpu.dimension_semantics<parallel>, #tpu.dimension_semantics<parallel>, #tpu.dimension_semantics<arbitrary>], iteration_bounds = array<i64: 1, 1, 1>, scalar_prefetch = 0 : i64, scratch_operands = 1 : i64, tpu.core_type = #tpu.core_type<tc>, window_params = [{transform_indices = @transform_0, window_bounds = array<i64: 16, 32>}, {transform_indices = @transform_1, window_bounds = array<i64: 32, 4>}, {transform_indices = @transform_2, window_bounds = array<i64: 1, 4>}, {transform_indices = @transform_3, window_bounds = array<i64: 16, 4>}]} {
    %c0_i32 = arith.constant 0 : i32
    %0 = arith.cmpi eq, %arg2, %c0_i32 : i32
    %1 = arith.extui %0 : i1 to i32
    %c0_i32_0 = arith.constant 0 : i32
    %2 = arith.cmpi ne, %1, %c0_i32_0 : i32
    scf.if %2 {
      %cst_10 = arith.constant 0.000000e+00 : f32
      %12 = vector.broadcast %cst_10 : f32 to vector<16x4xf32>
      %c0_11 = arith.constant 0 : index
      %c0_12 = arith.constant 0 : index
      %13 = vector.load %arg7[%c0_11, %c0_12] : memref<16x4xf32, #tpu.memory_space<vmem>>, vector<16x4xf32>
      tpu.vector_store %arg7[%c0_11, %c0_12], %12 {strides = array<i32>} : memref<16x4xf32, #tpu.memory_space<vmem>>, vector<16x4xf32>,
    } else {
    }
    %c0 = arith.constant 0 : index
    %c0_1 = arith.constant 0 : index
    %3 = vector.load %arg7[%c0, %c0_1] : memref<16x4xf32, #tpu.memory_space<vmem>>, vector<16x4xf32>
    %c0_2 = arith.constant 0 : index
    %c0_3 = arith.constant 0 : index
    %4 = vector.load %arg3[%c0_2, %c0_3] : memref<16x32xbf16, #tpu.memory_space<vmem>>, vector<16x32xbf16>
    %c0_4 = arith.constant 0 : index
    %c0_5 = arith.constant 0 : index
    %5 = vector.load %arg4[%c0_4, %c0_5] : memref<32x4xbf16, #tpu.memory_space<vmem>>, vector<32x4xbf16>
    %cst = arith.constant dense<0.000000e+00> : vector<16x4xf32>
    %6 = tpu.matmul %4, %5, %cst {dimension_numbers = #tpu.dot_dimension_numbers<[1], [0], [0], [1], [0, 0, 1, 1], [], []>} : vector<16x32xbf16>, vector<32x4xbf16>, vector<16x4xf32> -> vector<16x4xf32>
    %7 = arith.addf %3, %6 : vector<16x4xf32>
    %c0_6 = arith.constant 0 : index
    %c0_7 = arith.constant 0 : index
    %8 = vector.load %arg7[%c0_6, %c0_7] : memref<16x4xf32, #tpu.memory_space<vmem>>, vector<16x4xf32>
    tpu.vector_store %arg7[%c0_6, %c0_7], %7 {strides = array<i32>} : memref<16x4xf32, #tpu.memory_space<vmem>>, vector<16x4xf32>,
    %c0_i32_8 = arith.constant 0 : i32
    %9 = arith.cmpi eq, %arg2, %c0_i32_8 : i32
    %10 = arith.extui %9 : i1 to i32
    %c0_i32_9 = arith.constant 0 : i32
    %11 = arith.cmpi ne, %10, %c0_i32_9 : i32
    scf.if %11 {
      %c0_10 = arith.constant 0 : index
      %c0_11 = arith.constant 0 : index
      %12 = vector.load %arg7[%c0_10, %c0_11] : memref<16x4xf32, #tpu.memory_space<vmem>>, vector<16x4xf32>
      %c0_12 = arith.constant 0 : index
      %c0_13 = arith.constant 0 : index
      %13 = vector.load %arg5[%c0_12, %c0_13] : memref<1x4xf32, #tpu.memory_space<vmem>>, vector<1x4xf32>
      %14 = vector.broadcast %13 : vector<1x4xf32> to vector<16x4xf32>
      %15 = arith.addf %12, %14 : vector<16x4xf32>
      %c0_14 = arith.constant 0 : index
      %c0_15 = arith.constant 0 : index
      %16 = vector.load %arg6[%c0_14, %c0_15] : memref<16x4xf32, #tpu.memory_space<vmem>>, vector<16x4xf32>
      tpu.vector_store %arg6[%c0_14, %c0_15], %15 {strides = array<i32>} : memref<16x4xf32, #tpu.memory_space<vmem>>, vector<16x4xf32>,
    } else {
    }
    return
  }
  func.func @transform_0(%arg0: i32, %arg1: i32, %arg2: i32) -> (i32, i32) {
    %c0_i32 = arith.constant 0 : i32
    return %arg0, %arg2 : i32, i32
  }
  func.func @transform_1(%arg0: i32, %arg1: i32, %arg2: i32) -> (i32, i32) {
    %c0_i32 = arith.constant 0 : i32
    return %arg2, %arg1 : i32, i32
  }
  func.func @transform_2(%arg0: i32, %arg1: i32, %arg2: i32) -> (i32, i32) {
    %c0_i32 = arith.constant 0 : i32
    %c0_i32_0 = arith.constant 0 : i32
    return %c0_i32, %arg1 : i32, i32
  }
  func.func @transform_3(%arg0: i32, %arg1: i32, %arg2: i32) -> (i32, i32) {
    %c0_i32 = arith.constant 0 : i32
    return %arg0, %arg1 : i32, i32
  }
}

module attributes {stable_mosaic.version = 11 : i64} {
  func.func @_rmsnorm_kernel(%arg0: i32, %arg1: memref<16x32xbf16, #tpu.memory_space<vmem>>, %arg2: memref<1x32xf32, #tpu.memory_space<vmem>>, %arg3: memref<16x32xbf16, #tpu.memory_space<vmem>>) attributes {dimension_semantics = [#tpu.dimension_semantics<parallel>], iteration_bounds = array<i64: 1>, scalar_prefetch = 0 : i64, scratch_operands = 0 : i64, tpu.core_type = #tpu.core_type<tc>, window_params = [{transform_indices = @transform_0, window_bounds = array<i64: 16, 32>}, {pipeline_mode = #tpu.pipeline_mode<synchronous>, transform_indices = @transform_1, window_bounds = array<i64: 1, 32>}, {transform_indices = @transform_2, window_bounds = array<i64: 16, 32>}]} {
    %c0 = arith.constant 0 : index
    %c0_0 = arith.constant 0 : index
    %0 = vector.load %arg1[%c0, %c0_0] : memref<16x32xbf16, #tpu.memory_space<vmem>>, vector<16x32xbf16>
    %1 = arith.extf %0 : vector<16x32xbf16> to vector<16x32xf32>
    %2 = arith.mulf %1, %1 : vector<16x32xf32>
    %cst = arith.constant dense<0.000000e+00> : vector<16xf32>
    %3 = vector.multi_reduction <add>, %2, %cst [1] : vector<16x32xf32> to vector<16xf32>
    %4 = vector.shape_cast %3 : vector<16xf32> to vector<16x1xf32>
    %cst_1 = arith.constant 1.000000e-24 : f32
    %5 = vector.broadcast %cst_1 : f32 to vector<16x1xf32>
    %6 = arith.maximumf %4, %5 : vector<16x1xf32>
    %7 = math.rsqrt %6 : vector<16x1xf32>
    %8 = vector.broadcast %7 : vector<16x1xf32> to vector<16x32xf32>
    %9 = arith.mulf %1, %8 : vector<16x32xf32>
    %cst_2 = arith.constant 5.65685415 : f32
    %10 = vector.broadcast %cst_2 : f32 to vector<16x32xf32>
    %11 = arith.mulf %9, %10 : vector<16x32xf32>
    %c0_3 = arith.constant 0 : index
    %c0_4 = arith.constant 0 : index
    %12 = vector.load %arg2[%c0_3, %c0_4] : memref<1x32xf32, #tpu.memory_space<vmem>>, vector<1x32xf32>
    %13 = vector.broadcast %12 : vector<1x32xf32> to vector<16x32xf32>
    %14 = arith.mulf %11, %13 : vector<16x32xf32>
    %15 = arith.truncf %14 : vector<16x32xf32> to vector<16x32xbf16>
    %c0_5 = arith.constant 0 : index
    %c0_6 = arith.constant 0 : index
    %16 = vector.load %arg3[%c0_5, %c0_6] : memref<16x32xbf16, #tpu.memory_space<vmem>>, vector<16x32xbf16>
    tpu.vector_store %arg3[%c0_5, %c0_6], %15 {strides = array<i32>} : memref<16x32xbf16, #tpu.memory_space<vmem>>, vector<16x32xbf16>,
    return
  }
  func.func @transform_0(%arg0: i32) -> (i32, i32) {
    %c0_i32 = arith.constant 0 : i32
    %c0_i32_0 = arith.constant 0 : i32
    return %arg0, %c0_i32 : i32, i32
  }
  func.func @transform_1(%arg0: i32) -> (i32, i32) {
    %c0_i32 = arith.constant 0 : i32
    %c0_i32_0 = arith.constant 0 : i32
    %c0_i32_1 = arith.constant 0 : i32
    return %c0_i32, %c0_i32_0 : i32, i32
  }
  func.func @transform_2(%arg0: i32) -> (i32, i32) {
    %c0_i32 = arith.constant 0 : i32
    %c0_i32_0 = arith.constant 0 : i32
    return %arg0, %c0_i32 : i32, i32
  }
}

module attributes {stable_mosaic.version = 11 : i64} {
  func.func @_moe_expert_kernel(%arg0: i32, %arg1: i32, %arg2: memref<16x32xbf16, #tpu.memory_space<vmem>>, %arg3: memref<1x16x1xf32, #tpu.memory_space<vmem>>, %arg4: memref<1x32x128xbf16, #tpu.memory_space<vmem>>, %arg5: memref<1x1x128xf32, #tpu.memory_space<vmem>>, %arg6: memref<1x128x32xbf16, #tpu.memory_space<vmem>>, %arg7: memref<1x1x32xf32, #tpu.memory_space<vmem>>, %arg8: memref<16x32xbf16, #tpu.memory_space<vmem>>, %arg9: memref<16x32xf32, #tpu.memory_space<vmem>>) attributes {dimension_semantics = [#tpu.dimension_semantics<parallel>, #tpu.dimension_semantics<arbitrary>], iteration_bounds = array<i64: 1, 4>, scalar_prefetch = 0 : i64, scratch_operands = 1 : i64, tpu.core_type = #tpu.core_type<tc>, window_params = [{transform_indices = @transform_0, window_bounds = array<i64: 16, 32>}, {transform_indices = @transform_1, window_bounds = array<i64: 1, 16, 1>}, {transform_indices = @transform_2, window_bounds = array<i64: 1, 32, 128>}, {transform_indices = @transform_3, window_bounds = array<i64: 1, 1, 128>}, {transform_indices = @transform_4, window_bounds = array<i64: 1, 128, 32>}, {transform_indices = @transform_5, window_bounds = array<i64: 1, 1, 32>}, {transform_indices = @transform_6, window_bounds = array<i64: 16, 32>}]} {
    %c0_i32 = arith.constant 0 : i32
    %0 = arith.cmpi eq, %arg1, %c0_i32 : i32
    %1 = arith.extui %0 : i1 to i32
    %c0_i32_0 = arith.constant 0 : i32
    %2 = arith.cmpi ne, %1, %c0_i32_0 : i32
    scf.if %2 {
      %cst_29 = arith.constant 0.000000e+00 : f32
      %48 = vector.broadcast %cst_29 : f32 to vector<16x32xf32>
      %c0_30 = arith.constant 0 : index
      %c0_31 = arith.constant 0 : index
      %49 = vector.load %arg9[%c0_30, %c0_31] : memref<16x32xf32, #tpu.memory_space<vmem>>, vector<16x32xf32>
      tpu.vector_store %arg9[%c0_30, %c0_31], %48 {strides = array<i32>} : memref<16x32xf32, #tpu.memory_space<vmem>>, vector<16x32xf32>,
    } else {
    }
    %c0 = arith.constant 0 : index
    %c0_1 = arith.constant 0 : index
    %3 = vector.load %arg2[%c0, %c0_1] : memref<16x32xbf16, #tpu.memory_space<vmem>>, vector<16x32xbf16>
    %c0_2 = arith.constant 0 : index
    %c0_3 = arith.constant 0 : index
    %c0_4 = arith.constant 0 : index
    %4 = vector.load %arg4[%c0_2, %c0_3, %c0_4] : memref<1x32x128xbf16, #tpu.memory_space<vmem>>, vector<1x32x128xbf16>
    %5 = vector.shape_cast %4 : vector<1x32x128xbf16> to vector<32x128xbf16>
    %cst = arith.constant dense<0.000000e+00> : vector<16x128xf32>
    %6 = tpu.matmul %3, %5, %cst {dimension_numbers = #tpu.dot_dimension_numbers<[1], [0], [0], [1], [0, 0, 1, 1], [], []>} : vector<16x32xbf16>, vector<32x128xbf16>, vector<16x128xf32> -> vector<16x128xf32>
    %c0_5 = arith.constant 0 : index
    %c0_6 = arith.constant 0 : index
    %c0_7 = arith.constant 0 : index
    %7 = vector.load %arg5[%c0_5, %c0_6, %c0_7] : memref<1x1x128xf32, #tpu.memory_space<vmem>>, vector<1x1x128xf32>
    %8 = vector.shape_cast %7 : vector<1x1x128xf32> to vector<1x128xf32>
    %9 = vector.broadcast %8 : vector<1x128xf32> to vector<16x128xf32>
    %10 = arith.addf %6, %9 : vector<16x128xf32>
    %cst_8 = arith.constant 5.000000e-01 : f32
    %11 = vector.broadcast %cst_8 : f32 to vector<16x128xf32>
    %12 = arith.mulf %11, %10 : vector<16x128xf32>
    %cst_9 = arith.constant 4.471500e-02 : f32
    %13 = vector.broadcast %cst_9 : f32 to vector<16x128xf32>
    %14 = arith.mulf %13, %10 : vector<16x128xf32>
    %15 = arith.mulf %14, %10 : vector<16x128xf32>
    %16 = arith.mulf %15, %10 : vector<16x128xf32>
    %17 = arith.addf %10, %16 : vector<16x128xf32>
    %cst_10 = arith.constant 0.797884583 : f32
    %18 = vector.broadcast %cst_10 : f32 to vector<16x128xf32>
    %19 = arith.mulf %18, %17 : vector<16x128xf32>
    %20 = math.tanh %19 : vector<16x128xf32>
    %cst_11 = arith.constant 1.000000e+00 : f32
    %21 = vector.broadcast %cst_11 : f32 to vector<16x128xf32>
    %22 = arith.addf %21, %20 : vector<16x128xf32>
    %23 = arith.mulf %12, %22 : vector<16x128xf32>
    %24 = arith.truncf %23 : vector<16x128xf32> to vector<16x128xbf16>
    %c0_12 = arith.constant 0 : index
    %c0_13 = arith.constant 0 : index
    %c0_14 = arith.constant 0 : index
    %25 = vector.load %arg6[%c0_12, %c0_13, %c0_14] : memref<1x128x32xbf16, #tpu.memory_space<vmem>>, vector<1x128x32xbf16>
    %26 = vector.shape_cast %25 : vector<1x128x32xbf16> to vector<128x32xbf16>
    %cst_15 = arith.constant dense<0.000000e+00> : vector<16x32xf32>
    %27 = tpu.matmul %24, %26, %cst_15 {dimension_numbers = #tpu.dot_dimension_numbers<[1], [0], [0], [1], [0, 0, 1, 1], [], []>} : vector<16x128xbf16>, vector<128x32xbf16>, vector<16x32xf32> -> vector<16x32xf32>
    %c0_16 = arith.constant 0 : index
    %c0_17 = arith.constant 0 : index
    %c0_18 = arith.constant 0 : index
    %28 = vector.load %arg7[%c0_16, %c0_17, %c0_18] : memref<1x1x32xf32, #tpu.memory_space<vmem>>, vector<1x1x32xf32>
    %29 = vector.shape_cast %28 : vector<1x1x32xf32> to vector<1x32xf32>
    %30 = vector.broadcast %29 : vector<1x32xf32> to vector<16x32xf32>
    %31 = arith.addf %27, %30 : vector<16x32xf32>
    %32 = arith.cmpf one, %31, %31 : vector<16x32xf32>
    %cst_19 = arith.constant 0.000000e+00 : f32
    %33 = vector.broadcast %cst_19 : f32 to vector<16x32xf32>
    %34 = arith.select %32, %33, %31 : vector<16x32xi1>, vector<16x32xf32>
    %c0_20 = arith.constant 0 : index
    %c0_21 = arith.constant 0 : index
    %c0_22 = arith.constant 0 : index
    %35 = vector.load %arg3[%c0_20, %c0_21, %c0_22] : memref<1x16x1xf32, #tpu.memory_space<vmem>>, vector<1x16x1xf32>
    %36 = vector.shape_cast %35 : vector<1x16x1xf32> to vector<16x1xf32>
    %37 = arith.cmpf one, %36, %36 : vector<16x1xf32>
    %cst_23 = arith.constant 0.000000e+00 : f32
    %38 = vector.broadcast %cst_23 : f32 to vector<16x1xf32>
    %39 = arith.select %37, %38, %36 : vector<16x1xi1>, vector<16x1xf32>
    %c0_24 = arith.constant 0 : index
    %c0_25 = arith.constant 0 : index
    %40 = vector.load %arg9[%c0_24, %c0_25] : memref<16x32xf32, #tpu.memory_space<vmem>>, vector<16x32xf32>
    %41 = vector.broadcast %39 : vector<16x1xf32> to vector<16x32xf32>
    %42 = arith.mulf %41, %34 : vector<16x32xf32>
    %43 = arith.addf %40, %42 : vector<16x32xf32>
    %c0_26 = arith.constant 0 : index
    %c0_27 = arith.constant 0 : index
    %44 = vector.load %arg9[%c0_26, %c0_27] : memref<16x32xf32, #tpu.memory_space<vmem>>, vector<16x32xf32>
    tpu.vector_store %arg9[%c0_26, %c0_27], %43 {strides = array<i32>} : memref<16x32xf32, #tpu.memory_space<vmem>>, vector<16x32xf32>,
    %c3_i32 = arith.constant 3 : i32
    %45 = arith.cmpi eq, %arg1, %c3_i32 : i32
    %46 = arith.extui %45 : i1 to i32
    %c0_i32_28 = arith.constant 0 : i32
    %47 = arith.cmpi ne, %46, %c0_i32_28 : i32
    scf.if %47 {
      %c0_29 = arith.constant 0 : index
      %c0_30 = arith.constant 0 : index
      %48 = vector.load %arg9[%c0_29, %c0_30] : memref<16x32xf32, #tpu.memory_space<vmem>>, vector<16x32xf32>
      %49 = arith.truncf %48 : vector<16x32xf32> to vector<16x32xbf16>
      %c0_31 = arith.constant 0 : index
      %c0_32 = arith.constant 0 : index
      %50 = vector.load %arg8[%c0_31, %c0_32] : memref<16x32xbf16, #tpu.memory_space<vmem>>, vector<16x32xbf16>
      tpu.vector_store %arg8[%c0_31, %c0_32], %49 {strides = array<i32>} : memref<16x32xbf16, #tpu.memory_space<vmem>>, vector<16x32xbf16>,
    } else {
    }
    return
  }
  func.func @transform_0(%arg0: i32, %arg1: i32) -> (i32, i32) {
    %c0_i32 = arith.constant 0 : i32
    %c0_i32_0 = arith.constant 0 : i32
    return %arg0, %c0_i32 : i32, i32
  }
  func.func @transform_1(%arg0: i32, %arg1: i32) -> (i32, i32, i32) {
    %c0_i32 = arith.constant 0 : i32
    %c0_i32_0 = arith.constant 0 : i32
    return %arg1, %arg0, %c0_i32 : i32, i32, i32
  }
  func.func @transform_2(%arg0: i32, %arg1: i32) -> (i32, i32, i32) {
    %c0_i32 = arith.constant 0 : i32
    %c0_i32_0 = arith.constant 0 : i32
    %c0_i32_1 = arith.constant 0 : i32
    return %arg1, %c0_i32, %c0_i32_0 : i32, i32, i32
  }
  func.func @transform_3(%arg0: i32, %arg1: i32) -> (i32, i32, i32) {
    %c0_i32 = arith.constant 0 : i32
    %c0_i32_0 = arith.constant 0 : i32
    %c0_i32_1 = arith.constant 0 : i32
    return %arg1, %c0_i32, %c0_i32_0 : i32, i32, i32
  }
  func.func @transform_4(%arg0: i32, %arg1: i32) -> (i32, i32, i32) {
    %c0_i32 = arith.constant 0 : i32
    %c0_i32_0 = arith.constant 0 : i32
    %c0_i32_1 = arith.constant 0 : i32
    return %arg1, %c0_i32, %c0_i32_0 : i32, i32, i32
  }
  func.func @transform_5(%arg0: i32, %arg1: i32) -> (i32, i32, i32) {
    %c0_i32 = arith.constant 0 : i32
    %c0_i32_0 = arith.constant 0 : i32
    %c0_i32_1 = arith.constant 0 : i32
    return %arg1, %c0_i32, %c0_i32_0 : i32, i32, i32
  }
  func.func @transform_6(%arg0: i32, %arg1: i32) -> (i32, i32) {
    %c0_i32 = arith.constant 0 : i32
    %c0_i32_0 = arith.constant 0 : i32
    return %arg0, %c0_i32 : i32, i32
  }
}

module attributes {stable_mosaic.version = 11 : i64} {
  func.func @_linear_bias_kernel(%arg0: i32, %arg1: i32, %arg2: i32, %arg3: memref<16x32xbf16, #tpu.memory_space<vmem>>, %arg4: memref<32x64xbf16, #tpu.memory_space<vmem>>, %arg5: memref<1x64xf32, #tpu.memory_space<vmem>>, %arg6: memref<16x64xf32, #tpu.memory_space<vmem>>, %arg7: memref<16x64xf32, #tpu.memory_space<vmem>>) attributes {dimension_semantics = [#tpu.dimension_semantics<parallel>, #tpu.dimension_semantics<parallel>, #tpu.dimension_semantics<arbitrary>], iteration_bounds = array<i64: 1, 1, 1>, scalar_prefetch = 0 : i64, scratch_operands = 1 : i64, tpu.core_type = #tpu.core_type<tc>, window_params = [{transform_indices = @transform_0, window_bounds = array<i64: 16, 32>}, {transform_indices = @transform_1, window_bounds = array<i64: 32, 64>}, {transform_indices = @transform_2, window_bounds = array<i64: 1, 64>}, {transform_indices = @transform_3, window_bounds = array<i64: 16, 64>}]} {
    %c0_i32 = arith.constant 0 : i32
    %0 = arith.cmpi eq, %arg2, %c0_i32 : i32
    %1 = arith.extui %0 : i1 to i32
    %c0_i32_0 = arith.constant 0 : i32
    %2 = arith.cmpi ne, %1, %c0_i32_0 : i32
    scf.if %2 {
      %cst_10 = arith.constant 0.000000e+00 : f32
      %12 = vector.broadcast %cst_10 : f32 to vector<16x64xf32>
      %c0_11 = arith.constant 0 : index
      %c0_12 = arith.constant 0 : index
      %13 = vector.load %arg7[%c0_11, %c0_12] : memref<16x64xf32, #tpu.memory_space<vmem>>, vector<16x64xf32>
      tpu.vector_store %arg7[%c0_11, %c0_12], %12 {strides = array<i32>} : memref<16x64xf32, #tpu.memory_space<vmem>>, vector<16x64xf32>,
    } else {
    }
    %c0 = arith.constant 0 : index
    %c0_1 = arith.constant 0 : index
    %3 = vector.load %arg7[%c0, %c0_1] : memref<16x64xf32, #tpu.memory_space<vmem>>, vector<16x64xf32>
    %c0_2 = arith.constant 0 : index
    %c0_3 = arith.constant 0 : index
    %4 = vector.load %arg3[%c0_2, %c0_3] : memref<16x32xbf16, #tpu.memory_space<vmem>>, vector<16x32xbf16>
    %c0_4 = arith.constant 0 : index
    %c0_5 = arith.constant 0 : index
    %5 = vector.load %arg4[%c0_4, %c0_5] : memref<32x64xbf16, #tpu.memory_space<vmem>>, vector<32x64xbf16>
    %cst = arith.constant dense<0.000000e+00> : vector<16x64xf32>
    %6 = tpu.matmul %4, %5, %cst {dimension_numbers = #tpu.dot_dimension_numbers<[1], [0], [0], [1], [0, 0, 1, 1], [], []>} : vector<16x32xbf16>, vector<32x64xbf16>, vector<16x64xf32> -> vector<16x64xf32>
    %7 = arith.addf %3, %6 : vector<16x64xf32>
    %c0_6 = arith.constant 0 : index
    %c0_7 = arith.constant 0 : index
    %8 = vector.load %arg7[%c0_6, %c0_7] : memref<16x64xf32, #tpu.memory_space<vmem>>, vector<16x64xf32>
    tpu.vector_store %arg7[%c0_6, %c0_7], %7 {strides = array<i32>} : memref<16x64xf32, #tpu.memory_space<vmem>>, vector<16x64xf32>,
    %c0_i32_8 = arith.constant 0 : i32
    %9 = arith.cmpi eq, %arg2, %c0_i32_8 : i32
    %10 = arith.extui %9 : i1 to i32
    %c0_i32_9 = arith.constant 0 : i32
    %11 = arith.cmpi ne, %10, %c0_i32_9 : i32
    scf.if %11 {
      %c0_10 = arith.constant 0 : index
      %c0_11 = arith.constant 0 : index
      %12 = vector.load %arg7[%c0_10, %c0_11] : memref<16x64xf32, #tpu.memory_space<vmem>>, vector<16x64xf32>
      %c0_12 = arith.constant 0 : index
      %c0_13 = arith.constant 0 : index
      %13 = vector.load %arg5[%c0_12, %c0_13] : memref<1x64xf32, #tpu.memory_space<vmem>>, vector<1x64xf32>
      %14 = vector.broadcast %13 : vector<1x64xf32> to vector<16x64xf32>
      %15 = arith.addf %12, %14 : vector<16x64xf32>
      %c0_14 = arith.constant 0 : index
      %c0_15 = arith.constant 0 : index
      %16 = vector.load %arg6[%c0_14, %c0_15] : memref<16x64xf32, #tpu.memory_space<vmem>>, vector<16x64xf32>
      tpu.vector_store %arg6[%c0_14, %c0_15], %15 {strides = array<i32>} : memref<16x64xf32, #tpu.memory_space<vmem>>, vector<16x64xf32>,
    } else {
    }
    return
  }
  func.func @transform_0(%arg0: i32, %arg1: i32, %arg2: i32) -> (i32, i32) {
    %c0_i32 = arith.constant 0 : i32
    return %arg0, %arg2 : i32, i32
  }
  func.func @transform_1(%arg0: i32, %arg1: i32, %arg2: i32) -> (i32, i32) {
    %c0_i32 = arith.constant 0 : i32
    return %arg2, %arg1 : i32, i32
  }
  func.func @transform_2(%arg0: i32, %arg1: i32, %arg2: i32) -> (i32, i32) {
    %c0_i32 = arith.constant 0 : i32
    %c0_i32_0 = arith.constant 0 : i32
    return %c0_i32, %arg1 : i32, i32
  }
  func.func @transform_3(%arg0: i32, %arg1: i32, %arg2: i32) -> (i32, i32) {
    %c0_i32 = arith.constant 0 : i32
    return %arg0, %arg1 : i32, i32
  }
}

</mosaic_0001>

<llo_original>
// kernel: moe_mamba_forward.15
$region0: #{moe_mamba_forward.15}
  #allocation0 [shape = 'u32[]', space=smem, size = 0x4, offset = 0x4, fixed_abs, tag = 'smem constant byte address 0x4 - core index']
  #allocation1 [shape = 'u32[144,128]{1,0:T(1,128)}', space=vmem, size = 0x12000, scoped, tag = 'internal scratch']
  #allocation2 [shape = 'f32[16,4]{1,0:T(8,128)}', space=vmem, size = 0x2000, scoped, tag = 'scratch operand']
  %s0 = inlined_call_operand.vmem [shape: bf16[16,32], index: 0, kind: input, shape index: {}]
  %s1 = inlined_call_operand.vmem [shape: bf16[32,4], index: 1, kind: input, shape index: {}]
  %s2 = inlined_call_operand.vmem [shape: f32[1,4], index: 2, kind: input, shape index: {}]
  %s3 = inlined_call_operand.vmem [shape: f32[16,4], index: 3, kind: output, shape index: {}]
  %s4 = sld [smem:[#allocation0]]
  $region30: #{moe_mamba_forward.15} parent=0
    _
  %s6 = ssub.s32 1, %s4
  %s7 = scalar_select 0, %s6, %s4
  // Predicated region
  $region2: #{moe_mamba_forward.15} parent=0 // pred_check
    _
  $region3: #{moe_mamba_forward.15} parent=0 // pred_check_branch
    %9 = sbr.rel (0) target = $region5
  $region4: #{moe_mamba_forward.15} parent=0 // pred_region
    _
  $region5: #{moe_mamba_forward.15} parent=0 // pred_fallthru
    _
  // Predicated region
  $region6: #{moe_mamba_forward.15} parent=0 // pred_check
    _
  $region7: #{moe_mamba_forward.15} parent=0 // pred_check_branch
    %11 = sbr.rel (0) target = $region9
  $region8: #{moe_mamba_forward.15} parent=0 // pred_region
    _
  $region9: #{moe_mamba_forward.15} parent=0 // pred_fallthru
    _
  // Predicated region
  $region10: #{moe_mamba_forward.15} parent=0 // pred_check
    _
  $region11: #{moe_mamba_forward.15} parent=0 // pred_check_branch
    %13 = sbr.rel (0) target = $region13
  $region12: #{moe_mamba_forward.15} parent=0 // pred_region
    _
  $region13: #{moe_mamba_forward.15} parent=0 // pred_fallthru
    _
  %p15 = scmp.eq.s32.totalorder 0, 0
  // Predicated region
  $region14: #{moe_mamba_forward.15} parent=0 // pred_check
    %p16 = pneg %p15
  $region15: #{moe_mamba_forward.15} parent=0 // pred_check_branch
    %18 = sbr.rel (%p16) target = $region17
  $region16: #{moe_mamba_forward.15} parent=0 // pred_region
    %vm19 = vcmask 31744
    %20 = vst.msk [vmem:[#allocation2] sm:$0xff] %vm19, 0.0
    %21 = vst.msk [vmem:[#allocation2 + $0x8] sm:$0xff] %vm19, 0.0
  $region17: #{moe_mamba_forward.15} parent=0 // pred_fallthru
    _
  %v22 = vld [vmem:[#allocation2] sm:$0xff]
  %v23 = vld [vmem:[#allocation2 + $0x8] sm:$0xff]
  %v24 = vld [vmem:[%s0] sm:$0xf]
  %v25 = vld [vmem:[%s0 + $0x4] sm:$0xf]
  %v26 = vld [vmem:[%s1] sm:$0xf]
  %v27 = vld [vmem:[%s1 + $0x4] sm:$0xf]
  %v28 = vld [vmem:[%s1 + $0x8] sm:$0xf]
  %v29 = vld [vmem:[%s1 + $0xc] sm:$0xf]
  %v32 = vunpack.c.l.b16 %v24
  %v33 = vunpack.c.l.b16 %v25
  %v34 = vpack.c.b16 %v33, %v32
  %v39 = vunpack.c.l.b16 %v26
  %v40 = vunpack.c.l.b16 %v27
  %v41 = vunpack.c.l.b16 %v28
  %v42 = vunpack.c.l.b16 %v29
  %v43 = vpack.c.b16 %v40, %v39
  %v44 = vpack.c.b16 %v42, %v41
  %vm47 = vcmask 261120
  %v49 = vsel %vm47, %v34, 0
  %51 = vmatprep.subr.bf16.mxu0 0
  %52 = vmatpush1.bf16.msra.mxu0 %v43
  %53 = vmatprep.subr.bf16.mxu0 0
  %54 = vmatpush1.bf16.msra.mxu0 %v44
  %55 = vmatprep.subr.bf16.mxu0 0
  %56 = vmatpush1.bf16.msra.mxu0 0
  %57 = vmatprep.subr.bf16.mxu0 0
  %58 = vmatpush1.bf16.msra.mxu0 0
  %59 = vmatprep.subr.bf16.mxu0 0
  %60 = vmatpush1.bf16.msra.mxu0 0
  %61 = vmatprep.subr.bf16.mxu0 0
  %62 = vmatpush1.bf16.msra.mxu0 0
  %63 = vmatprep.subr.bf16.mxu0 0
  %64 = vmatpush1.bf16.msra.mxu0 0
  %65 = vmatprep.subr.bf16.mxu0 0
  %66 = vmatpush1.bf16.msra.mxu0 0
  %67 = vmatprep.subr.bf16.mxu0 0
  %68 = vmatpush1.bf16.msra.mxu0 0
  %69 = vmatprep.subr.bf16.mxu0 0
  %70 = vmatpush1.bf16.msra.mxu0 0
  %71 = vmatprep.subr.bf16.mxu0 0
  %72 = vmatpush1.bf16.msra.mxu0 0
  %73 = vmatprep.subr.bf16.mxu0 0
  %74 = vmatpush1.bf16.msra.mxu0 0
  %75 = vmatprep.subr.bf16.mxu0 0
  %76 = vmatpush1.bf16.msra.mxu0 0
  %77 = vmatprep.subr.bf16.mxu0 0
  %78 = vmatpush1.bf16.msra.mxu0 0
  %79 = vmatprep.subr.bf16.mxu0 0
  %80 = vmatpush1.bf16.msra.mxu0 0
  %81 = vmatprep.subr.bf16.mxu0 0
  %82 = vmatpush1.bf16.msra.mxu0 0
  %83 = vmatprep.mubr.bf16.mxu0 0
  %84 = vmatmul.mubr.bf16.gmra.mrb[0].mxu0 %v49
  %v85 = vpop.f32.mrb[0].mxu0
  %v86 = vadd.f32 0.0, %v85
  %v87 = vpop.f32.mrb[0].mxu0
  %v88 = vpop.f32.mrb[0].mxu0
  %v89 = vadd.f32 0.0, %v88
  %v90 = vpop.f32.mrb[0].mxu0
  %91 = vdwg.mxu0
  %v92 = vadd.f32 %v22, %v86
  %v93 = vadd.f32 %v23, %v89
  %vm94 = vcmask 31744
  %95 = vst.msk [vmem:[#allocation2] sm:$0xff] %vm94, %v92
  %96 = vst.msk [vmem:[#allocation2 + $0x8] sm:$0xff] %vm94, %v93
  // Predicated region
  $region18: #{moe_mamba_forward.15} parent=0 // pred_check
    %p97 = pneg %p15
  $region19: #{moe_mamba_forward.15} parent=0 // pred_check_branch
    %99 = sbr.rel (%p97) target = $region21
  $region20: #{moe_mamba_forward.15} parent=0 // pred_region
    %v100 = vld [vmem:[#allocation2] sm:$0xff]
    %v101 = vld [vmem:[#allocation2 + $0x8] sm:$0xff]
    %v102 = vld [vmem:[%s2] sm:$0x1]
    %v104 = vlaneseq
    %v105 = vshrl.u32 %v104, 7
    %v106 = vsub.s32 0, %v105
    %v107 = vrot.slane %v102, %v106
    %v109 = vadd.f32 %v100, %v107
    %v110 = vadd.f32 %v101, %v107
    %111 = vst.msk [vmem:[%s3] sm:$0xff] %vm94, %v109
    %112 = vst.msk [vmem:[%s3 + $0x8] sm:$0xff] %vm94, %v110
  $region21: #{moe_mamba_forward.15} parent=0 // pred_fallthru
    _
  // Predicated region
  $region22: #{moe_mamba_forward.15} parent=0 // pred_check
    _
  $region23: #{moe_mamba_forward.15} parent=0 // pred_check_branch
    %114 = sbr.rel (0) target = $region25
  $region24: #{moe_mamba_forward.15} parent=0 // pred_region
    _
  $region25: #{moe_mamba_forward.15} parent=0 // pred_fallthru
    _
  // Predicated region
  $region26: #{moe_mamba_forward.15} parent=0 // pred_check
    _
  $region27: #{moe_mamba_forward.15} parent=0 // pred_check_branch
    %116 = sbr.rel (0) target = $region29
  $region28: #{moe_mamba_forward.15} parent=0 // pred_region
    _
  $region29: #{moe_mamba_forward.15} parent=0 // pred_fallthru
    _

// kernel: moe_mamba_forward.12
$region0: #{moe_mamba_forward.12}
  #allocation0 [shape = 'u32[]', space=smem, size = 0x4, offset = 0x4, fixed_abs, tag = 'smem constant byte address 0x4 - core index']
  #allocation1 [shape = 'u32[144,128]{1,0:T(1,128)}', space=vmem, size = 0x12000, scoped, tag = 'internal scratch']
  #allocation2 [shape = 'f32[16,128]{1,0:T(8,128)}', space=vmem, size = 0x2000, scoped, tag = 'scratch operand']
  %s0 = inlined_call_operand.vmem [shape: bf16[16,32], index: 0, kind: input, shape index: {}]
  %s1 = inlined_call_operand.vmem [shape: bf16[32,128], index: 1, kind: input, shape index: {}]
  %s2 = inlined_call_operand.vmem [shape: bf16[16,128], index: 2, kind: output, shape index: {}]
  %s3 = sld [smem:[#allocation0]]
  $region26: #{moe_mamba_forward.12} parent=0
    _
  %s5 = ssub.s32 1, %s3
  %s6 = scalar_select 0, %s5, %s3
  // Predicated region
  $region2: #{moe_mamba_forward.12} parent=0 // pred_check
    _
  $region3: #{moe_mamba_forward.12} parent=0 // pred_check_branch
    %8 = sbr.rel (0) target = $region5
  $region4: #{moe_mamba_forward.12} parent=0 // pred_region
    _
  $region5: #{moe_mamba_forward.12} parent=0 // pred_fallthru
    _
  // Predicated region
  $region6: #{moe_mamba_forward.12} parent=0 // pred_check
    _
  $region7: #{moe_mamba_forward.12} parent=0 // pred_check_branch
    %10 = sbr.rel (0) target = $region9
  $region8: #{moe_mamba_forward.12} parent=0 // pred_region
    _
  $region9: #{moe_mamba_forward.12} parent=0 // pred_fallthru
    _
  %p12 = scmp.eq.s32.totalorder 0, 0
  // Predicated region
  $region10: #{moe_mamba_forward.12} parent=0 // pred_check
    %p13 = pneg %p12
  $region11: #{moe_mamba_forward.12} parent=0 // pred_check_branch
    %15 = sbr.rel (%p13) target = $region13
  $region12: #{moe_mamba_forward.12} parent=0 // pred_region
    %16 = vst [vmem:[#allocation2] sm:$0xff] 0.0
    %17 = vst [vmem:[#allocation2 + $0x8] sm:$0xff] 0.0
  $region13: #{moe_mamba_forward.12} parent=0 // pred_fallthru
    _
  %v18 = vld [vmem:[#allocation2] sm:$0xff]
  %v19 = vld [vmem:[#allocation2 + $0x8] sm:$0xff]
  %v20 = vld [vmem:[%s0] sm:$0xf]
  %v21 = vld [vmem:[%s0 + $0x4] sm:$0xf]
  %v22 = vld [vmem:[%s1] sm:$0xf]
  %v23 = vld [vmem:[%s1 + $0x4] sm:$0xf]
  %v24 = vld [vmem:[%s1 + $0x8] sm:$0xf]
  %v25 = vld [vmem:[%s1 + $0xc] sm:$0xf]
  %v28 = vunpack.c.l.b16 %v20
  %v29 = vunpack.c.l.b16 %v21
  %v30 = vpack.c.b16 %v29, %v28
  %v35 = vunpack.c.l.b16 %v22
  %v36 = vunpack.c.l.b16 %v23
  %v37 = vunpack.c.l.b16 %v24
  %v38 = vunpack.c.l.b16 %v25
  %v39 = vpack.c.b16 %v36, %v35
  %v40 = vpack.c.b16 %v38, %v37
  %vm43 = vcmask 261120
  %v45 = vsel %vm43, %v30, 0
  %47 = vmatprep.subr.bf16.mxu0 0
  %48 = vmatpush1.bf16.msra.mxu0 %v39
  %49 = vmatprep.subr.bf16.mxu0 0
  %50 = vmatpush1.bf16.msra.mxu0 %v40
  %51 = vmatprep.subr.bf16.mxu0 0
  %52 = vmatpush1.bf16.msra.mxu0 0
  %53 = vmatprep.subr.bf16.mxu0 0
  %54 = vmatpush1.bf16.msra.mxu0 0
  %55 = vmatprep.subr.bf16.mxu0 0
  %56 = vmatpush1.bf16.msra.mxu0 0
  %57 = vmatprep.subr.bf16.mxu0 0
  %58 = vmatpush1.bf16.msra.mxu0 0
  %59 = vmatprep.subr.bf16.mxu0 0
  %60 = vmatpush1.bf16.msra.mxu0 0
  %61 = vmatprep.subr.bf16.mxu0 0
  %62 = vmatpush1.bf16.msra.mxu0 0
  %63 = vmatprep.subr.bf16.mxu0 0
  %64 = vmatpush1.bf16.msra.mxu0 0
  %65 = vmatprep.subr.bf16.mxu0 0
  %66 = vmatpush1.bf16.msra.mxu0 0
  %67 = vmatprep.subr.bf16.mxu0 0
  %68 = vmatpush1.bf16.msra.mxu0 0
  %69 = vmatprep.subr.bf16.mxu0 0
  %70 = vmatpush1.bf16.msra.mxu0 0
  %71 = vmatprep.subr.bf16.mxu0 0
  %72 = vmatpush1.bf16.msra.mxu0 0
  %73 = vmatprep.subr.bf16.mxu0 0
  %74 = vmatpush1.bf16.msra.mxu0 0
  %75 = vmatprep.subr.bf16.mxu0 0
  %76 = vmatpush1.bf16.msra.mxu0 0
  %77 = vmatprep.subr.bf16.mxu0 0
  %78 = vmatpush1.bf16.msra.mxu0 0
  %79 = vmatprep.mubr.bf16.mxu0 0
  %80 = vmatmul.mubr.bf16.gmra.mrb[0].mxu0 %v45
  %v81 = vpop.f32.mrb[0].mxu0
  %v82 = vadd.f32 0.0, %v81
  %v83 = vpop.f32.mrb[0].mxu0
  %v84 = vpop.f32.mrb[0].mxu0
  %v85 = vadd.f32 0.0, %v84
  %v86 = vpop.f32.mrb[0].mxu0
  %87 = vdwg.mxu0
  %v88 = vadd.f32 %v18, %v82
  %v89 = vadd.f32 %v19, %v85
  %90 = vst [vmem:[#allocation2] sm:$0xff] %v88
  %91 = vst [vmem:[#allocation2 + $0x8] sm:$0xff] %v89
  // Predicated region
  $region14: #{moe_mamba_forward.12} parent=0 // pred_check
    %p92 = pneg %p12
  $region15: #{moe_mamba_forward.12} parent=0 // pred_check_branch
    %94 = sbr.rel (%p92) target = $region17
  $region16: #{moe_mamba_forward.12} parent=0 // pred_region
    %v95 = vld [vmem:[#allocation2] sm:$0xff]
    %v96 = vld [vmem:[#allocation2 + $0x8] sm:$0xff]
    %v97 = vpack.c.bf16 %v96, %v95
    %v99 = vunpack.c.l.b16 %v97
    %v100 = vunpack.c.h.b16 %v97
    %v101 = vpack.c.b16 %v99, %v99
    %v102 = vpack.c.b16 %v100, %v100
    %105 = vst [vmem:[%s2] sm:$0xf] %v101
    %106 = vst [vmem:[%s2 + $0x4] sm:$0xf] %v102
  $region17: #{moe_mamba_forward.12} parent=0 // pred_fallthru
    _
  // Predicated region
  $region18: #{moe_mamba_forward.12} parent=0 // pred_check
    _
  $region19: #{moe_mamba_forward.12} parent=0 // pred_check_branch
    %108 = sbr.rel (0) target = $region21
  $region20: #{moe_mamba_forward.12} parent=0 // pred_region
    _
  $region21: #{moe_mamba_forward.12} parent=0 // pred_fallthru
    _
  // Predicated region
  $region22: #{moe_mamba_forward.12} parent=0 // pred_check
    _
  $region23: #{moe_mamba_forward.12} parent=0 // pred_check_branch
    %110 = sbr.rel (0) target = $region25
  $region24: #{moe_mamba_forward.12} parent=0 // pred_region
    _
  $region25: #{moe_mamba_forward.12} parent=0 // pred_fallthru
    _

// kernel: moe_mamba_forward.14
$region0: #{moe_mamba_forward.14}
  #allocation0 [shape = 'u32[]', space=smem, size = 0x4, offset = 0x4, fixed_abs, tag = 'smem constant byte address 0x4 - core index']
  #allocation1 [shape = 'u32[144,128]{1,0:T(1,128)}', space=vmem, size = 0x12000, scoped, tag = 'internal scratch']
  #allocation2 [shape = 'f32[16,32]{1,0:T(8,128)}', space=vmem, size = 0x2000, scoped, tag = 'scratch operand']
  %s0 = inlined_call_operand.vmem [shape: bf16[16,64], index: 0, kind: input, shape index: {}]
  %s1 = inlined_call_operand.vmem [shape: bf16[64,32], index: 1, kind: input, shape index: {}]
  %s2 = inlined_call_operand.vmem [shape: bf16[16,32], index: 2, kind: output, shape index: {}]
  %s3 = sld [smem:[#allocation0]]
  $region26: #{moe_mamba_forward.14} parent=0
    _
  %s5 = ssub.s32 1, %s3
  %s6 = scalar_select 0, %s5, %s3
  // Predicated region
  $region2: #{moe_mamba_forward.14} parent=0 // pred_check
    _
  $region3: #{moe_mamba_forward.14} parent=0 // pred_check_branch
    %8 = sbr.rel (0) target = $region5
  $region4: #{moe_mamba_forward.14} parent=0 // pred_region
    _
  $region5: #{moe_mamba_forward.14} parent=0 // pred_fallthru
    _
  // Predicated region
  $region6: #{moe_mamba_forward.14} parent=0 // pred_check
    _
  $region7: #{moe_mamba_forward.14} parent=0 // pred_check_branch
    %10 = sbr.rel (0) target = $region9
  $region8: #{moe_mamba_forward.14} parent=0 // pred_region
    _
  $region9: #{moe_mamba_forward.14} parent=0 // pred_fallthru
    _
  %p12 = scmp.eq.s32.totalorder 0, 0
  // Predicated region
  $region10: #{moe_mamba_forward.14} parent=0 // pred_check
    %p13 = pneg %p12
  $region11: #{moe_mamba_forward.14} parent=0 // pred_check_branch
    %15 = sbr.rel (%p13) target = $region13
  $region12: #{moe_mamba_forward.14} parent=0 // pred_region
    %vm16 = vcmask 261120
    %17 = vst.msk [vmem:[#allocation2] sm:$0xff] %vm16, 0.0
    %18 = vst.msk [vmem:[#allocation2 + $0x8] sm:$0xff] %vm16, 0.0
  $region13: #{moe_mamba_forward.14} parent=0 // pred_fallthru
    _
  %v19 = vld [vmem:[#allocation2] sm:$0xff]
  %v20 = vld [vmem:[#allocation2 + $0x8] sm:$0xff]
  %v21 = vld [vmem:[%s0] sm:$0xf]
  %v22 = vld [vmem:[%s0 + $0x4] sm:$0xf]
  %v23 = vld [vmem:[%s1] sm:$0xf]
  %v24 = vld [vmem:[%s1 + $0x4] sm:$0xf]
  %v25 = vld [vmem:[%s1 + $0x8] sm:$0xf]
  %v26 = vld [vmem:[%s1 + $0xc] sm:$0xf]
  %v27 = vld [vmem:[%s1 + $0x10] sm:$0xf]
  %v28 = vld [vmem:[%s1 + $0x14] sm:$0xf]
  %v29 = vld [vmem:[%s1 + $0x18] sm:$0xf]
  %v30 = vld [vmem:[%s1 + $0x1c] sm:$0xf]
  %v33 = vunpack.c.l.b16 %v21
  %v34 = vunpack.c.l.b16 %v22
  %v35 = vpack.c.b16 %v34, %v33
  %v44 = vunpack.c.l.b16 %v23
  %v45 = vunpack.c.l.b16 %v24
  %v46 = vunpack.c.l.b16 %v25
  %v47 = vunpack.c.l.b16 %v26
  %v48 = vunpack.c.l.b16 %v27
  %v49 = vunpack.c.l.b16 %v28
  %v50 = vunpack.c.l.b16 %v29
  %v51 = vunpack.c.l.b16 %v30
  %v52 = vpack.c.b16 %v45, %v44
  %v53 = vpack.c.b16 %v47, %v46
  %v54 = vpack.c.b16 %v49, %v48
  %v55 = vpack.c.b16 %v51, %v50
  %vm60 = vcmask 523264
  %v62 = vsel %vm60, %v35, 0
  %64 = vmatprep.subr.bf16.mxu0 0
  %65 = vmatpush1.bf16.msra.mxu0 %v52
  %66 = vmatprep.subr.bf16.mxu0 0
  %67 = vmatpush1.bf16.msra.mxu0 %v53
  %68 = vmatprep.subr.bf16.mxu0 0
  %69 = vmatpush1.bf16.msra.mxu0 %v54
  %70 = vmatprep.subr.bf16.mxu0 0
  %71 = vmatpush1.bf16.msra.mxu0 %v55
  %72 = vmatprep.subr.bf16.mxu0 0
  %73 = vmatpush1.bf16.msra.mxu0 0
  %74 = vmatprep.subr.bf16.mxu0 0
  %75 = vmatpush1.bf16.msra.mxu0 0
  %76 = vmatprep.subr.bf16.mxu0 0
  %77 = vmatpush1.bf16.msra.mxu0 0
  %78 = vmatprep.subr.bf16.mxu0 0
  %79 = vmatpush1.bf16.msra.mxu0 0
  %80 = vmatprep.subr.bf16.mxu0 0
  %81 = vmatpush1.bf16.msra.mxu0 0
  %82 = vmatprep.subr.bf16.mxu0 0
  %83 = vmatpush1.bf16.msra.mxu0 0
  %84 = vmatprep.subr.bf16.mxu0 0
  %85 = vmatpush1.bf16.msra.mxu0 0
  %86 = vmatprep.subr.bf16.mxu0 0
  %87 = vmatpush1.bf16.msra.mxu0 0
  %88 = vmatprep.subr.bf16.mxu0 0
  %89 = vmatpush1.bf16.msra.mxu0 0
  %90 = vmatprep.subr.bf16.mxu0 0
  %91 = vmatpush1.bf16.msra.mxu0 0
  %92 = vmatprep.subr.bf16.mxu0 0
  %93 = vmatpush1.bf16.msra.mxu0 0
  %94 = vmatprep.subr.bf16.mxu0 0
  %95 = vmatpush1.bf16.msra.mxu0 0
  %96 = vmatprep.mubr.bf16.mxu0 0
  %97 = vmatmul.mubr.bf16.gmra.mrb[0].mxu0 %v62
  %v98 = vpop.f32.mrb[0].mxu0
  %v99 = vadd.f32 0.0, %v98
  %v100 = vpop.f32.mrb[0].mxu0
  %v101 = vpop.f32.mrb[0].mxu0
  %v102 = vadd.f32 0.0, %v101
  %v103 = vpop.f32.mrb[0].mxu0
  %104 = vdwg.mxu0
  %v105 = vadd.f32 %v19, %v99
  %v106 = vadd.f32 %v20, %v102
  %vm107 = vcmask 261120
  %108 = vst.msk [vmem:[#allocation2] sm:$0xff] %vm107, %v105
  %109 = vst.msk [vmem:[#allocation2 + $0x8] sm:$0xff] %vm107, %v106
  // Predicated region
  $region14: #{moe_mamba_forward.14} parent=0 // pred_check
    %p110 = pneg %p12
  $region15: #{moe_mamba_forward.14} parent=0 // pred_check_branch
    %112 = sbr.rel (%p110) target = $region17
  $region16: #{moe_mamba_forward.14} parent=0 // pred_region
    %v113 = vld [vmem:[#allocation2] sm:$0xff]
    %v114 = vld [vmem:[#allocation2 + $0x8] sm:$0xff]
    %v115 = vpack.c.bf16 %v114, %v113
    %v117 = vunpack.c.l.b16 %v115
    %v118 = vunpack.c.h.b16 %v115
    %v119 = vpack.c.b16 %v117, %v117
    %v120 = vpack.c.b16 %v118, %v118
    %vm123 = vcmask 257024
    %124 = vst.msk [vmem:[%s2] sm:$0xf] %vm123, %v119
    %125 = vst.msk [vmem:[%s2 + $0x4] sm:$0xf] %vm123, %v120
  $region17: #{moe_mamba_forward.14} parent=0 // pred_fallthru
    _
  // Predicated region
  $region18: #{moe_mamba_forward.14} parent=0 // pred_check
    _
  $region19: #{moe_mamba_forward.14} parent=0 // pred_check_branch
    %127 = sbr.rel (0) target = $region21
  $region20: #{moe_mamba_forward.14} parent=0 // pred_region
    _
  $region21: #{moe_mamba_forward.14} parent=0 // pred_fallthru
    _
  // Predicated region
  $region22: #{moe_mamba_forward.14} parent=0 // pred_check
    _
  $region23: #{moe_mamba_forward.14} parent=0 // pred_check_branch
    %129 = sbr.rel (0) target = $region25
  $region24: #{moe_mamba_forward.14} parent=0 // pred_region
    _
  $region25: #{moe_mamba_forward.14} parent=0 // pred_fallthru
    _

// kernel: div.17
$region0: #{div.17}
  %s0 = inlined_call_operand.vmem [shape: f32[16], index: 0, kind: input, shape index: {}]
  %s1 = inlined_call_operand.vmem [shape: f32[2,8], index: 1, kind: output, shape index: {}]
  $region1: #{div.17} parent=0
    #allocation0 [shape = 'u8[4096]{0}', space=vmem, size = 0x1000, scoped, tag = 'scoped mem for output reshape']
    #allocation1 [shape = 'u8[4096]{0}', space=vmem, size = 0x1000, scoped, tag = 'scoped mem for input reshape']
    %s3 = sshllo.u32 0, 1
    %v4 = vld [vmem:[%s0] sm:%s3]
    %5 = vst [vmem:[#allocation1] sm:%s3] %v4
    %v6 = vld [vmem:[#allocation1] sm:$0x1]
    %vm7 = vcmask 64512
    %8 = vst.msk [vmem:[#allocation0] sm:$0x1] %vm7, %v6
    %v9 = vld [vmem:[#allocation1] sm:$0x1]
    %10 = vrot.lane.b32.xlu0 %v9, 120
    %v11 = vpop.permute.xlu0 %10
    %vm12 = vcmask 64512
    %s13 = scalar_lea.vmem [#allocation0], 1
    %14 = vst.msk [vmem:[%s13] sm:$0x1] %vm12, %v11
    %s16 = sshllo.u32 0, 2
    %v18 = vld [vmem:[#allocation0] sm:%s16]
    %s19 = sshllo.u32 0, 2
    %20 = vst [vmem:[%s1] sm:%s19] %v18

// kernel: moe_mamba_forward.13
$region0: #{moe_mamba_forward.13}
  #allocation0 [shape = 'u32[]', space=smem, size = 0x4, offset = 0x4, fixed_abs, tag = 'smem constant byte address 0x4 - core index']
  #allocation1 [shape = 'u32[144,128]{1,0:T(1,128)}', space=vmem, size = 0x12000, scoped, tag = 'internal scratch']
  #allocation2 [shape = 'f32[8,64]{1,0:T(8,128)}', space=vmem, size = 0x1000, scoped, tag = 'scratch operand']
  #allocation3 [shape = 'f32[8,64]{1,0:T(8,128)}', space=vmem, size = 0x1000, scoped, tag = 'scratch operand']
  #allocation4 [shape = 'f32[8,64]{1,0:T(8,128)}', space=vmem, size = 0x1000, scoped, tag = 'scratch operand']
  #allocation5 [shape = 'f32[8,8]{1,0:T(8,128)}', space=vmem, size = 0x1000, scoped, tag = 'scratch operand']
  #allocation6 [shape = 'f32[8,8]{1,0:T(8,128)}', space=vmem, size = 0x1000, scoped, tag = 'scratch operand']
  %s0 = inlined_call_operand.vmem [shape: bf16[2,8,64], index: 0, kind: input, shape index: {}]
  %s1 = inlined_call_operand.vmem [shape: bf16[2,8,64], index: 1, kind: input, shape index: {}]
  %s2 = inlined_call_operand.vmem [shape: f32[4,64], index: 2, kind: input, shape index: {}]
  %s3 = inlined_call_operand.vmem [shape: f32[1,64], index: 3, kind: input, shape index: {}]
  %s4 = inlined_call_operand.vmem [shape: bf16[64,2], index: 4, kind: input, shape index: {}]
  %s5 = inlined_call_operand.vmem [shape: bf16[64,8], index: 5, kind: input, shape index: {}]
  %s6 = inlined_call_operand.vmem [shape: bf16[64,8], index: 6, kind: input, shape index: {}]
  %s7 = inlined_call_operand.vmem [shape: bf16[2,64], index: 7, kind: input, shape index: {}]
  %s8 = inlined_call_operand.vmem [shape: f32[1,64], index: 8, kind: input, shape index: {}]
  %s9 = inlined_call_operand.vmem [shape: f32[8,64], index: 9, kind: input, shape index: {}]
  %s10 = inlined_call_operand.vmem [shape: f32[1,64], index: 10, kind: input, shape index: {}]
  %s11 = inlined_call_operand.vmem [shape: bf16[2,8,64], index: 11, kind: output, shape index: {}]
  %s12 = sld [smem:[#allocation0]]
  $region77: #{moe_mamba_forward.13} parent=0
    _
  %s14 = ssub.s32 1, %s12
  %s15 = scalar_select 0, %s14, %s12
  loop: start=0, step=1, limit=4
  $region2: #{moe_mamba_forward.13} parent=0 // loop_pre_header
    _
  $region3: #{moe_mamba_forward.13} parent=0 // loop_header
    %s17 = sphi 0, %s21
    %p18 = scmp.ge.s32.totalorder %s17, 4
    %s27 = sphi 0, %s29
    %s30 = sphi 0, %s27
    %s31 = sphi 0, %s30
    %s47 = sphi 0, %s31
    %s53 = sphi 0, %s55
    %s56 = sphi 0, %s53
    %s57 = sphi 0, %s56
    %s73 = sphi 0, %s57
    %s77 = sphi 0, %s77
    %s79 = sphi 0, %s77
    %s80 = sphi 0, %s79
    %s94 = sphi 0, %s80
    %s98 = sphi 0, %s98
    %s100 = sphi 0, %s98
    %s101 = sphi 0, %s100
    %s115 = sphi 0, %s101
    %s119 = sphi 0, %s119
    %s121 = sphi 0, %s119
    %s122 = sphi 0, %s121
    %s136 = sphi 0, %s122
    %s140 = sphi 0, %s140
    %s142 = sphi 0, %s140
    %s143 = sphi 0, %s142
    %s157 = sphi 0, %s143
    %s161 = sphi 0, %s161
    %s163 = sphi 0, %s161
    %s164 = sphi 0, %s163
    %s178 = sphi 0, %s164
    %s182 = sphi 0, %s182
    %s184 = sphi 0, %s182
    %s185 = sphi 0, %s184
    %s199 = sphi 0, %s185
    %s203 = sphi 0, %s203
    %s205 = sphi 0, %s203
    %s206 = sphi 0, %s205
    %s220 = sphi 0, %s206
    %s224 = sphi 0, %s224
    %s226 = sphi 0, %s224
    %s227 = sphi 0, %s226
    %s241 = sphi 0, %s227
    %s245 = sphi 0, %s245
    %s247 = sphi 0, %s245
    %s248 = sphi 0, %s247
    %s262 = sphi 0, %s248
    %s268 = sphi 0, %s270
    %s271 = sphi 0, %s268
    %s272 = sphi 0, %s271
    %s288 = sphi 0, %s272
  $region4: #{moe_mamba_forward.13} parent=0 // loop_header_branch
    %20 = sbr.rel (%p18) target = $region8
  $region5: #{moe_mamba_forward.13} parent=0 // loop_body
    %s22 = ssub.s32 %s17, 1
    %s23 = ssub.s32 %s17, 2
    %s24 = sadd.s32 %s17, 1
    %s25 = ssub.s32 %s17, %s24
    %p26 = scmp.eq.s32.totalorder %s25, 0
    %s28 = sadd.s32 %s27, 1
    %s29 = scalar_select %p26, %s27, %s28
    %p32 = pneg %p26
    %p33 = scmp.eq.s32.totalorder %s17, 1
    %p34 = por %p32, %p33
    %p35 = scmp.ne.s32.totalorder %s27, %s30
    %p36 = scmp.eq.s32.totalorder %s17, 0
    %p37 = por %p35, %p36
    %p38 = scmp.ne.s32.totalorder %s27, %s30
    %p39 = scmp.eq.s32.totalorder %s22, 1
    %p40 = por %p38, %p39
    %p41 = scmp.ne.s32.totalorder %s30, %s31
    %p42 = scmp.eq.s32.totalorder %s22, 0
    %p43 = por %p41, %p42
    %p44 = scmp.ne.s32.totalorder %s30, %s31
    %p45 = scmp.eq.s32.totalorder %s23, 1
    %p46 = por %p44, %p45
    %p48 = scmp.ne.s32.totalorder %s31, %s47
    %p49 = scmp.eq.s32.totalorder %s23, 0
    %p50 = por %p48, %p49
    %s51 = ssub.s32 %s17, %s24
    %p52 = scmp.eq.s32.totalorder %s51, 0
    %s54 = sadd.s32 %s53, 1
    %s55 = scalar_select %p52, %s53, %s54
    %p58 = pneg %p52
    %p59 = scmp.eq.s32.totalorder %s17, 1
    %p60 = por %p58, %p59
    %p61 = scmp.ne.s32.totalorder %s53, %s56
    %p62 = scmp.eq.s32.totalorder %s17, 0
    %p63 = por %p61, %p62
    %p64 = scmp.ne.s32.totalorder %s53, %s56
    %p65 = scmp.eq.s32.totalorder %s22, 1
    %p66 = por %p64, %p65
    %p67 = scmp.ne.s32.totalorder %s56, %s57
    %p68 = scmp.eq.s32.totalorder %s22, 0
    %p69 = por %p67, %p68
    %p70 = scmp.ne.s32.totalorder %s56, %s57
    %p71 = scmp.eq.s32.totalorder %s23, 1
    %p72 = por %p70, %p71
    %p74 = scmp.ne.s32.totalorder %s57, %s73
    %p75 = scmp.eq.s32.totalorder %s23, 0
    %p76 = por %p74, %p75
    %s78 = sadd.s32 %s77, 1
    %p81 = scmp.eq.s32.totalorder %s17, 1
    %p82 = scmp.ne.s32.totalorder %s77, %s79
    %p83 = scmp.eq.s32.totalorder %s17, 0
    %p84 = por %p82, %p83
    %p85 = scmp.ne.s32.totalorder %s77, %s79
    %p86 = scmp.eq.s32.totalorder %s22, 1
    %p87 = por %p85, %p86
    %p88 = scmp.ne.s32.totalorder %s79, %s80
    %p89 = scmp.eq.s32.totalorder %s22, 0
    %p90 = por %p88, %p89
    %p91 = scmp.ne.s32.totalorder %s79, %s80
    %p92 = scmp.eq.s32.totalorder %s23, 1
    %p93 = por %p91, %p92
    %p95 = scmp.ne.s32.totalorder %s80, %s94
    %p96 = scmp.eq.s32.totalorder %s23, 0
    %p97 = por %p95, %p96
    %s99 = sadd.s32 %s98, 1
    %p102 = scmp.eq.s32.totalorder %s17, 1
    %p103 = scmp.ne.s32.totalorder %s98, %s100
    %p104 = scmp.eq.s32.totalorder %s17, 0
    %p105 = por %p103, %p104
    %p106 = scmp.ne.s32.totalorder %s98, %s100
    %p107 = scmp.eq.s32.totalorder %s22, 1
    %p108 = por %p106, %p107
    %p109 = scmp.ne.s32.totalorder %s100, %s101
    %p110 = scmp.eq.s32.totalorder %s22, 0
    %p111 = por %p109, %p110
    %p112 = scmp.ne.s32.totalorder %s100, %s101
    %p113 = scmp.eq.s32.totalorder %s23, 1
    %p114 = por %p112, %p113
    %p116 = scmp.ne.s32.totalorder %s101, %s115
    %p117 = scmp.eq.s32.totalorder %s23, 0
    %p118 = por %p116, %p117
    %s120 = sadd.s32 %s119, 1
    %p123 = scmp.eq.s32.totalorder %s17, 1
    %p124 = scmp.ne.s32.totalorder %s119, %s121
    %p125 = scmp.eq.s32.totalorder %s17, 0
    %p126 = por %p124, %p125
    %p127 = scmp.ne.s32.totalorder %s119, %s121
    %p128 = scmp.eq.s32.totalorder %s22, 1
    %p129 = por %p127, %p128
    %p130 = scmp.ne.s32.totalorder %s121, %s122
    %p131 = scmp.eq.s32.totalorder %s22, 0
    %p132 = por %p130, %p131
    %p133 = scmp.ne.s32.totalorder %s121, %s122
    %p134 = scmp.eq.s32.totalorder %s23, 1
    %p135 = por %p133, %p134
    %p137 = scmp.ne.s32.totalorder %s122, %s136
    %p138 = scmp.eq.s32.totalorder %s23, 0
    %p139 = por %p137, %p138
    %s141 = sadd.s32 %s140, 1
    %p144 = scmp.eq.s32.totalorder %s17, 1
    %p145 = scmp.ne.s32.totalorder %s140, %s142
    %p146 = scmp.eq.s32.totalorder %s17, 0
    %p147 = por %p145, %p146
    %p148 = scmp.ne.s32.totalorder %s140, %s142
    %p149 = scmp.eq.s32.totalorder %s22, 1
    %p150 = por %p148, %p149
    %p151 = scmp.ne.s32.totalorder %s142, %s143
    %p152 = scmp.eq.s32.totalorder %s22, 0
    %p153 = por %p151, %p152
    %p154 = scmp.ne.s32.totalorder %s142, %s143
    %p155 = scmp.eq.s32.totalorder %s23, 1
    %p156 = por %p154, %p155
    %p158 = scmp.ne.s32.totalorder %s143, %s157
    %p159 = scmp.eq.s32.totalorder %s23, 0
    %p160 = por %p158, %p159
    %s162 = sadd.s32 %s161, 1
    %p165 = scmp.eq.s32.totalorder %s17, 1
    %p166 = scmp.ne.s32.totalorder %s161, %s163
    %p167 = scmp.eq.s32.totalorder %s17, 0
    %p168 = por %p166, %p167
    %p169 = scmp.ne.s32.totalorder %s161, %s163
    %p170 = scmp.eq.s32.totalorder %s22, 1
    %p171 = por %p169, %p170
    %p172 = scmp.ne.s32.totalorder %s163, %s164
    %p173 = scmp.eq.s32.totalorder %s22, 0
    %p174 = por %p172, %p173
    %p175 = scmp.ne.s32.totalorder %s163, %s164
    %p176 = scmp.eq.s32.totalorder %s23, 1
    %p177 = por %p175, %p176
    %p179 = scmp.ne.s32.totalorder %s164, %s178
    %p180 = scmp.eq.s32.totalorder %s23, 0
    %p181 = por %p179, %p180
    %s183 = sadd.s32 %s182, 1
    %p186 = scmp.eq.s32.totalorder %s17, 1
    %p187 = scmp.ne.s32.totalorder %s182, %s184
    %p188 = scmp.eq.s32.totalorder %s17, 0
    %p189 = por %p187, %p188
    %p190 = scmp.ne.s32.totalorder %s182, %s184
    %p191 = scmp.eq.s32.totalorder %s22, 1
    %p192 = por %p190, %p191
    %p193 = scmp.ne.s32.totalorder %s184, %s185
    %p194 = scmp.eq.s32.totalorder %s22, 0
    %p195 = por %p193, %p194
    %p196 = scmp.ne.s32.totalorder %s184, %s185
    %p197 = scmp.eq.s32.totalorder %s23, 1
    %p198 = por %p196, %p197
    %p200 = scmp.ne.s32.totalorder %s185, %s199
    %p201 = scmp.eq.s32.totalorder %s23, 0
    %p202 = por %p200, %p201
    %s204 = sadd.s32 %s203, 1
    %p207 = scmp.eq.s32.totalorder %s17, 1
    %p208 = scmp.ne.s32.totalorder %s203, %s205
    %p209 = scmp.eq.s32.totalorder %s17, 0
    %p210 = por %p208, %p209
    %p211 = scmp.ne.s32.totalorder %s203, %s205
    %p212 = scmp.eq.s32.totalorder %s22, 1
    %p213 = por %p211, %p212
    %p214 = scmp.ne.s32.totalorder %s205, %s206
    %p215 = scmp.eq.s32.totalorder %s22, 0
    %p216 = por %p214, %p215
    %p217 = scmp.ne.s32.totalorder %s205, %s206
    %p218 = scmp.eq.s32.totalorder %s23, 1
    %p219 = por %p217, %p218
    %p221 = scmp.ne.s32.totalorder %s206, %s220
    %p222 = scmp.eq.s32.totalorder %s23, 0
    %p223 = por %p221, %p222
    %s225 = sadd.s32 %s224, 1
    %p228 = scmp.eq.s32.totalorder %s17, 1
    %p229 = scmp.ne.s32.totalorder %s224, %s226
    %p230 = scmp.eq.s32.totalorder %s17, 0
    %p231 = por %p229, %p230
    %p232 = scmp.ne.s32.totalorder %s224, %s226
    %p233 = scmp.eq.s32.totalorder %s22, 1
    %p234 = por %p232, %p233
    %p235 = scmp.ne.s32.totalorder %s226, %s227
    %p236 = scmp.eq.s32.totalorder %s22, 0
    %p237 = por %p235, %p236
    %p238 = scmp.ne.s32.totalorder %s226, %s227
    %p239 = scmp.eq.s32.totalorder %s23, 1
    %p240 = por %p238, %p239
    %p242 = scmp.ne.s32.totalorder %s227, %s241
    %p243 = scmp.eq.s32.totalorder %s23, 0
    %p244 = por %p242, %p243
    %s246 = sadd.s32 %s245, 1
    %p249 = scmp.eq.s32.totalorder %s17, 1
    %p250 = scmp.ne.s32.totalorder %s245, %s247
    %p251 = scmp.eq.s32.totalorder %s17, 0
    %p252 = por %p250, %p251
    %p253 = scmp.ne.s32.totalorder %s245, %s247
    %p254 = scmp.eq.s32.totalorder %s22, 1
    %p255 = por %p253, %p254
    %p256 = scmp.ne.s32.totalorder %s247, %s248
    %p257 = scmp.eq.s32.totalorder %s22, 0
    %p258 = por %p256, %p257
    %p259 = scmp.ne.s32.totalorder %s247, %s248
    %p260 = scmp.eq.s32.totalorder %s23, 1
    %p261 = por %p259, %p260
    %p263 = scmp.ne.s32.totalorder %s248, %s262
    %p264 = scmp.eq.s32.totalorder %s23, 0
    %p265 = por %p263, %p264
    %s266 = ssub.s32 %s17, %s24
    %p267 = scmp.eq.s32.totalorder %s266, 0
    %s269 = sadd.s32 %s268, 1
    %s270 = scalar_select %p267, %s268, %s269
    %p273 = pneg %p267
    %p274 = scmp.eq.s32.totalorder %s17, 1
    %p275 = por %p273, %p274
    %p276 = scmp.ne.s32.totalorder %s268, %s271
    %p277 = scmp.eq.s32.totalorder %s17, 0
    %p278 = por %p276, %p277
    %p279 = scmp.ne.s32.totalorder %s268, %s271
    %p280 = scmp.eq.s32.totalorder %s22, 1
    %p281 = por %p279, %p280
    %p282 = scmp.ne.s32.totalorder %s271, %s272
    %p283 = scmp.eq.s32.totalorder %s22, 0
    %p284 = por %p282, %p283
    %p285 = scmp.ne.s32.totalorder %s271, %s272
    %p286 = scmp.eq.s32.totalorder %s23, 1
    %p287 = por %p285, %p286
    %p289 = scmp.ne.s32.totalorder %s272, %s288
    %p290 = scmp.eq.s32.totalorder %s23, 0
    %p291 = por %p289, %p290
    %p292 = scmp.le.s32.totalorder 1, %s17
    %p293 = scmp.lt.s32.totalorder %s17, 3
    %p294 = pnand %p292, %p293
    %p295 = pneg %p294
    // Predicated region
    $region9: #{moe_mamba_forward.13} parent=5 // pred_check
      _
    $region10: #{moe_mamba_forward.13} parent=5 // pred_check_branch
      %297 = sbr.rel (%p294) target = $region12
    $region11: #{moe_mamba_forward.13} parent=5 // pred_region
      %s298 = ssub.s32 %s17, 1
      // Predicated region
      $region13: #{moe_mamba_forward.13} parent=11 // pred_check
        %p299 = pneg %p90
      $region14: #{moe_mamba_forward.13} parent=11 // pred_check_branch
        %301 = sbr.rel (%p299) target = $region16
      $region15: #{moe_mamba_forward.13} parent=11 // pred_region
        _
      $region16: #{moe_mamba_forward.13} parent=11 // pred_fallthru
        _
      // Predicated region
      $region17: #{moe_mamba_forward.13} parent=11 // pred_check
        %p302 = pneg %p111
      $region18: #{moe_mamba_forward.13} parent=11 // pred_check_branch
        %304 = sbr.rel (%p302) target = $region20
      $region19: #{moe_mamba_forward.13} parent=11 // pred_region
        _
      $region20: #{moe_mamba_forward.13} parent=11 // pred_fallthru
        _
      // Predicated region
      $region21: #{moe_mamba_forward.13} parent=11 // pred_check
        %p305 = pneg %p132
      $region22: #{moe_mamba_forward.13} parent=11 // pred_check_branch
        %307 = sbr.rel (%p305) target = $region24
      $region23: #{moe_mamba_forward.13} parent=11 // pred_region
        _
      $region24: #{moe_mamba_forward.13} parent=11 // pred_fallthru
        _
      // Predicated region
      $region25: #{moe_mamba_forward.13} parent=11 // pred_check
        %p308 = pneg %p153
      $region26: #{moe_mamba_forward.13} parent=11 // pred_check_branch
        %310 = sbr.rel (%p308) target = $region28
      $region27: #{moe_mamba_forward.13} parent=11 // pred_region
        _
      $region28: #{moe_mamba_forward.13} parent=11 // pred_fallthru
        _
      // Predicated region
      $region29: #{moe_mamba_forward.13} parent=11 // pred_check
        %p311 = pneg %p174
      $region30: #{moe_mamba_forward.13} parent=11 // pred_check_branch
        %313 = sbr.rel (%p311) target = $region32
      $region31: #{moe_mamba_forward.13} parent=11 // pred_region
        _
      $region32: #{moe_mamba_forward.13} parent=11 // pred_fallthru
        _
      // Predicated region
      $region33: #{moe_mamba_forward.13} parent=11 // pred_check
        %p314 = pneg %p195
      $region34: #{moe_mamba_forward.13} parent=11 // pred_check_branch
        %316 = sbr.rel (%p314) target = $region36
      $region35: #{moe_mamba_forward.13} parent=11 // pred_region
        _
      $region36: #{moe_mamba_forward.13} parent=11 // pred_fallthru
        _
      // Predicated region
      $region37: #{moe_mamba_forward.13} parent=11 // pred_check
        %p317 = pneg %p216
      $region38: #{moe_mamba_forward.13} parent=11 // pred_check_branch
        %319 = sbr.rel (%p317) target = $region40
      $region39: #{moe_mamba_forward.13} parent=11 // pred_region
        _
      $region40: #{moe_mamba_forward.13} parent=11 // pred_fallthru
        _
      // Predicated region
      $region41: #{moe_mamba_forward.13} parent=11 // pred_check
        %p320 = pneg %p237
      $region42: #{moe_mamba_forward.13} parent=11 // pred_check_branch
        %322 = sbr.rel (%p320) target = $region44
      $region43: #{moe_mamba_forward.13} parent=11 // pred_region
        _
      $region44: #{moe_mamba_forward.13} parent=11 // pred_fallthru
        _
      // Predicated region
      $region45: #{moe_mamba_forward.13} parent=11 // pred_check
        %p323 = pneg %p258
      $region46: #{moe_mamba_forward.13} parent=11 // pred_check_branch
        %325 = sbr.rel (%p323) target = $region48
      $region47: #{moe_mamba_forward.13} parent=11 // pred_region
        _
      $region48: #{moe_mamba_forward.13} parent=11 // pred_fallthru
        _
    $region12: #{moe_mamba_forward.13} parent=5 // pred_fallthru
      _
    %p326 = scmp.lt.s32.totalorder %s17, 2
    // Predicated region
    $region49: #{moe_mamba_forward.13} parent=5 // pred_check
      %p327 = pneg %p326
    $region50: #{moe_mamba_forward.13} parent=5 // pred_check_branch
      %329 = sbr.rel (%p327) target = $region52
    $region51: #{moe_mamba_forward.13} parent=5 // pred_region
      // Predicated region
      $region53: #{moe_mamba_forward.13} parent=51 // pred_check
        %p330 = pneg %p37
      $region54: #{moe_mamba_forward.13} parent=51 // pred_check_branch
        %332 = sbr.rel (%p330) target = $region56
      $region55: #{moe_mamba_forward.13} parent=51 // pred_region
        %p333 = scmp.lt.s32.totalorder %s17, 1
        %s334 = scalar_select %p333, %s17, 1
        %s335 = smul.addr %s334, 4
        %s336 = scalar_lea.vmem %s0, %s335
      $region56: #{moe_mamba_forward.13} parent=51 // pred_fallthru
        _
      // Predicated region
      $region57: #{moe_mamba_forward.13} parent=51 // pred_check
        %p337 = pneg %p63
      $region58: #{moe_mamba_forward.13} parent=51 // pred_check_branch
        %339 = sbr.rel (%p337) target = $region60
      $region59: #{moe_mamba_forward.13} parent=51 // pred_region
        %p340 = scmp.lt.s32.totalorder %s17, 1
        %s341 = scalar_select %p340, %s17, 1
        %s342 = smul.addr %s341, 4
        %s343 = scalar_lea.vmem %s1, %s342
      $region60: #{moe_mamba_forward.13} parent=51 // pred_fallthru
        _
    $region52: #{moe_mamba_forward.13} parent=5 // pred_fallthru
      _
    %p344 = scmp.le.s32.totalorder 1, %s17
    %p345 = scmp.lt.s32.totalorder %s17, 3
    %p346 = pnand %p344, %p345
    %p347 = pneg %p346
    // Predicated region
    $region61: #{moe_mamba_forward.13} parent=5 // pred_check
      _
    $region62: #{moe_mamba_forward.13} parent=5 // pred_check_branch
      %349 = sbr.rel (%p346) target = $region64
    $region63: #{moe_mamba_forward.13} parent=5 // pred_region
      %s350 = ssub.s32 %s17, 1
      %p351 = scmp.lt.s32.totalorder %s22, 1
      %s352 = scalar_select %p351, %s22, 1
      %s353 = smul.addr %s352, 4
      %s354 = scalar_lea.vmem %s0, %s353
      %p355 = pneg %p43
      %p356 = pneg %p40
      %p357 = scmp.lt.s32.totalorder %s22, 1
      %s358 = scalar_select %p357, %s22, 1
      %s359 = smul.addr %s358, 4
      %s360 = scalar_lea.vmem %s1, %s359
      %p361 = pneg %p69
      %p362 = pneg %p66
      %p363 = pneg %p90
      %p364 = pneg %p87
      %p365 = pneg %p111
      %p366 = pneg %p108
      %p367 = pneg %p132
      %p368 = pneg %p129
      %p369 = pneg %p153
      %p370 = pneg %p150
      %p371 = pneg %p174
      %p372 = pneg %p171
      %p373 = pneg %p195
      %p374 = pneg %p192
      %p375 = pneg %p216
      %p376 = pneg %p213
      %p377 = pneg %p237
      %p378 = pneg %p234
      %p379 = pneg %p258
      %p380 = pneg %p255
      %p381 = pneg %p284
      %p382 = pneg %p281
      %p383 = scmp.lt.s32.totalorder %s22, 1
      %s384 = scalar_select %p383, %s22, 1
      %s385 = smul.addr %s384, 4
      %s386 = scalar_lea.vmem %s11, %s385
      %p387 = scmp.lt.s32.totalorder %s22, 1
      %s388 = scalar_select %p387, %s22, 1
      %s389 = smul.addr %s388, 4
      %s390 = scalar_lea.vmem %s0, %s389
      %p391 = scmp.lt.s32.totalorder %s22, 1
      %s392 = scalar_select %p391, %s22, 1
      %s393 = smul.addr %s392, 4
      %s394 = scalar_lea.vmem %s1, %s393
      %p395 = scmp.lt.s32.totalorder %s22, 1
      %s396 = scalar_select %p395, %s22, 1
      %s397 = smul.addr %s396, 4
      %s398 = scalar_lea.vmem %s11, %s397
      %v400 = vld [vmem:[%s390] sm:$0xf]
      %v401 = vunpack.c.l.bf16 %v400
      %v402 = vlaneseq
      %v403 = vshrl.u32 %v402, 7
      %vm404 = vcmp.ge.s32.totalorder %v403, 0
      %v405 = vsel %vm404, 1, 0
      %vm406 = vcmp.eq.s32.totalorder %v405, 1
      %v407 = vsel %vm406, %v401, 0.0
      %v408 = vld [vmem:[%s2 + $0x3] sm:$0x1]
      %v409 = vlaneseq
      %v410 = vshrl.u32 %v409, 7
      %v411 = vsub.s32 0, %v410
      %v412 = vrot.slane %v408, %v411
      %v413 = vmul.f32 %v407, %v412
      %v414 = vadd.f32 %v413, 0.0
      %v415 = vrot.slane %v401, 7
      %vm416 = vcmp.ge.s32.totalorder %v403, 1
      %v417 = vsel %vm416, 1, 0
      %vm418 = vcmp.eq.s32.totalorder %v417, 1
      %v419 = vsel %vm418, %v415, 0.0
      %v420 = vld [vmem:[%s2 + $0x2] sm:$0x1]
      %v421 = vlaneseq
      %v422 = vshrl.u32 %v421, 7
      %v423 = vsub.s32 0, %v422
      %v424 = vrot.slane %v420, %v423
      %v425 = vmul.f32 %v419, %v424
      %v426 = vadd.f32 %v414, %v425
      %v427 = vrot.slane %v401, 6
      %vm428 = vcmp.ge.s32.totalorder %v403, 2
      %v429 = vsel %vm428, 1, 0
      %vm430 = vcmp.eq.s32.totalorder %v429, 1
      %v431 = vsel %vm430, %v427, 0.0
      %v432 = vld [vmem:[%s2 + $0x1] sm:$0x1]
      %v433 = vlaneseq
      %v434 = vshrl.u32 %v433, 7
      %v435 = vsub.s32 0, %v434
      %v436 = vrot.slane %v432, %v435
      %v437 = vmul.f32 %v431, %v436
      %v438 = vadd.f32 %v426, %v437
      %v439 = vrot.slane %v401, 5
      %vm440 = vcmp.ge.s32.totalorder %v403, 3
      %v441 = vsel %vm440, 1, 0
      %vm442 = vcmp.eq.s32.totalorder %v441, 1
      %v443 = vsel %vm442, %v439, 0.0
      %v444 = vld [vmem:[%s2] sm:$0x1]
      %v445 = vlaneseq
      %v446 = vshrl.u32 %v445, 7
      %v447 = vsub.s32 0, %v446
      %v448 = vrot.slane %v444, %v447
      %v449 = vmul.f32 %v443, %v448
      %v450 = vadd.f32 %v438, %v449
      %v451 = vld [vmem:[%s3] sm:$0x1]
      %v453 = vlaneseq
      %v454 = vshrl.u32 %v453, 7
      %v455 = vsub.s32 0, %v454
      %v456 = vrot.slane %v451, %v455
      %v458 = vadd.f32 %v450, %v456
      %v459 = vxor.u32 %v458, 2147483648
      %v460 = vmul.f32 %v459, 1.442695
      %v461 = vpow.pop %v460
      %v462 = vadd.f32 %v461, 1.0
      %v463 = vrcp.pop %v462
      %v464 = vmul.f32 1.0, %v463
      %v465 = vmul.f32 %v458, %v464
      %vm466 = vcmask 523264
      %467 = vst.msk [vmem:[#allocation2] sm:$0xff] %vm466, %v465
      %v468 = vpack.c.bf16 %v465, %v465
      %v469 = vld [vmem:[%s4] sm:$0xf]
      %v470 = vld [vmem:[%s4 + $0x4] sm:$0xf]
      %v471 = vld [vmem:[%s4 + $0x8] sm:$0xf]
      %v472 = vld [vmem:[%s4 + $0xc] sm:$0xf]
      %v473 = vld [vmem:[%s4 + $0x10] sm:$0xf]
      %v474 = vld [vmem:[%s4 + $0x14] sm:$0xf]
      %v475 = vld [vmem:[%s4 + $0x18] sm:$0xf]
      %v476 = vld [vmem:[%s4 + $0x1c] sm:$0xf]
      %v485 = vunpack.c.l.b16 %v469
      %v486 = vunpack.c.l.b16 %v470
      %v487 = vunpack.c.l.b16 %v471
      %v488 = vunpack.c.l.b16 %v472
      %v489 = vunpack.c.l.b16 %v473
      %v490 = vunpack.c.l.b16 %v474
      %v491 = vunpack.c.l.b16 %v475
      %v492 = vunpack.c.l.b16 %v476
      %v493 = vpack.c.b16 %v486, %v485
      %v494 = vpack.c.b16 %v488, %v487
      %v495 = vpack.c.b16 %v490, %v489
      %v496 = vpack.c.b16 %v492, %v491
      %v502 = vsel %vm466, %v468, 0
      %504 = vmatprep.subr.bf16.mxu0 0
      %505 = vmatpush1.bf16.msra.mxu0 %v493
      %506 = vmatprep.subr.bf16.mxu0 0
      %507 = vmatpush1.bf16.msra.mxu0 %v494
      %508 = vmatprep.subr.bf16.mxu0 0
      %509 = vmatpush1.bf16.msra.mxu0 %v495
      %510 = vmatprep.subr.bf16.mxu0 0
      %511 = vmatpush1.bf16.msra.mxu0 %v496
      %512 = vmatprep.subr.bf16.mxu0 0
      %513 = vmatpush1.bf16.msra.mxu0 0
      %514 = vmatprep.subr.bf16.mxu0 0
      %515 = vmatpush1.bf16.msra.mxu0 0
      %516 = vmatprep.subr.bf16.mxu0 0
      %517 = vmatpush1.bf16.msra.mxu0 0
      %518 = vmatprep.subr.bf16.mxu0 0
      %519 = vmatpush1.bf16.msra.mxu0 0
      %520 = vmatprep.subr.bf16.mxu0 0
      %521 = vmatpush1.bf16.msra.mxu0 0
      %522 = vmatprep.subr.bf16.mxu0 0
      %523 = vmatpush1.bf16.msra.mxu0 0
      %524 = vmatprep.subr.bf16.mxu0 0
      %525 = vmatpush1.bf16.msra.mxu0 0
      %526 = vmatprep.subr.bf16.mxu0 0
      %527 = vmatpush1.bf16.msra.mxu0 0
      %528 = vmatprep.subr.bf16.mxu0 0
      %529 = vmatpush1.bf16.msra.mxu0 0
      %530 = vmatprep.subr.bf16.mxu0 0
      %531 = vmatpush1.bf16.msra.mxu0 0
      %532 = vmatprep.subr.bf16.mxu0 0
      %533 = vmatpush1.bf16.msra.mxu0 0
      %534 = vmatprep.subr.bf16.mxu0 0
      %535 = vmatpush1.bf16.msra.mxu0 0
      %536 = vmatprep.mubr.bf16.mxu0 0
      %537 = vmatmul.mubr.bf16.gmra.mrb[0].mxu0 %v502
      %v538 = vpop.f32.mrb[0].mxu0
      %v539 = vadd.f32 0.0, %v538
      %v540 = vpop.f32.mrb[0].mxu0
      %v541 = vpop.f32.mrb[0].mxu0
      %v542 = vpop.f32.mrb[0].mxu0
      %543 = vdwg.mxu0
      %v544 = vld [vmem:[%s5] sm:$0xf]
      %v545 = vld [vmem:[%s5 + $0x4] sm:$0xf]
      %v546 = vld [vmem:[%s5 + $0x8] sm:$0xf]
      %v547 = vld [vmem:[%s5 + $0xc] sm:$0xf]
      %v548 = vld [vmem:[%s5 + $0x10] sm:$0xf]
      %v549 = vld [vmem:[%s5 + $0x14] sm:$0xf]
      %v550 = vld [vmem:[%s5 + $0x18] sm:$0xf]
      %v551 = vld [vmem:[%s5 + $0x1c] sm:$0xf]
      %v560 = vunpack.c.l.b16 %v544
      %v561 = vunpack.c.l.b16 %v545
      %v562 = vunpack.c.l.b16 %v546
      %v563 = vunpack.c.l.b16 %v547
      %v564 = vunpack.c.l.b16 %v548
      %v565 = vunpack.c.l.b16 %v549
      %v566 = vunpack.c.l.b16 %v550
      %v567 = vunpack.c.l.b16 %v551
      %v568 = vpack.c.b16 %v561, %v560
      %v569 = vpack.c.b16 %v563, %v562
      %v570 = vpack.c.b16 %v565, %v564
      %v571 = vpack.c.b16 %v567, %v566
      %576 = vmatprep.subr.bf16.mxu0 0
      %577 = vmatpush1.bf16.msra.mxu0 %v568
      %578 = vmatprep.subr.bf16.mxu0 0
      %579 = vmatpush1.bf16.msra.mxu0 %v569
      %580 = vmatprep.subr.bf16.mxu0 0
      %581 = vmatpush1.bf16.msra.mxu0 %v570
      %582 = vmatprep.subr.bf16.mxu0 0
      %583 = vmatpush1.bf16.msra.mxu0 %v571
      %584 = vmatprep.subr.bf16.mxu0 0
      %585 = vmatpush1.bf16.msra.mxu0 0
      %586 = vmatprep.subr.bf16.mxu0 0
      %587 = vmatpush1.bf16.msra.mxu0 0
      %588 = vmatprep.subr.bf16.mxu0 0
      %589 = vmatpush1.bf16.msra.mxu0 0
      %590 = vmatprep.subr.bf16.mxu0 0
      %591 = vmatpush1.bf16.msra.mxu0 0
      %592 = vmatprep.subr.bf16.mxu0 0
      %593 = vmatpush1.bf16.msra.mxu0 0
      %594 = vmatprep.subr.bf16.mxu0 0
      %595 = vmatpush1.bf16.msra.mxu0 0
      %596 = vmatprep.subr.bf16.mxu0 0
      %597 = vmatpush1.bf16.msra.mxu0 0
      %598 = vmatprep.subr.bf16.mxu0 0
      %599 = vmatpush1.bf16.msra.mxu0 0
      %600 = vmatprep.subr.bf16.mxu0 0
      %601 = vmatpush1.bf16.msra.mxu0 0
      %602 = vmatprep.subr.bf16.mxu0 0
      %603 = vmatpush1.bf16.msra.mxu0 0
      %604 = vmatprep.subr.bf16.mxu0 0
      %605 = vmatpush1.bf16.msra.mxu0 0
      %606 = vmatprep.subr.bf16.mxu0 0
      %607 = vmatpush1.bf16.msra.mxu0 0
      %608 = vmatprep.mubr.bf16.mxu0 0
      %609 = vmatmul.mubr.bf16.gmra.mrb[0].mxu0 %v502
      %v610 = vpop.f32.mrb[0].mxu0
      %v611 = vadd.f32 0.0, %v610
      %v612 = vpop.f32.mrb[0].mxu0
      %v613 = vpop.f32.mrb[0].mxu0
      %v614 = vpop.f32.mrb[0].mxu0
      %615 = vdwg.mxu0
      %vm616 = vcmask 64512
      %617 = vst.msk [vmem:[#allocation5] sm:$0xff] %vm616, %v611
      %v618 = vld [vmem:[%s6] sm:$0xf]
      %v619 = vld [vmem:[%s6 + $0x4] sm:$0xf]
      %v620 = vld [vmem:[%s6 + $0x8] sm:$0xf]
      %v621 = vld [vmem:[%s6 + $0xc] sm:$0xf]
      %v622 = vld [vmem:[%s6 + $0x10] sm:$0xf]
      %v623 = vld [vmem:[%s6 + $0x14] sm:$0xf]
      %v624 = vld [vmem:[%s6 + $0x18] sm:$0xf]
      %v625 = vld [vmem:[%s6 + $0x1c] sm:$0xf]
      %v634 = vunpack.c.l.b16 %v618
      %v635 = vunpack.c.l.b16 %v619
      %v636 = vunpack.c.l.b16 %v620
      %v637 = vunpack.c.l.b16 %v621
      %v638 = vunpack.c.l.b16 %v622
      %v639 = vunpack.c.l.b16 %v623
      %v640 = vunpack.c.l.b16 %v624
      %v641 = vunpack.c.l.b16 %v625
      %v642 = vpack.c.b16 %v635, %v634
      %v643 = vpack.c.b16 %v637, %v636
      %v644 = vpack.c.b16 %v639, %v638
      %v645 = vpack.c.b16 %v641, %v640
      %650 = vmatprep.subr.bf16.mxu0 0
      %651 = vmatpush1.bf16.msra.mxu0 %v642
      %652 = vmatprep.subr.bf16.mxu0 0
      %653 = vmatpush1.bf16.msra.mxu0 %v643
      %654 = vmatprep.subr.bf16.mxu0 0
      %655 = vmatpush1.bf16.msra.mxu0 %v644
      %656 = vmatprep.subr.bf16.mxu0 0
      %657 = vmatpush1.bf16.msra.mxu0 %v645
      %658 = vmatprep.subr.bf16.mxu0 0
      %659 = vmatpush1.bf16.msra.mxu0 0
      %660 = vmatprep.subr.bf16.mxu0 0
      %661 = vmatpush1.bf16.msra.mxu0 0
      %662 = vmatprep.subr.bf16.mxu0 0
      %663 = vmatpush1.bf16.msra.mxu0 0
      %664 = vmatprep.subr.bf16.mxu0 0
      %665 = vmatpush1.bf16.msra.mxu0 0
      %666 = vmatprep.subr.bf16.mxu0 0
      %667 = vmatpush1.bf16.msra.mxu0 0
      %668 = vmatprep.subr.bf16.mxu0 0
      %669 = vmatpush1.bf16.msra.mxu0 0
      %670 = vmatprep.subr.bf16.mxu0 0
      %671 = vmatpush1.bf16.msra.mxu0 0
      %672 = vmatprep.subr.bf16.mxu0 0
      %673 = vmatpush1.bf16.msra.mxu0 0
      %674 = vmatprep.subr.bf16.mxu0 0
      %675 = vmatpush1.bf16.msra.mxu0 0
      %676 = vmatprep.subr.bf16.mxu0 0
      %677 = vmatpush1.bf16.msra.mxu0 0
      %678 = vmatprep.subr.bf16.mxu0 0
      %679 = vmatpush1.bf16.msra.mxu0 0
      %680 = vmatprep.subr.bf16.mxu0 0
      %681 = vmatpush1.bf16.msra.mxu0 0
      %682 = vmatprep.mubr.bf16.mxu0 0
      %683 = vmatmul.mubr.bf16.gmra.mrb[0].mxu0 %v502
      %v684 = vpop.f32.mrb[0].mxu0
      %v685 = vadd.f32 0.0, %v684
      %v686 = vpop.f32.mrb[0].mxu0
      %v687 = vpop.f32.mrb[0].mxu0
      %v688 = vpop.f32.mrb[0].mxu0
      %689 = vdwg.mxu0
      %690 = vst.msk [vmem:[#allocation6] sm:$0xff] %vm616, %v685
      %v691 = vpack.c.bf16 %v539, %v539
      %v692 = vld [vmem:[%s7] sm:$0x1]
      %v693 = vld [vmem:[%s8] sm:$0x1]
      %v695 = vlaneseq
      %v696 = vshrl.u32 %v695, 7
      %v697 = vsub.s32 0, %v696
      %v698 = vrot.slane %v693, %v697
      %vm700 = vcmask 15360
      %v702 = vsel %vm700, %v691, 0
      %vm704 = vcmask 1040384
      %v706 = vsel %vm704, %v692, 0
      %708 = vmatprep.subr.bf16.mxu0 0
      %709 = vmatpush1.bf16.msra.mxu0 %v706
      %710 = vmatprep.subr.bf16.mxu0 0
      %711 = vmatpush1.bf16.msra.mxu0 0
      %712 = vmatprep.subr.bf16.mxu0 0
      %713 = vmatpush1.bf16.msra.mxu0 0
      %714 = vmatprep.subr.bf16.mxu0 0
      %715 = vmatpush1.bf16.msra.mxu0 0
      %716 = vmatprep.subr.bf16.mxu0 0
      %717 = vmatpush1.bf16.msra.mxu0 0
      %718 = vmatprep.subr.bf16.mxu0 0
      %719 = vmatpush1.bf16.msra.mxu0 0
      %720 = vmatprep.subr.bf16.mxu0 0
      %721 = vmatpush1.bf16.msra.mxu0 0
      %722 = vmatprep.subr.bf16.mxu0 0
      %723 = vmatpush1.bf16.msra.mxu0 0
      %724 = vmatprep.subr.bf16.mxu0 0
      %725 = vmatpush1.bf16.msra.mxu0 0
      %726 = vmatprep.subr.bf16.mxu0 0
      %727 = vmatpush1.bf16.msra.mxu0 0
      %728 = vmatprep.subr.bf16.mxu0 0
      %729 = vmatpush1.bf16.msra.mxu0 0
      %730 = vmatprep.subr.bf16.mxu0 0
      %731 = vmatpush1.bf16.msra.mxu0 0
      %732 = vmatprep.subr.bf16.mxu0 0
      %733 = vmatpush1.bf16.msra.mxu0 0
      %734 = vmatprep.subr.bf16.mxu0 0
      %735 = vmatpush1.bf16.msra.mxu0 0
      %736 = vmatprep.subr.bf16.mxu0 0
      %737 = vmatpush1.bf16.msra.mxu0 0
      %738 = vmatprep.subr.bf16.mxu0 0
      %739 = vmatpush1.bf16.msra.mxu0 0
      %740 = vmatprep.mubr.bf16.mxu0 0
      %741 = vmatmul.mubr.bf16.gmra.mrb[0].mxu0 %v702
      %v742 = vpop.f32.mrb[0].mxu0
      %v743 = vadd.f32 %v698, %v742
      %v744 = vpop.f32.mrb[0].mxu0
      %v745 = vpop.f32.mrb[0].mxu0
      %v746 = vpop.f32.mrb[0].mxu0
      %747 = vdwg.mxu0
      %v748 = vmin.f32 %v743, 20.0
      %v749 = vmul.f32 %v748, 1.442695
      %v750 = vpow.pop %v749
      %vm751 = vcmp.gt.f32.partialorder %v743, 20.0
      %vm752 = vcmp.lt.f32.partialorder %v743, -20.0
      %v753 = vadd.f32 %v750, 1.0
      %v754 = vlog2.pop %v753
      %v755 = vmul.f32 %v754, 0.6931472
      %v756 = vsel %vm752, %v750, %v755
      %v757 = vsel %vm751, %v743, %v756
      %758 = vst.msk [vmem:[#allocation3] sm:$0xff] %vm466, %v757
      %v759 = vmul.f32 %v757, %v465
      %760 = vst.msk [vmem:[#allocation4] sm:$0xff] %vm466, %v759
      %v761 = vld [vmem:[%s9] sm:$0xff]
      %v762 = vld [vmem:[%s10] sm:$0x1]
      %v763 = vld [vmem:[#allocation3] sm:$0xff]
      %v764 = vld [vmem:[#allocation4] sm:$0xff]
      %v765 = vld [vmem:[#allocation5] sm:$0xff]
      %v766 = vld [vmem:[#allocation6] sm:$0xff]
      %v767 = vld [vmem:[#allocation2] sm:$0xff]
      %v768 = vld [vmem:[%s394] sm:$0xf]
      %v769 = vunpack.c.l.bf16 %v768
      %v771 = vcombine.high %v763, %v763
      %v773 = vunpack.c.l.s4 1966171168
      %v774 = vunpack.c.0.s8 %v773
      %v775 = vlaneseq
      %v776 = vshrl.u32 %v775, 7
      %v777 = vsub.s32 %v774, %v776
      %v778 = vrot.slane %v763, %v777
      %v780 = vunpack.c.l.s4 1966171168
      %v781 = vunpack.c.0.s8 %v780
      %v782 = vlaneseq
      %v783 = vshrl.u32 %v782, 7
      %v784 = vsub.s32 %v781, %v783
      %v785 = vrot.slane %v771, %v784
      %v786 = vcombine.high %v778, %v778
      %v787 = vcombine.high %v785, %v785
      %v789 = vunpack.c.l.s4 1966171168
      %v790 = vunpack.c.0.s8 %v789
      %v791 = vlaneseq
      %v792 = vshrl.u32 %v791, 7
      %v793 = vsub.s32 %v790, %v792
      %v794 = vrot.slane %v778, %v793
      %v796 = vunpack.c.l.s4 1966171168
      %v797 = vunpack.c.0.s8 %v796
      %v798 = vlaneseq
      %v799 = vshrl.u32 %v798, 7
      %v800 = vsub.s32 %v797, %v799
      %v801 = vrot.slane %v785, %v800
      %v803 = vunpack.c.l.s4 1966171168
      %v804 = vunpack.c.0.s8 %v803
      %v805 = vlaneseq
      %v806 = vshrl.u32 %v805, 7
      %v807 = vsub.s32 %v804, %v806
      %v808 = vrot.slane %v786, %v807
      %v810 = vunpack.c.l.s4 1966171168
      %v811 = vunpack.c.0.s8 %v810
      %v812 = vlaneseq
      %v813 = vshrl.u32 %v812, 7
      %v814 = vsub.s32 %v811, %v813
      %v815 = vrot.slane %v787, %v814
      %v816 = vcombine.high %v794, %v794
      %v817 = vcombine.high %v801, %v801
      %v818 = vcombine.high %v808, %v808
      %v819 = vcombine.high %v815, %v815
      %v820 = vlaneseq
      %v821 = vshrl.u32 %v820, 7
      %v822 = vsub.s32 0, %v821
      %v823 = vrot.slane %v794, %v822
      %v824 = vlaneseq
      %v825 = vshrl.u32 %v824, 7
      %v826 = vsub.s32 0, %v825
      %v827 = vrot.slane %v808, %v826
      %v828 = vlaneseq
      %v829 = vshrl.u32 %v828, 7
      %v830 = vsub.s32 0, %v829
      %v831 = vrot.slane %v816, %v830
      %v832 = vlaneseq
      %v833 = vshrl.u32 %v832, 7
      %v834 = vsub.s32 0, %v833
      %v835 = vrot.slane %v818, %v834
      %v836 = vlaneseq
      %v837 = vshrl.u32 %v836, 7
      %v838 = vsub.s32 0, %v837
      %v839 = vrot.slane %v801, %v838
      %v840 = vlaneseq
      %v841 = vshrl.u32 %v840, 7
      %v842 = vsub.s32 0, %v841
      %v843 = vrot.slane %v815, %v842
      %v844 = vlaneseq
      %v845 = vshrl.u32 %v844, 7
      %v846 = vsub.s32 0, %v845
      %v847 = vrot.slane %v817, %v846
      %v848 = vlaneseq
      %v849 = vshrl.u32 %v848, 7
      %v850 = vsub.s32 0, %v849
      %v851 = vrot.slane %v819, %v850
      %v860 = vmul.f32 %v823, %v761
      %v861 = vmul.f32 %v827, %v761
      %v862 = vmul.f32 %v831, %v761
      %v863 = vmul.f32 %v835, %v761
      %v864 = vmul.f32 %v839, %v761
      %v865 = vmul.f32 %v843, %v761
      %v866 = vmul.f32 %v847, %v761
      %v867 = vmul.f32 %v851, %v761
      %v868 = vmul.f32 %v860, 1.442695
      %v869 = vpow.pop %v868
      %v870 = vmul.f32 %v861, 1.442695
      %v871 = vpow.pop %v870
      %v872 = vmul.f32 %v862, 1.442695
      %v873 = vpow.pop %v872
      %v874 = vmul.f32 %v863, 1.442695
      %v875 = vpow.pop %v874
      %v876 = vmul.f32 %v864, 1.442695
      %v877 = vpow.pop %v876
      %v878 = vmul.f32 %v865, 1.442695
      %v879 = vpow.pop %v878
      %v880 = vmul.f32 %v866, 1.442695
      %v881 = vpow.pop %v880
      %v882 = vmul.f32 %v867, 1.442695
      %v883 = vpow.pop %v882
      %v884 = vlaneseq
      %v885 = vshrl.u32 %v884, 7
      %v886 = vsub.s32 0, %v885
      %v887 = vrot.slane %v765, %v886
      %889 = vbcast.lane.b32.xlu0 %v887, 256
      %v890 = vpop.permute.xlu0 %889
      %v891 = vlaneseq
      %v892 = vshrl.u32 %v891, 7
      %v893 = vsub.s32 1, %v892
      %v894 = vrot.slane %v765, %v893
      %896 = vbcast.lane.b32.xlu0 %v894, 256
      %v897 = vpop.permute.xlu0 %896
      %v898 = vlaneseq
      %v899 = vshrl.u32 %v898, 7
      %v900 = vsub.s32 2, %v899
      %v901 = vrot.slane %v765, %v900
      %903 = vbcast.lane.b32.xlu0 %v901, 256
      %v904 = vpop.permute.xlu0 %903
      %v905 = vlaneseq
      %v906 = vshrl.u32 %v905, 7
      %v907 = vsub.s32 3, %v906
      %v908 = vrot.slane %v765, %v907
      %910 = vbcast.lane.b32.xlu0 %v908, 256
      %v911 = vpop.permute.xlu0 %910
      %v912 = vlaneseq
      %v913 = vshrl.u32 %v912, 7
      %v914 = vsub.s32 4, %v913
      %v915 = vrot.slane %v765, %v914
      %917 = vbcast.lane.b32.xlu0 %v915, 256
      %v918 = vpop.permute.xlu0 %917
      %v919 = vlaneseq
      %v920 = vshrl.u32 %v919, 7
      %v921 = vsub.s32 5, %v920
      %v922 = vrot.slane %v765, %v921
      %924 = vbcast.lane.b32.xlu0 %v922, 256
      %v925 = vpop.permute.xlu0 %924
      %v926 = vlaneseq
      %v927 = vshrl.u32 %v926, 7
      %v928 = vsub.s32 6, %v927
      %v929 = vrot.slane %v765, %v928
      %931 = vbcast.lane.b32.xlu0 %v929, 256
      %v932 = vpop.permute.xlu0 %931
      %v933 = vlaneseq
      %v934 = vshrl.u32 %v933, 7
      %v935 = vsub.s32 7, %v934
      %v936 = vrot.slane %v765, %v935
      %938 = vbcast.lane.b32.xlu0 %v936, 256
      %v939 = vpop.permute.xlu0 %938
      %v941 = vcombine.high %v764, %v764
      %v943 = vunpack.c.l.s4 1966171168
      %v944 = vunpack.c.0.s8 %v943
      %v945 = vlaneseq
      %v946 = vshrl.u32 %v945, 7
      %v947 = vsub.s32 %v944, %v946
      %v948 = vrot.slane %v764, %v947
      %v950 = vunpack.c.l.s4 1966171168
      %v951 = vunpack.c.0.s8 %v950
      %v952 = vlaneseq
      %v953 = vshrl.u32 %v952, 7
      %v954 = vsub.s32 %v951, %v953
      %v955 = vrot.slane %v941, %v954
      %v956 = vcombine.high %v948, %v948
      %v957 = vcombine.high %v955, %v955
      %v959 = vunpack.c.l.s4 1966171168
      %v960 = vunpack.c.0.s8 %v959
      %v961 = vlaneseq
      %v962 = vshrl.u32 %v961, 7
      %v963 = vsub.s32 %v960, %v962
      %v964 = vrot.slane %v948, %v963
      %v966 = vunpack.c.l.s4 1966171168
      %v967 = vunpack.c.0.s8 %v966
      %v968 = vlaneseq
      %v969 = vshrl.u32 %v968, 7
      %v970 = vsub.s32 %v967, %v969
      %v971 = vrot.slane %v955, %v970
      %v973 = vunpack.c.l.s4 1966171168
      %v974 = vunpack.c.0.s8 %v973
      %v975 = vlaneseq
      %v976 = vshrl.u32 %v975, 7
      %v977 = vsub.s32 %v974, %v976
      %v978 = vrot.slane %v956, %v977
      %v980 = vunpack.c.l.s4 1966171168
      %v981 = vunpack.c.0.s8 %v980
      %v982 = vlaneseq
      %v983 = vshrl.u32 %v982, 7
      %v984 = vsub.s32 %v981, %v983
      %v985 = vrot.slane %v957, %v984
      %v986 = vcombine.high %v964, %v964
      %v987 = vcombine.high %v971, %v971
      %v988 = vcombine.high %v978, %v978
      %v989 = vcombine.high %v985, %v985
      %v990 = vlaneseq
      %v991 = vshrl.u32 %v990, 7
      %v992 = vsub.s32 0, %v991
      %v993 = vrot.slane %v964, %v992
      %v994 = vlaneseq
      %v995 = vshrl.u32 %v994, 7
      %v996 = vsub.s32 0, %v995
      %v997 = vrot.slane %v978, %v996
      %v998 = vlaneseq
      %v999 = vshrl.u32 %v998, 7
      %v1000 = vsub.s32 0, %v999
      %v1001 = vrot.slane %v986, %v1000
      %v1002 = vlaneseq
      %v1003 = vshrl.u32 %v1002, 7
      %v1004 = vsub.s32 0, %v1003
      %v1005 = vrot.slane %v988, %v1004
      %v1006 = vlaneseq
      %v1007 = vshrl.u32 %v1006, 7
      %v1008 = vsub.s32 0, %v1007
      %v1009 = vrot.slane %v971, %v1008
      %v1010 = vlaneseq
      %v1011 = vshrl.u32 %v1010, 7
      %v1012 = vsub.s32 0, %v1011
      %v1013 = vrot.slane %v985, %v1012
      %v1014 = vlaneseq
      %v1015 = vshrl.u32 %v1014, 7
      %v1016 = vsub.s32 0, %v1015
      %v1017 = vrot.slane %v987, %v1016
      %v1018 = vlaneseq
      %v1019 = vshrl.u32 %v1018, 7
      %v1020 = vsub.s32 0, %v1019
      %v1021 = vrot.slane %v989, %v1020
      %v1030 = vmul.f32 %v890, %v993
      %v1031 = vmul.f32 %v897, %v997
      %v1032 = vmul.f32 %v904, %v1001
      %v1033 = vmul.f32 %v911, %v1005
      %v1034 = vmul.f32 %v918, %v1009
      %v1035 = vmul.f32 %v925, %v1013
      %v1036 = vmul.f32 %v932, %v1017
      %v1037 = vmul.f32 %v939, %v1021
      %v1038 = vmul.f32 %v869, 0.0
      %v1039 = vadd.f32 %v1038, %v1030
      %v1040 = vmul.f32 %v871, %v1039
      %v1041 = vadd.f32 %v1040, %v1031
      %v1042 = vmul.f32 %v873, %v1041
      %v1043 = vadd.f32 %v1042, %v1032
      %v1044 = vmul.f32 %v875, %v1043
      %v1045 = vadd.f32 %v1044, %v1033
      %v1046 = vmul.f32 %v877, %v1045
      %v1047 = vadd.f32 %v1046, %v1034
      %v1048 = vmul.f32 %v879, %v1047
      %v1049 = vadd.f32 %v1048, %v1035
      %v1050 = vmul.f32 %v881, %v1049
      %v1051 = vadd.f32 %v1050, %v1036
      %v1052 = vmul.f32 %v883, %v1051
      %v1053 = vadd.f32 %v1052, %v1037
      %v1054 = vlaneseq
      %v1055 = vshrl.u32 %v1054, 7
      %v1056 = vsub.s32 0, %v1055
      %v1057 = vrot.slane %v766, %v1056
      %1059 = vbcast.lane.b32.xlu0 %v1057, 256
      %v1060 = vpop.permute.xlu0 %1059
      %v1061 = vlaneseq
      %v1062 = vshrl.u32 %v1061, 7
      %v1063 = vsub.s32 1, %v1062
      %v1064 = vrot.slane %v766, %v1063
      %1066 = vbcast.lane.b32.xlu0 %v1064, 256
      %v1067 = vpop.permute.xlu0 %1066
      %v1068 = vlaneseq
      %v1069 = vshrl.u32 %v1068, 7
      %v1070 = vsub.s32 2, %v1069
      %v1071 = vrot.slane %v766, %v1070
      %1073 = vbcast.lane.b32.xlu0 %v1071, 256
      %v1074 = vpop.permute.xlu0 %1073
      %v1075 = vlaneseq
      %v1076 = vshrl.u32 %v1075, 7
      %v1077 = vsub.s32 3, %v1076
      %v1078 = vrot.slane %v766, %v1077
      %1080 = vbcast.lane.b32.xlu0 %v1078, 256
      %v1081 = vpop.permute.xlu0 %1080
      %v1082 = vlaneseq
      %v1083 = vshrl.u32 %v1082, 7
      %v1084 = vsub.s32 4, %v1083
      %v1085 = vrot.slane %v766, %v1084
      %1087 = vbcast.lane.b32.xlu0 %v1085, 256
      %v1088 = vpop.permute.xlu0 %1087
      %v1089 = vlaneseq
      %v1090 = vshrl.u32 %v1089, 7
      %v1091 = vsub.s32 5, %v1090
      %v1092 = vrot.slane %v766, %v1091
      %1094 = vbcast.lane.b32.xlu0 %v1092, 256
      %v1095 = vpop.permute.xlu0 %1094
      %v1096 = vlaneseq
      %v1097 = vshrl.u32 %v1096, 7
      %v1098 = vsub.s32 6, %v1097
      %v1099 = vrot.slane %v766, %v1098
      %1101 = vbcast.lane.b32.xlu0 %v1099, 256
      %v1102 = vpop.permute.xlu0 %1101
      %v1103 = vlaneseq
      %v1104 = vshrl.u32 %v1103, 7
      %v1105 = vsub.s32 7, %v1104
      %v1106 = vrot.slane %v766, %v1105
      %1108 = vbcast.lane.b32.xlu0 %v1106, 256
      %v1109 = vpop.permute.xlu0 %1108
      %v1110 = vmul.f32 %v1060, %v1039
      %v1111 = vmul.f32 %v1067, %v1041
      %v1112 = vmul.f32 %v1074, %v1043
      %v1113 = vmul.f32 %v1081, %v1045
      %v1114 = vmul.f32 %v1088, %v1047
      %v1115 = vmul.f32 %v1095, %v1049
      %v1116 = vmul.f32 %v1102, %v1051
      %v1117 = vmul.f32 %v1109, %v1053
      %v1118 = vsel %vm466, %v1110, 0.0
      %v1119 = vrot.slane %v1118, 4
      %v1120 = vadd.f32 %v1118, %v1119
      %v1121 = vrot.slane %v1120, 2
      %v1122 = vadd.f32 %v1120, %v1121
      %v1123 = vrot.slane %v1122, 1
      %v1124 = vadd.f32 %v1122, %v1123
      %v1125 = vsel %vm466, %v1111, 0.0
      %v1126 = vrot.slane %v1125, 4
      %v1127 = vadd.f32 %v1125, %v1126
      %v1128 = vrot.slane %v1127, 2
      %v1129 = vadd.f32 %v1127, %v1128
      %v1130 = vrot.slane %v1129, 1
      %v1131 = vadd.f32 %v1129, %v1130
      %v1132 = vsel %vm466, %v1112, 0.0
      %v1133 = vrot.slane %v1132, 4
      %v1134 = vadd.f32 %v1132, %v1133
      %v1135 = vrot.slane %v1134, 2
      %v1136 = vadd.f32 %v1134, %v1135
      %v1137 = vrot.slane %v1136, 1
      %v1138 = vadd.f32 %v1136, %v1137
      %v1139 = vsel %vm466, %v1113, 0.0
      %v1140 = vrot.slane %v1139, 4
      %v1141 = vadd.f32 %v1139, %v1140
      %v1142 = vrot.slane %v1141, 2
      %v1143 = vadd.f32 %v1141, %v1142
      %v1144 = vrot.slane %v1143, 1
      %v1145 = vadd.f32 %v1143, %v1144
      %v1146 = vsel %vm466, %v1114, 0.0
      %v1147 = vrot.slane %v1146, 4
      %v1148 = vadd.f32 %v1146, %v1147
      %v1149 = vrot.slane %v1148, 2
      %v1150 = vadd.f32 %v1148, %v1149
      %v1151 = vrot.slane %v1150, 1
      %v1152 = vadd.f32 %v1150, %v1151
      %v1153 = vsel %vm466, %v1115, 0.0
      %v1154 = vrot.slane %v1153, 4
      %v1155 = vadd.f32 %v1153, %v1154
      %v1156 = vrot.slane %v1155, 2
      %v1157 = vadd.f32 %v1155, %v1156
      %v1158 = vrot.slane %v1157, 1
      %v1159 = vadd.f32 %v1157, %v1158
      %v1160 = vsel %vm466, %v1116, 0.0
      %v1161 = vrot.slane %v1160, 4
      %v1162 = vadd.f32 %v1160, %v1161
      %v1163 = vrot.slane %v1162, 2
      %v1164 = vadd.f32 %v1162, %v1163
      %v1165 = vrot.slane %v1164, 1
      %v1166 = vadd.f32 %v1164, %v1165
      %v1167 = vsel %vm466, %v1117, 0.0
      %v1168 = vrot.slane %v1167, 4
      %v1169 = vadd.f32 %v1167, %v1168
      %v1170 = vrot.slane %v1169, 2
      %v1171 = vadd.f32 %v1169, %v1170
      %v1172 = vrot.slane %v1171, 1
      %v1173 = vadd.f32 %v1171, %v1172
      %v1175 = vlaneseq
      %v1176 = vshrl.u32 %v1175, 7
      %v1177 = vsub.s32 0, %v1176
      %v1178 = vrot.slane %v762, %v1177
      %v1180 = vmul.f32 %v767, %v1178
      %v1182 = vrot.slane %v1180, 1
      %v1183 = vrot.slane %v1180, 2
      %v1184 = vrot.slane %v1180, 3
      %v1185 = vrot.slane %v1180, 4
      %v1186 = vrot.slane %v1180, 5
      %v1187 = vrot.slane %v1180, 6
      %v1188 = vrot.slane %v1180, 7
      %v1197 = vadd.f32 %v1124, %v1180
      %v1198 = vadd.f32 %v1131, %v1182
      %v1199 = vadd.f32 %v1138, %v1183
      %v1200 = vadd.f32 %v1145, %v1184
      %v1201 = vadd.f32 %v1152, %v1185
      %v1202 = vadd.f32 %v1159, %v1186
      %v1203 = vadd.f32 %v1166, %v1187
      %v1204 = vadd.f32 %v1173, %v1188
      %v1205 = vxor.u32 %v769, 2147483648
      %v1206 = vmul.f32 %v1205, 1.442695
      %v1207 = vpow.pop %v1206
      %v1208 = vadd.f32 %v1207, 1.0
      %v1209 = vrcp.pop %v1208
      %v1210 = vmul.f32 1.0, %v1209
      %v1211 = vmul.f32 %v769, %v1210
      %v1213 = vrot.slane %v1211, 1
      %v1214 = vrot.slane %v1211, 2
      %v1215 = vrot.slane %v1211, 3
      %v1216 = vrot.slane %v1211, 4
      %v1217 = vrot.slane %v1211, 5
      %v1218 = vrot.slane %v1211, 6
      %v1219 = vrot.slane %v1211, 7
      %v1228 = vmul.f32 %v1197, %v1211
      %v1229 = vmul.f32 %v1198, %v1213
      %v1230 = vmul.f32 %v1199, %v1214
      %v1231 = vmul.f32 %v1200, %v1215
      %v1232 = vmul.f32 %v1201, %v1216
      %v1233 = vmul.f32 %v1202, %v1217
      %v1234 = vmul.f32 %v1203, %v1218
      %v1235 = vmul.f32 %v1204, %v1219
      %v1236 = vpack.c.bf16 %v1228, %v1228
      %v1237 = vpack.c.bf16 %v1229, %v1229
      %v1238 = vpack.c.bf16 %v1230, %v1230
      %v1239 = vpack.c.bf16 %v1231, %v1231
      %v1240 = vpack.c.bf16 %v1232, %v1232
      %v1241 = vpack.c.bf16 %v1233, %v1233
      %v1242 = vpack.c.bf16 %v1234, %v1234
      %v1243 = vpack.c.bf16 %v1235, %v1235
      %v1252 = vunpack.c.l.b16 %v1236
      %v1253 = vunpack.c.l.b16 %v1237
      %v1254 = vunpack.c.l.b16 %v1238
      %v1255 = vunpack.c.l.b16 %v1239
      %v1256 = vunpack.c.l.b16 %v1240
      %v1257 = vunpack.c.l.b16 %v1241
      %v1258 = vunpack.c.l.b16 %v1242
      %v1259 = vunpack.c.l.b16 %v1243
      %v1260 = vpack.c.b16 %v1252, %v1252
      %v1261 = vpack.c.b16 %v1253, %v1253
      %v1262 = vpack.c.b16 %v1254, %v1254
      %v1263 = vpack.c.b16 %v1255, %v1255
      %v1264 = vpack.c.b16 %v1256, %v1256
      %v1265 = vpack.c.b16 %v1257, %v1257
      %v1266 = vpack.c.b16 %v1258, %v1258
      %v1267 = vpack.c.b16 %v1259, %v1259
      %v1268 = vunpack.c.l.b16 %v1260
      %v1269 = vunpack.c.l.b16 %v1261
      %v1270 = vunpack.c.l.b16 %v1262
      %v1271 = vunpack.c.l.b16 %v1263
      %v1272 = vunpack.c.l.b16 %v1264
      %v1273 = vunpack.c.l.b16 %v1265
      %v1274 = vunpack.c.l.b16 %v1266
      %v1275 = vunpack.c.l.b16 %v1267
      %v1276 = vrot.slane %v1269, 7
      %vm1277 = vcmask 1041409
      %v1278 = vsel %vm1277, %v1276, %v1268
      %v1279 = vrot.slane %v1270, 6
      %vm1280 = vcmask 1042434
      %v1281 = vsel %vm1280, %v1279, %v1278
      %v1282 = vrot.slane %v1271, 5
      %vm1283 = vcmask 1043459
      %v1284 = vsel %vm1283, %v1282, %v1281
      %v1285 = vrot.slane %v1272, 4
      %vm1286 = vcmask 1044484
      %v1287 = vsel %vm1286, %v1285, %v1284
      %v1288 = vrot.slane %v1273, 3
      %vm1289 = vcmask 1045509
      %v1290 = vsel %vm1289, %v1288, %v1287
      %v1291 = vrot.slane %v1274, 2
      %vm1292 = vcmask 1046534
      %v1293 = vsel %vm1292, %v1291, %v1290
      %v1294 = vrot.slane %v1275, 1
      %vm1295 = vcmask 1047559
      %v1296 = vsel %vm1295, %v1294, %v1293
      %v1297 = vpack.c.b16 %v1296, %v1296
      %vm1299 = vcmask 519168
      %1300 = vst.msk [vmem:[%s398] sm:$0xf] %vm1299, %v1297
      %p1301 = scmp.lt.s32.totalorder %s22, 1
      %s1302 = scalar_select %p1301, %s22, 1
      %s1303 = smul.addr %s1302, 4
      %s1304 = scalar_lea.vmem %s11, %s1303
      // Predicated region
      $region65: #{moe_mamba_forward.13} parent=63 // pred_check
        %p1305 = pneg %p281
      $region66: #{moe_mamba_forward.13} parent=63 // pred_check_branch
        %1307 = sbr.rel (%p1305) target = $region68
      $region67: #{moe_mamba_forward.13} parent=63 // pred_region
        _
      $region68: #{moe_mamba_forward.13} parent=63 // pred_fallthru
        _
    $region64: #{moe_mamba_forward.13} parent=5 // pred_fallthru
      _
    %p1308 = scmp.le.s32.totalorder 2, %s17
    // Predicated region
    $region69: #{moe_mamba_forward.13} parent=5 // pred_check
      %p1309 = pneg %p1308
    $region70: #{moe_mamba_forward.13} parent=5 // pred_check_branch
      %1311 = sbr.rel (%p1309) target = $region72
    $region71: #{moe_mamba_forward.13} parent=5 // pred_region
      %s1312 = ssub.s32 %s17, 2
      // Predicated region
      $region73: #{moe_mamba_forward.13} parent=71 // pred_check
        %p1313 = pneg %p287
      $region74: #{moe_mamba_forward.13} parent=71 // pred_check_branch
        %1315 = sbr.rel (%p1313) target = $region76
      $region75: #{moe_mamba_forward.13} parent=71 // pred_region
        %p1316 = scmp.lt.s32.totalorder %s23, 1
        %s1317 = scalar_select %p1316, %s23, 1
        %s1318 = smul.addr %s1317, 4
        %s1319 = scalar_lea.vmem %s11, %s1318
      $region76: #{moe_mamba_forward.13} parent=71 // pred_fallthru
        _
    $region72: #{moe_mamba_forward.13} parent=5 // pred_fallthru
      _
  $region6: #{moe_mamba_forward.13} parent=0 // loop_footer
    %s21 = sadd.s32 1, %s17
  $region7: #{moe_mamba_forward.13} parent=0 // loop_footer_branch
    %16 = sbr.rel target = $region3
  $region8: #{moe_mamba_forward.13} parent=0 // loop_exit
    _

// kernel: moe_mamba_forward.22
$region0: #{moe_mamba_forward.22}
  #allocation0 [shape = 'u32[]', space=smem, size = 0x4, offset = 0x4, fixed_abs, tag = 'smem constant byte address 0x4 - core index']
  #allocation1 [shape = 'u32[144,128]{1,0:T(1,128)}', space=vmem, size = 0x12000, scoped, tag = 'internal scratch']
  %s0 = inlined_call_operand.vmem [shape: bf16[16,32], index: 0, kind: input, shape index: {}]
  %s1 = inlined_call_operand.vmem [shape: f32[1,32], index: 1, kind: input, shape index: {}]
  %s2 = inlined_call_operand.vmem [shape: bf16[16,32], index: 2, kind: output, shape index: {}]
  %s3 = sld [smem:[#allocation0]]
  $region18: #{moe_mamba_forward.22} parent=0
    _
  %s5 = ssub.s32 1, %s3
  %s6 = scalar_select 0, %s5, %s3
  // Predicated region
  $region2: #{moe_mamba_forward.22} parent=0 // pred_check
    _
  $region3: #{moe_mamba_forward.22} parent=0 // pred_check_branch
    %8 = sbr.rel (0) target = $region5
  $region4: #{moe_mamba_forward.22} parent=0 // pred_region
    _
  $region5: #{moe_mamba_forward.22} parent=0 // pred_fallthru
    _
  // Predicated region
  $region6: #{moe_mamba_forward.22} parent=0 // pred_check
    _
  $region7: #{moe_mamba_forward.22} parent=0 // pred_check_branch
    %10 = sbr.rel (0) target = $region9
  $region8: #{moe_mamba_forward.22} parent=0 // pred_region
    _
  $region9: #{moe_mamba_forward.22} parent=0 // pred_fallthru
    _
  %v11 = vld [vmem:[%s0] sm:$0xf]
  %v12 = vld [vmem:[%s0 + $0x4] sm:$0xf]
  %v13 = vunpack.c.l.bf16 %v11
  %v14 = vunpack.c.l.bf16 %v12
  %v15 = vmul.f32 %v13, %v13
  %v16 = vmul.f32 %v14, %v14
  %vm17 = vcmask 261120
  %v18 = vsel %vm17, %v15, 0.0
  %19 = vadd.xlane.f32.xlu0 %v18
  %v20 = vpop.xlane.xlu0 %19
  %v21 = vsel %vm17, %v16, 0.0
  %22 = vadd.xlane.f32.xlu0 %v21
  %v23 = vpop.xlane.xlu0 %22
  %v24 = vmax.f32 %v20, 1e-24
  %v25 = vmax.f32 %v23, 1e-24
  %v26 = vrsqrt.pop %v24
  %v27 = vrsqrt.pop %v25
  %v28 = vmul.f32 %v13, %v26
  %v29 = vmul.f32 %v14, %v27
  %v30 = vmul.f32 %v28, 5.656854
  %v31 = vmul.f32 %v29, 5.656854
  %v32 = vld [vmem:[%s1] sm:$0x1]
  %v34 = vlaneseq
  %v35 = vshrl.u32 %v34, 7
  %v36 = vsub.s32 0, %v35
  %v37 = vrot.slane %v32, %v36
  %v39 = vmul.f32 %v30, %v37
  %v40 = vmul.f32 %v31, %v37
  %v41 = vpack.c.bf16 %v40, %v39
  %v43 = vunpack.c.l.b16 %v41
  %v44 = vunpack.c.h.b16 %v41
  %v45 = vpack.c.b16 %v43, %v43
  %v46 = vpack.c.b16 %v44, %v44
  %vm49 = vcmask 257024
  %50 = vst.msk [vmem:[%s2] sm:$0xf] %vm49, %v45
  %51 = vst.msk [vmem:[%s2 + $0x4] sm:$0xf] %vm49, %v46
  // Predicated region
  $region10: #{moe_mamba_forward.22} parent=0 // pred_check
    _
  $region11: #{moe_mamba_forward.22} parent=0 // pred_check_branch
    %53 = sbr.rel (0) target = $region13
  $region12: #{moe_mamba_forward.22} parent=0 // pred_region
    _
  $region13: #{moe_mamba_forward.22} parent=0 // pred_fallthru
    _
  // Predicated region
  $region14: #{moe_mamba_forward.22} parent=0 // pred_check
    _
  $region15: #{moe_mamba_forward.22} parent=0 // pred_check_branch
    %55 = sbr.rel (0) target = $region17
  $region16: #{moe_mamba_forward.22} parent=0 // pred_region
    _
  $region17: #{moe_mamba_forward.22} parent=0 // pred_fallthru
    _

// kernel: moe_mamba_forward.16
$region0: #{moe_mamba_forward.16}
  #allocation0 [shape = 'u32[]', space=smem, size = 0x4, offset = 0x4, fixed_abs, tag = 'smem constant byte address 0x4 - core index']
  #allocation1 [shape = 'u32[144,128]{1,0:T(1,128)}', space=vmem, size = 0x12000, scoped, tag = 'internal scratch']
  #allocation2 [shape = 'f32[16,32]{1,0:T(8,128)}', space=vmem, size = 0x2000, scoped, tag = 'scratch operand']
  %s0 = inlined_call_operand.vmem [shape: bf16[16,32], index: 0, kind: input, shape index: {}]
  %s1 = inlined_call_operand.vmem [shape: f32[4,16,1], index: 1, kind: input, shape index: {}]
  %s2 = inlined_call_operand.vmem [shape: bf16[4,32,128], index: 2, kind: input, shape index: {}]
  %s3 = inlined_call_operand.vmem [shape: f32[4,1,128], index: 3, kind: input, shape index: {}]
  %s4 = inlined_call_operand.vmem [shape: bf16[4,128,32], index: 4, kind: input, shape index: {}]
  %s5 = inlined_call_operand.vmem [shape: f32[4,1,32], index: 5, kind: input, shape index: {}]
  %s6 = inlined_call_operand.vmem [shape: bf16[16,32], index: 6, kind: output, shape index: {}]
  %s7 = sld [smem:[#allocation0]]
  $region65: #{moe_mamba_forward.16} parent=0
    _
  %s9 = ssub.s32 1, %s7
  %s10 = scalar_select 0, %s9, %s7
  loop: start=0, step=1, limit=6
  $region2: #{moe_mamba_forward.16} parent=0 // loop_pre_header
    _
  $region3: #{moe_mamba_forward.16} parent=0 // loop_header
    %s12 = sphi 0, %s16
    %p13 = scmp.ge.s32.totalorder %s12, 6
    %s19 = sphi 0, %s31
    %s20 = sphi 0, %s27
    %s21 = sphi 0, %s19
    %s22 = sphi 0, %s20
    %s23 = sphi 0, %s21
    %s24 = sphi 0, %s22
    %s34 = sphi 0, %s36
    %s37 = sphi 0, %s34
    %s38 = sphi 0, %s37
    %s54 = sphi 0, %s38
    %s62 = sphi 0, %s64
    %s65 = sphi 0, %s62
    %s66 = sphi 0, %s65
    %s82 = sphi 0, %s66
    %s88 = sphi 0, %s90
    %s91 = sphi 0, %s88
    %s92 = sphi 0, %s91
    %s108 = sphi 0, %s92
    %s114 = sphi 0, %s116
    %s117 = sphi 0, %s114
    %s118 = sphi 0, %s117
    %s134 = sphi 0, %s118
    %s140 = sphi 0, %s142
    %s143 = sphi 0, %s140
    %s144 = sphi 0, %s143
    %s160 = sphi 0, %s144
    %s166 = sphi 0, %s168
    %s169 = sphi 0, %s166
    %s170 = sphi 0, %s169
    %s186 = sphi 0, %s170
    %s192 = sphi 0, %s194
    %s195 = sphi 0, %s192
    %s196 = sphi 0, %s195
    %s212 = sphi 0, %s196
  $region4: #{moe_mamba_forward.16} parent=0 // loop_header_branch
    %15 = sbr.rel (%p13) target = $region8
  $region5: #{moe_mamba_forward.16} parent=0 // loop_body
    %s17 = ssub.s32 %s12, 1
    %s18 = ssub.s32 %s12, 2
    %s25 = sadd.s32 1, %s20
    %p26 = scmp.ge.s32.totalorder %s25, 4
    %s27 = scalar_select %p26, 0, %s25
    %s28 = sadd.s32 1, %s19
    %s29 = scalar_select %p26, %s28, %s19
    %p30 = scmp.ge.s32.totalorder %s29, 1
    %s31 = scalar_select %p30, 0, %s29
    %s32 = ssub.s32 %s19, %s31
    %p33 = scmp.eq.s32.totalorder %s32, 0
    %s35 = sadd.s32 %s34, 1
    %s36 = scalar_select %p33, %s34, %s35
    %p39 = pneg %p33
    %p40 = scmp.eq.s32.totalorder %s12, 3
    %p41 = por %p39, %p40
    %p42 = scmp.ne.s32.totalorder %s34, %s37
    %p43 = scmp.eq.s32.totalorder %s12, 0
    %p44 = por %p42, %p43
    %p45 = scmp.ne.s32.totalorder %s34, %s37
    %p46 = scmp.eq.s32.totalorder %s17, 3
    %p47 = por %p45, %p46
    %p48 = scmp.ne.s32.totalorder %s37, %s38
    %p49 = scmp.eq.s32.totalorder %s17, 0
    %p50 = por %p48, %p49
    %p51 = scmp.ne.s32.totalorder %s37, %s38
    %p52 = scmp.eq.s32.totalorder %s18, 3
    %p53 = por %p51, %p52
    %p55 = scmp.ne.s32.totalorder %s38, %s54
    %p56 = scmp.eq.s32.totalorder %s18, 0
    %p57 = por %p55, %p56
    %s58 = ssub.s32 %s20, %s27
    %s59 = ssub.s32 %s19, %s31
    %s60 = sor.u32 %s58, %s59
    %p61 = scmp.eq.s32.totalorder %s60, 0
    %s63 = sadd.s32 %s62, 1
    %s64 = scalar_select %p61, %s62, %s63
    %p67 = pneg %p61
    %p68 = scmp.eq.s32.totalorder %s12, 3
    %p69 = por %p67, %p68
    %p70 = scmp.ne.s32.totalorder %s62, %s65
    %p71 = scmp.eq.s32.totalorder %s12, 0
    %p72 = por %p70, %p71
    %p73 = scmp.ne.s32.totalorder %s62, %s65
    %p74 = scmp.eq.s32.totalorder %s17, 3
    %p75 = por %p73, %p74
    %p76 = scmp.ne.s32.totalorder %s65, %s66
    %p77 = scmp.eq.s32.totalorder %s17, 0
    %p78 = por %p76, %p77
    %p79 = scmp.ne.s32.totalorder %s65, %s66
    %p80 = scmp.eq.s32.totalorder %s18, 3
    %p81 = por %p79, %p80
    %p83 = scmp.ne.s32.totalorder %s66, %s82
    %p84 = scmp.eq.s32.totalorder %s18, 0
    %p85 = por %p83, %p84
    %s86 = ssub.s32 %s20, %s27
    %p87 = scmp.eq.s32.totalorder %s86, 0
    %s89 = sadd.s32 %s88, 1
    %s90 = scalar_select %p87, %s88, %s89
    %p93 = pneg %p87
    %p94 = scmp.eq.s32.totalorder %s12, 3
    %p95 = por %p93, %p94
    %p96 = scmp.ne.s32.totalorder %s88, %s91
    %p97 = scmp.eq.s32.totalorder %s12, 0
    %p98 = por %p96, %p97
    %p99 = scmp.ne.s32.totalorder %s88, %s91
    %p100 = scmp.eq.s32.totalorder %s17, 3
    %p101 = por %p99, %p100
    %p102 = scmp.ne.s32.totalorder %s91, %s92
    %p103 = scmp.eq.s32.totalorder %s17, 0
    %p104 = por %p102, %p103
    %p105 = scmp.ne.s32.totalorder %s91, %s92
    %p106 = scmp.eq.s32.totalorder %s18, 3
    %p107 = por %p105, %p106
    %p109 = scmp.ne.s32.totalorder %s92, %s108
    %p110 = scmp.eq.s32.totalorder %s18, 0
    %p111 = por %p109, %p110
    %s112 = ssub.s32 %s20, %s27
    %p113 = scmp.eq.s32.totalorder %s112, 0
    %s115 = sadd.s32 %s114, 1
    %s116 = scalar_select %p113, %s114, %s115
    %p119 = pneg %p113
    %p120 = scmp.eq.s32.totalorder %s12, 3
    %p121 = por %p119, %p120
    %p122 = scmp.ne.s32.totalorder %s114, %s117
    %p123 = scmp.eq.s32.totalorder %s12, 0
    %p124 = por %p122, %p123
    %p125 = scmp.ne.s32.totalorder %s114, %s117
    %p126 = scmp.eq.s32.totalorder %s17, 3
    %p127 = por %p125, %p126
    %p128 = scmp.ne.s32.totalorder %s117, %s118
    %p129 = scmp.eq.s32.totalorder %s17, 0
    %p130 = por %p128, %p129
    %p131 = scmp.ne.s32.totalorder %s117, %s118
    %p132 = scmp.eq.s32.totalorder %s18, 3
    %p133 = por %p131, %p132
    %p135 = scmp.ne.s32.totalorder %s118, %s134
    %p136 = scmp.eq.s32.totalorder %s18, 0
    %p137 = por %p135, %p136
    %s138 = ssub.s32 %s20, %s27
    %p139 = scmp.eq.s32.totalorder %s138, 0
    %s141 = sadd.s32 %s140, 1
    %s142 = scalar_select %p139, %s140, %s141
    %p145 = pneg %p139
    %p146 = scmp.eq.s32.totalorder %s12, 3
    %p147 = por %p145, %p146
    %p148 = scmp.ne.s32.totalorder %s140, %s143
    %p149 = scmp.eq.s32.totalorder %s12, 0
    %p150 = por %p148, %p149
    %p151 = scmp.ne.s32.totalorder %s140, %s143
    %p152 = scmp.eq.s32.totalorder %s17, 3
    %p153 = por %p151, %p152
    %p154 = scmp.ne.s32.totalorder %s143, %s144
    %p155 = scmp.eq.s32.totalorder %s17, 0
    %p156 = por %p154, %p155
    %p157 = scmp.ne.s32.totalorder %s143, %s144
    %p158 = scmp.eq.s32.totalorder %s18, 3
    %p159 = por %p157, %p158
    %p161 = scmp.ne.s32.totalorder %s144, %s160
    %p162 = scmp.eq.s32.totalorder %s18, 0
    %p163 = por %p161, %p162
    %s164 = ssub.s32 %s20, %s27
    %p165 = scmp.eq.s32.totalorder %s164, 0
    %s167 = sadd.s32 %s166, 1
    %s168 = scalar_select %p165, %s166, %s167
    %p171 = pneg %p165
    %p172 = scmp.eq.s32.totalorder %s12, 3
    %p173 = por %p171, %p172
    %p174 = scmp.ne.s32.totalorder %s166, %s169
    %p175 = scmp.eq.s32.totalorder %s12, 0
    %p176 = por %p174, %p175
    %p177 = scmp.ne.s32.totalorder %s166, %s169
    %p178 = scmp.eq.s32.totalorder %s17, 3
    %p179 = por %p177, %p178
    %p180 = scmp.ne.s32.totalorder %s169, %s170
    %p181 = scmp.eq.s32.totalorder %s17, 0
    %p182 = por %p180, %p181
    %p183 = scmp.ne.s32.totalorder %s169, %s170
    %p184 = scmp.eq.s32.totalorder %s18, 3
    %p185 = por %p183, %p184
    %p187 = scmp.ne.s32.totalorder %s170, %s186
    %p188 = scmp.eq.s32.totalorder %s18, 0
    %p189 = por %p187, %p188
    %s190 = ssub.s32 %s19, %s31
    %p191 = scmp.eq.s32.totalorder %s190, 0
    %s193 = sadd.s32 %s192, 1
    %s194 = scalar_select %p191, %s192, %s193
    %p197 = pneg %p191
    %p198 = scmp.eq.s32.totalorder %s12, 3
    %p199 = por %p197, %p198
    %p200 = scmp.ne.s32.totalorder %s192, %s195
    %p201 = scmp.eq.s32.totalorder %s12, 0
    %p202 = por %p200, %p201
    %p203 = scmp.ne.s32.totalorder %s192, %s195
    %p204 = scmp.eq.s32.totalorder %s17, 3
    %p205 = por %p203, %p204
    %p206 = scmp.ne.s32.totalorder %s195, %s196
    %p207 = scmp.eq.s32.totalorder %s17, 0
    %p208 = por %p206, %p207
    %p209 = scmp.ne.s32.totalorder %s195, %s196
    %p210 = scmp.eq.s32.totalorder %s18, 3
    %p211 = por %p209, %p210
    %p213 = scmp.ne.s32.totalorder %s196, %s212
    %p214 = scmp.eq.s32.totalorder %s18, 0
    %p215 = por %p213, %p214
    %p216 = scmp.le.s32.totalorder 1, %s12
    %p217 = scmp.lt.s32.totalorder %s12, 5
    %p218 = pnand %p216, %p217
    %p219 = pneg %p218
    // Predicated region
    $region9: #{moe_mamba_forward.16} parent=5 // pred_check
      _
    $region10: #{moe_mamba_forward.16} parent=5 // pred_check_branch
      %221 = sbr.rel (%p218) target = $region12
    $region11: #{moe_mamba_forward.16} parent=5 // pred_region
      %s222 = ssub.s32 %s12, 1
      // Predicated region
      $region13: #{moe_mamba_forward.16} parent=11 // pred_check
        %p223 = pneg %p50
      $region14: #{moe_mamba_forward.16} parent=11 // pred_check_branch
        %225 = sbr.rel (%p223) target = $region16
      $region15: #{moe_mamba_forward.16} parent=11 // pred_region
        %s226 = smul.u32 2, %s21
        %p227 = scmp.lt.s32.totalorder %s226, 1
        %s228 = scalar_select %p227, %s226, 1
        %s229 = smul.addr %s228, 4
        %s230 = scalar_lea.vmem %s0, %s229
        %s231 = smul.u32 2, %s21
      $region16: #{moe_mamba_forward.16} parent=11 // pred_fallthru
        _
    $region12: #{moe_mamba_forward.16} parent=5 // pred_fallthru
      _
    %p232 = scmp.lt.s32.totalorder %s12, 4
    // Predicated region
    $region17: #{moe_mamba_forward.16} parent=5 // pred_check
      %p233 = pneg %p232
    $region18: #{moe_mamba_forward.16} parent=5 // pred_check_branch
      %235 = sbr.rel (%p233) target = $region20
    $region19: #{moe_mamba_forward.16} parent=5 // pred_region
      // Predicated region
      $region21: #{moe_mamba_forward.16} parent=19 // pred_check
        %p236 = pneg %p72
      $region22: #{moe_mamba_forward.16} parent=19 // pred_check_branch
        %238 = sbr.rel (%p236) target = $region24
      $region23: #{moe_mamba_forward.16} parent=19 // pred_region
        %s239 = smul.u32 2, %s19
        %p240 = scmp.lt.s32.totalorder %s20, 3
        %s241 = scalar_select %p240, %s20, 3
        %p242 = scmp.lt.s32.totalorder %s239, 1
        %s243 = scalar_select %p242, %s239, 1
        %s244 = smul.addr %s241, 2
        %s245 = sadd.s32 %s243, %s244
        %s246 = smul.addr %s245, 8
        %s247 = scalar_lea.vmem %s1, %s246
        %s248 = smul.u32 2, %s19
      $region24: #{moe_mamba_forward.16} parent=19 // pred_fallthru
        _
      // Predicated region
      $region25: #{moe_mamba_forward.16} parent=19 // pred_check
        %p249 = pneg %p98
      $region26: #{moe_mamba_forward.16} parent=19 // pred_check_branch
        %251 = sbr.rel (%p249) target = $region28
      $region27: #{moe_mamba_forward.16} parent=19 // pred_region
        %p252 = scmp.lt.s32.totalorder %s20, 3
        %s253 = scalar_select %p252, %s20, 3
        %s254 = smul.addr %s253, 4
        %s255 = smul.addr %s254, 4
        %s256 = scalar_lea.vmem %s2, %s255
      $region28: #{moe_mamba_forward.16} parent=19 // pred_fallthru
        _
      // Predicated region
      $region29: #{moe_mamba_forward.16} parent=19 // pred_check
        %p257 = pneg %p124
      $region30: #{moe_mamba_forward.16} parent=19 // pred_check_branch
        %259 = sbr.rel (%p257) target = $region32
      $region31: #{moe_mamba_forward.16} parent=19 // pred_region
        %p260 = scmp.lt.s32.totalorder %s20, 3
        %s261 = scalar_select %p260, %s20, 3
        %s262 = scalar_lea.vmem %s3, %s261
      $region32: #{moe_mamba_forward.16} parent=19 // pred_fallthru
        _
      // Predicated region
      $region33: #{moe_mamba_forward.16} parent=19 // pred_check
        %p263 = pneg %p150
      $region34: #{moe_mamba_forward.16} parent=19 // pred_check_branch
        %265 = sbr.rel (%p263) target = $region36
      $region35: #{moe_mamba_forward.16} parent=19 // pred_region
        %p266 = scmp.lt.s32.totalorder %s20, 3
        %s267 = scalar_select %p266, %s20, 3
        %s268 = smul.addr %s267, 16
        %s269 = smul.addr %s268, 4
        %s270 = scalar_lea.vmem %s4, %s269
      $region36: #{moe_mamba_forward.16} parent=19 // pred_fallthru
        _
      // Predicated region
      $region37: #{moe_mamba_forward.16} parent=19 // pred_check
        %p271 = pneg %p176
      $region38: #{moe_mamba_forward.16} parent=19 // pred_check_branch
        %273 = sbr.rel (%p271) target = $region40
      $region39: #{moe_mamba_forward.16} parent=19 // pred_region
        %p274 = scmp.lt.s32.totalorder %s20, 3
        %s275 = scalar_select %p274, %s20, 3
        %s276 = scalar_lea.vmem %s5, %s275
      $region40: #{moe_mamba_forward.16} parent=19 // pred_fallthru
        _
    $region20: #{moe_mamba_forward.16} parent=5 // pred_fallthru
      _
    %p277 = scmp.le.s32.totalorder 1, %s12
    %p278 = scmp.lt.s32.totalorder %s12, 5
    %p279 = pnand %p277, %p278
    %p280 = pneg %p279
    // Predicated region
    $region41: #{moe_mamba_forward.16} parent=5 // pred_check
      _
    $region42: #{moe_mamba_forward.16} parent=5 // pred_check_branch
      %282 = sbr.rel (%p279) target = $region44
    $region43: #{moe_mamba_forward.16} parent=5 // pred_region
      %s283 = ssub.s32 %s12, 1
      %s284 = smul.u32 2, %s21
      %p285 = scmp.lt.s32.totalorder %s284, 1
      %s286 = scalar_select %p285, %s284, 1
      %s287 = smul.addr %s286, 4
      %s288 = scalar_lea.vmem %s0, %s287
      %p289 = pneg %p50
      %p290 = pneg %p47
      %s291 = smul.u32 2, %s21
      %p292 = scmp.lt.s32.totalorder %s22, 3
      %s293 = scalar_select %p292, %s22, 3
      %p294 = scmp.lt.s32.totalorder %s291, 1
      %s295 = scalar_select %p294, %s291, 1
      %s296 = smul.addr %s293, 2
      %s297 = sadd.s32 %s295, %s296
      %s298 = smul.addr %s297, 8
      %s299 = scalar_lea.vmem %s1, %s298
      %p300 = pneg %p78
      %p301 = pneg %p75
      %p302 = scmp.lt.s32.totalorder %s22, 3
      %s303 = scalar_select %p302, %s22, 3
      %s304 = smul.addr %s303, 4
      %s305 = smul.addr %s304, 4
      %s306 = scalar_lea.vmem %s2, %s305
      %p307 = pneg %p104
      %p308 = pneg %p101
      %p309 = scmp.lt.s32.totalorder %s22, 3
      %s310 = scalar_select %p309, %s22, 3
      %s311 = scalar_lea.vmem %s3, %s310
      %p312 = pneg %p130
      %p313 = pneg %p127
      %p314 = scmp.lt.s32.totalorder %s22, 3
      %s315 = scalar_select %p314, %s22, 3
      %s316 = smul.addr %s315, 16
      %s317 = smul.addr %s316, 4
      %s318 = scalar_lea.vmem %s4, %s317
      %p319 = pneg %p156
      %p320 = pneg %p153
      %p321 = scmp.lt.s32.totalorder %s22, 3
      %s322 = scalar_select %p321, %s22, 3
      %s323 = scalar_lea.vmem %s5, %s322
      %p324 = pneg %p182
      %p325 = pneg %p179
      %p326 = pneg %p208
      %p327 = pneg %p205
      %s328 = smul.u32 2, %s21
      %p329 = scmp.lt.s32.totalorder %s328, 1
      %s330 = scalar_select %p329, %s328, 1
      %s331 = smul.addr %s330, 4
      %s332 = scalar_lea.vmem %s6, %s331
      %s333 = smul.u32 2, %s21
      %p334 = scmp.lt.s32.totalorder %s333, 1
      %s335 = scalar_select %p334, %s333, 1
      %s336 = smul.addr %s335, 4
      %s337 = scalar_lea.vmem %s0, %s336
      %s338 = smul.u32 2, %s21
      %s339 = smul.u32 2, %s21
      %p340 = scmp.lt.s32.totalorder %s22, 3
      %s341 = scalar_select %p340, %s22, 3
      %p342 = scmp.lt.s32.totalorder %s339, 1
      %s343 = scalar_select %p342, %s339, 1
      %s344 = smul.addr %s341, 2
      %s345 = sadd.s32 %s343, %s344
      %s346 = smul.addr %s345, 8
      %s347 = scalar_lea.vmem %s1, %s346
      %s348 = smul.u32 2, %s21
      %p349 = scmp.lt.s32.totalorder %s22, 3
      %s350 = scalar_select %p349, %s22, 3
      %s351 = smul.addr %s350, 4
      %s352 = smul.addr %s351, 4
      %s353 = scalar_lea.vmem %s2, %s352
      %p354 = scmp.lt.s32.totalorder %s22, 3
      %s355 = scalar_select %p354, %s22, 3
      %s356 = scalar_lea.vmem %s3, %s355
      %p357 = scmp.lt.s32.totalorder %s22, 3
      %s358 = scalar_select %p357, %s22, 3
      %s359 = smul.addr %s358, 16
      %s360 = smul.addr %s359, 4
      %s361 = scalar_lea.vmem %s4, %s360
      %p362 = scmp.lt.s32.totalorder %s22, 3
      %s363 = scalar_select %p362, %s22, 3
      %s364 = scalar_lea.vmem %s5, %s363
      %s365 = smul.u32 2, %s21
      %p366 = scmp.lt.s32.totalorder %s365, 1
      %s367 = scalar_select %p366, %s365, 1
      %s368 = smul.addr %s367, 4
      %s369 = scalar_lea.vmem %s6, %s368
      %s370 = smul.u32 2, %s21
      %p372 = scmp.eq.s32.totalorder %s22, 0
      // Predicated region
      $region45: #{moe_mamba_forward.16} parent=43 // pred_check
        %p373 = pneg %p372
      $region46: #{moe_mamba_forward.16} parent=43 // pred_check_branch
        %375 = sbr.rel (%p373) target = $region48
      $region47: #{moe_mamba_forward.16} parent=43 // pred_region
        %vm376 = vcmask 261120
        %377 = vst.msk [vmem:[#allocation2] sm:$0xff] %vm376, 0.0
        %378 = vst.msk [vmem:[#allocation2 + $0x8] sm:$0xff] %vm376, 0.0
      $region48: #{moe_mamba_forward.16} parent=43 // pred_fallthru
        _
      %v379 = vld [vmem:[%s337] sm:$0xf]
      %v380 = vld [vmem:[%s337 + $0x4] sm:$0xf]
      %v381 = vld [vmem:[%s353] sm:$0xf]
      %v382 = vld [vmem:[%s353 + $0x4] sm:$0xf]
      %v383 = vld [vmem:[%s353 + $0x8] sm:$0xf]
      %v384 = vld [vmem:[%s353 + $0xc] sm:$0xf]
      %v385 = vld [vmem:[%s356] sm:$0x1]
      %v387 = vlaneseq
      %v388 = vshrl.u32 %v387, 7
      %v389 = vsub.s32 0, %v388
      %v390 = vrot.slane %v385, %v389
      %v394 = vunpack.c.l.b16 %v379
      %v395 = vunpack.c.l.b16 %v380
      %v396 = vpack.c.b16 %v395, %v394
      %v401 = vunpack.c.l.b16 %v381
      %v402 = vunpack.c.l.b16 %v382
      %v403 = vunpack.c.l.b16 %v383
      %v404 = vunpack.c.l.b16 %v384
      %v405 = vpack.c.b16 %v402, %v401
      %v406 = vpack.c.b16 %v404, %v403
      %vm409 = vcmask 261120
      %v411 = vsel %vm409, %v396, 0
      %413 = vmatprep.subr.bf16.mxu0 0
      %414 = vmatpush1.bf16.msra.mxu0 %v405
      %415 = vmatprep.subr.bf16.mxu0 0
      %416 = vmatpush1.bf16.msra.mxu0 %v406
      %417 = vmatprep.subr.bf16.mxu0 0
      %418 = vmatpush1.bf16.msra.mxu0 0
      %419 = vmatprep.subr.bf16.mxu0 0
      %420 = vmatpush1.bf16.msra.mxu0 0
      %421 = vmatprep.subr.bf16.mxu0 0
      %422 = vmatpush1.bf16.msra.mxu0 0
      %423 = vmatprep.subr.bf16.mxu0 0
      %424 = vmatpush1.bf16.msra.mxu0 0
      %425 = vmatprep.subr.bf16.mxu0 0
      %426 = vmatpush1.bf16.msra.mxu0 0
      %427 = vmatprep.subr.bf16.mxu0 0
      %428 = vmatpush1.bf16.msra.mxu0 0
      %429 = vmatprep.subr.bf16.mxu0 0
      %430 = vmatpush1.bf16.msra.mxu0 0
      %431 = vmatprep.subr.bf16.mxu0 0
      %432 = vmatpush1.bf16.msra.mxu0 0
      %433 = vmatprep.subr.bf16.mxu0 0
      %434 = vmatpush1.bf16.msra.mxu0 0
      %435 = vmatprep.subr.bf16.mxu0 0
      %436 = vmatpush1.bf16.msra.mxu0 0
      %437 = vmatprep.subr.bf16.mxu0 0
      %438 = vmatpush1.bf16.msra.mxu0 0
      %439 = vmatprep.subr.bf16.mxu0 0
      %440 = vmatpush1.bf16.msra.mxu0 0
      %441 = vmatprep.subr.bf16.mxu0 0
      %442 = vmatpush1.bf16.msra.mxu0 0
      %443 = vmatprep.subr.bf16.mxu0 0
      %444 = vmatpush1.bf16.msra.mxu0 0
      %445 = vmatprep.mubr.bf16.mxu0 0
      %446 = vmatmul.mubr.bf16.gmra.mrb[0].mxu0 %v411
      %v447 = vpop.f32.mrb[0].mxu0
      %v448 = vadd.f32 %v390, %v447
      %v449 = vpop.f32.mrb[0].mxu0
      %v450 = vpop.f32.mrb[0].mxu0
      %v451 = vadd.f32 %v390, %v450
      %v452 = vpop.f32.mrb[0].mxu0
      %453 = vdwg.mxu0
      %v454 = vmul.f32 %v448, 0.5
      %v455 = vmul.f32 %v451, 0.5
      %v456 = vmul.f32 %v448, 0.044715
      %v457 = vmul.f32 %v451, 0.044715
      %v458 = vmul.f32 %v456, %v448
      %v459 = vmul.f32 %v457, %v451
      %v460 = vmul.f32 %v458, %v448
      %v461 = vmul.f32 %v459, %v451
      %v462 = vadd.f32 %v448, %v460
      %v463 = vadd.f32 %v451, %v461
      %v464 = vmul.f32 %v462, 0.7978846
      %v465 = vmul.f32 %v463, 0.7978846
      %v466 = vtanh.pop %v464
      %v467 = vtanh.pop %v465
      %v468 = vadd.f32 %v466, 1.0
      %v469 = vadd.f32 %v467, 1.0
      %v470 = vmul.f32 %v454, %v468
      %v471 = vmul.f32 %v455, %v469
      %v472 = vpack.c.bf16 %v471, %v470
      %v473 = vld [vmem:[%s361] sm:$0xf]
      %v474 = vld [vmem:[%s361 + $0x4] sm:$0xf]
      %v475 = vld [vmem:[%s361 + $0x8] sm:$0xf]
      %v476 = vld [vmem:[%s361 + $0xc] sm:$0xf]
      %v477 = vld [vmem:[%s361 + $0x10] sm:$0xf]
      %v478 = vld [vmem:[%s361 + $0x14] sm:$0xf]
      %v479 = vld [vmem:[%s361 + $0x18] sm:$0xf]
      %v480 = vld [vmem:[%s361 + $0x1c] sm:$0xf]
      %v481 = vld [vmem:[%s361 + $0x20] sm:$0xf]
      %v482 = vld [vmem:[%s361 + $0x24] sm:$0xf]
      %v483 = vld [vmem:[%s361 + $0x28] sm:$0xf]
      %v484 = vld [vmem:[%s361 + $0x2c] sm:$0xf]
      %v485 = vld [vmem:[%s361 + $0x30] sm:$0xf]
      %v486 = vld [vmem:[%s361 + $0x34] sm:$0xf]
      %v487 = vld [vmem:[%s361 + $0x38] sm:$0xf]
      %v488 = vld [vmem:[%s361 + $0x3c] sm:$0xf]
      %v489 = vld [vmem:[%s364] sm:$0x1]
      %v491 = vlaneseq
      %v492 = vshrl.u32 %v491, 7
      %v493 = vsub.s32 0, %v492
      %v494 = vrot.slane %v489, %v493
      %v512 = vunpack.c.l.b16 %v473
      %v513 = vunpack.c.l.b16 %v474
      %v514 = vunpack.c.l.b16 %v475
      %v515 = vunpack.c.l.b16 %v476
      %v516 = vunpack.c.l.b16 %v477
      %v517 = vunpack.c.l.b16 %v478
      %v518 = vunpack.c.l.b16 %v479
      %v519 = vunpack.c.l.b16 %v480
      %v520 = vunpack.c.l.b16 %v481
      %v521 = vunpack.c.l.b16 %v482
      %v522 = vunpack.c.l.b16 %v483
      %v523 = vunpack.c.l.b16 %v484
      %v524 = vunpack.c.l.b16 %v485
      %v525 = vunpack.c.l.b16 %v486
      %v526 = vunpack.c.l.b16 %v487
      %v527 = vunpack.c.l.b16 %v488
      %v528 = vpack.c.b16 %v513, %v512
      %v529 = vpack.c.b16 %v515, %v514
      %v530 = vpack.c.b16 %v517, %v516
      %v531 = vpack.c.b16 %v519, %v518
      %v532 = vpack.c.b16 %v521, %v520
      %v533 = vpack.c.b16 %v523, %v522
      %v534 = vpack.c.b16 %v525, %v524
      %v535 = vpack.c.b16 %v527, %v526
      %544 = vmatprep.subr.bf16.mxu0 0
      %545 = vmatpush1.bf16.msra.mxu0 %v528
      %546 = vmatprep.subr.bf16.mxu0 0
      %547 = vmatpush1.bf16.msra.mxu0 %v529
      %548 = vmatprep.subr.bf16.mxu0 0
      %549 = vmatpush1.bf16.msra.mxu0 %v530
      %550 = vmatprep.subr.bf16.mxu0 0
      %551 = vmatpush1.bf16.msra.mxu0 %v531
      %552 = vmatprep.subr.bf16.mxu0 0
      %553 = vmatpush1.bf16.msra.mxu0 %v532
      %554 = vmatprep.subr.bf16.mxu0 0
      %555 = vmatpush1.bf16.msra.mxu0 %v533
      %556 = vmatprep.subr.bf16.mxu0 0
      %557 = vmatpush1.bf16.msra.mxu0 %v534
      %558 = vmatprep.subr.bf16.mxu0 0
      %559 = vmatpush1.bf16.msra.mxu0 %v535
      %560 = vmatprep.subr.bf16.mxu0 0
      %561 = vmatpush1.bf16.msra.mxu0 0
      %562 = vmatprep.subr.bf16.mxu0 0
      %563 = vmatpush1.bf16.msra.mxu0 0
      %564 = vmatprep.subr.bf16.mxu0 0
      %565 = vmatpush1.bf16.msra.mxu0 0
      %566 = vmatprep.subr.bf16.mxu0 0
      %567 = vmatpush1.bf16.msra.mxu0 0
      %568 = vmatprep.subr.bf16.mxu0 0
      %569 = vmatpush1.bf16.msra.mxu0 0
      %570 = vmatprep.subr.bf16.mxu0 0
      %571 = vmatpush1.bf16.msra.mxu0 0
      %572 = vmatprep.subr.bf16.mxu0 0
      %573 = vmatpush1.bf16.msra.mxu0 0
      %574 = vmatprep.subr.bf16.mxu0 0
      %575 = vmatpush1.bf16.msra.mxu0 0
      %576 = vmatprep.mubr.bf16.mxu0 0
      %577 = vmatmul.mubr.bf16.gmra.mrb[0].mxu0 %v472
      %v578 = vpop.f32.mrb[0].mxu0
      %v579 = vadd.f32 %v494, %v578
      %v580 = vpop.f32.mrb[0].mxu0
      %v581 = vpop.f32.mrb[0].mxu0
      %v582 = vadd.f32 %v494, %v581
      %v583 = vpop.f32.mrb[0].mxu0
      %584 = vdwg.mxu0
      %vm585 = vcmp.ne.f32.partialorder %v579, %v579
      %vm586 = vcmp.ne.f32.partialorder %v582, %v582
      %v587 = vsel %vm585, 0.0, %v579
      %v588 = vsel %vm586, 0.0, %v582
      %v589 = vld [vmem:[%s347] sm:$0xff]
      %v590 = vld [vmem:[%s347 + $0x8] sm:$0xff]
      %vm591 = vcmp.ne.f32.partialorder %v589, %v589
      %vm592 = vcmp.ne.f32.partialorder %v590, %v590
      %v593 = vsel %vm591, 0.0, %v589
      %v594 = vsel %vm592, 0.0, %v590
      %v595 = vld [vmem:[#allocation2] sm:$0xff]
      %v596 = vld [vmem:[#allocation2 + $0x8] sm:$0xff]
      %598 = vset.pattern.permute.xlu0 0
      %599 = vperm.xlu0 %598, %v593
      %v600 = vpop.permute.xlu0 %599
      %603 = vset.pattern.permute.xlu0 0
      %604 = vperm.xlu0 %603, %v594
      %v605 = vpop.permute.xlu0 %604
      %v607 = vmul.f32 %v600, %v587
      %v608 = vmul.f32 %v605, %v588
      %v609 = vadd.f32 %v595, %v607
      %v610 = vadd.f32 %v596, %v608
      %611 = vst.msk [vmem:[#allocation2] sm:$0xff] %vm409, %v609
      %612 = vst.msk [vmem:[#allocation2 + $0x8] sm:$0xff] %vm409, %v610
      %p613 = scmp.eq.s32.totalorder %s22, 3
      // Predicated region
      $region49: #{moe_mamba_forward.16} parent=43 // pred_check
        %p614 = pneg %p613
      $region50: #{moe_mamba_forward.16} parent=43 // pred_check_branch
        %616 = sbr.rel (%p614) target = $region52
      $region51: #{moe_mamba_forward.16} parent=43 // pred_region
        %v617 = vld [vmem:[#allocation2] sm:$0xff]
        %v618 = vld [vmem:[#allocation2 + $0x8] sm:$0xff]
        %v619 = vpack.c.bf16 %v618, %v617
        %v621 = vunpack.c.l.b16 %v619
        %v622 = vunpack.c.h.b16 %v619
        %v623 = vpack.c.b16 %v621, %v621
        %v624 = vpack.c.b16 %v622, %v622
        %vm627 = vcmask 257024
        %628 = vst.msk [vmem:[%s369] sm:$0xf] %vm627, %v623
        %629 = vst.msk [vmem:[%s369 + $0x4] sm:$0xf] %vm627, %v624
      $region52: #{moe_mamba_forward.16} parent=43 // pred_fallthru
        _
      %s630 = smul.u32 2, %s21
      %p631 = scmp.lt.s32.totalorder %s630, 1
      %s632 = scalar_select %p631, %s630, 1
      %s633 = smul.addr %s632, 4
      %s634 = scalar_lea.vmem %s6, %s633
      // Predicated region
      $region53: #{moe_mamba_forward.16} parent=43 // pred_check
        %p635 = pneg %p205
      $region54: #{moe_mamba_forward.16} parent=43 // pred_check_branch
        %637 = sbr.rel (%p635) target = $region56
      $region55: #{moe_mamba_forward.16} parent=43 // pred_region
        %s638 = smul.u32 2, %s21
      $region56: #{moe_mamba_forward.16} parent=43 // pred_fallthru
        _
      // Predicated region
      $region57: #{moe_mamba_forward.16} parent=43 // pred_check
        %p639 = pneg %p205
      $region58: #{moe_mamba_forward.16} parent=43 // pred_check_branch
        %641 = sbr.rel (%p639) target = $region60
      $region59: #{moe_mamba_forward.16} parent=43 // pred_region
        %s642 = smul.u32 2, %s21
        %p643 = scmp.lt.s32.totalorder %s642, 1
        %s644 = scalar_select %p643, %s642, 1
        %s645 = smul.addr %s644, 4
        %s646 = scalar_lea.vmem %s6, %s645
      $region60: #{moe_mamba_forward.16} parent=43 // pred_fallthru
        _
    $region44: #{moe_mamba_forward.16} parent=5 // pred_fallthru
      _
    %p647 = scmp.le.s32.totalorder 2, %s12
    // Predicated region
    $region61: #{moe_mamba_forward.16} parent=5 // pred_check
      %p648 = pneg %p647
    $region62: #{moe_mamba_forward.16} parent=5 // pred_check_branch
      %650 = sbr.rel (%p648) target = $region64
    $region63: #{moe_mamba_forward.16} parent=5 // pred_region
      %s651 = ssub.s32 %s12, 2
    $region64: #{moe_mamba_forward.16} parent=5 // pred_fallthru
      _
  $region6: #{moe_mamba_forward.16} parent=0 // loop_footer
    %s16 = sadd.s32 1, %s12
  $region7: #{moe_mamba_forward.16} parent=0 // loop_footer_branch
    %11 = sbr.rel target = $region3
  $region8: #{moe_mamba_forward.16} parent=0 // loop_exit
    _

// kernel: moe_mamba_forward.23
$region0: #{moe_mamba_forward.23}
  #allocation0 [shape = 'u32[]', space=smem, size = 0x4, offset = 0x4, fixed_abs, tag = 'smem constant byte address 0x4 - core index']
  #allocation1 [shape = 'u32[144,128]{1,0:T(1,128)}', space=vmem, size = 0x12000, scoped, tag = 'internal scratch']
  #allocation2 [shape = 'f32[16,64]{1,0:T(8,128)}', space=vmem, size = 0x2000, scoped, tag = 'scratch operand']
  %s0 = inlined_call_operand.vmem [shape: bf16[16,32], index: 0, kind: input, shape index: {}]
  %s1 = inlined_call_operand.vmem [shape: bf16[32,64], index: 1, kind: input, shape index: {}]
  %s2 = inlined_call_operand.vmem [shape: f32[1,64], index: 2, kind: input, shape index: {}]
  %s3 = inlined_call_operand.hbm [shape: f32[16,64], index: 3, kind: output, shape index: {}]
  %s4 = sld [smem:[#allocation0]]
  $region30: #{moe_mamba_forward.23} parent=0
    _
  %s6 = ssub.s32 1, %s4
  %s7 = scalar_select 0, %s6, %s4
  $region1: #{moe_mamba_forward.23} parent=0
    #allocation3 [shape = 'u8[8192]{0}', space=vmem, size = 0x2000, scoped, tag = 'output window, operand 0, single buffered']
    #allocation4 [shape = 's32[1]{0}', space=sflag, size = 0x4, scoped, tag = 'scoped memory for moe_mamba_forward.23']
    %8 = vsyncpa [#allocation4], 0
    // Predicated region
    $region2: #{moe_mamba_forward.23} parent=1 // pred_check
      _
    $region3: #{moe_mamba_forward.23} parent=1 // pred_check_branch
      %10 = sbr.rel (0) target = $region5
    $region4: #{moe_mamba_forward.23} parent=1 // pred_region
      _
    $region5: #{moe_mamba_forward.23} parent=1 // pred_fallthru
      _
    // Predicated region
    $region6: #{moe_mamba_forward.23} parent=1 // pred_check
      _
    $region7: #{moe_mamba_forward.23} parent=1 // pred_check_branch
      %12 = sbr.rel (0) target = $region9
    $region8: #{moe_mamba_forward.23} parent=1 // pred_region
      _
    $region9: #{moe_mamba_forward.23} parent=1 // pred_fallthru
      _
    // Predicated region
    $region10: #{moe_mamba_forward.23} parent=1 // pred_check
      _
    $region11: #{moe_mamba_forward.23} parent=1 // pred_check_branch
      %14 = sbr.rel (0) target = $region13
    $region12: #{moe_mamba_forward.23} parent=1 // pred_region
      _
    $region13: #{moe_mamba_forward.23} parent=1 // pred_fallthru
      _
    %p16 = scmp.eq.s32.totalorder 0, 0
    // Predicated region
    $region14: #{moe_mamba_forward.23} parent=1 // pred_check
      %p17 = pneg %p16
    $region15: #{moe_mamba_forward.23} parent=1 // pred_check_branch
      %19 = sbr.rel (%p17) target = $region17
    $region16: #{moe_mamba_forward.23} parent=1 // pred_region
      %vm20 = vcmask 523264
      %21 = vst.msk [vmem:[#allocation2] sm:$0xff] %vm20, 0.0
      %22 = vst.msk [vmem:[#allocation2 + $0x8] sm:$0xff] %vm20, 0.0
    $region17: #{moe_mamba_forward.23} parent=1 // pred_fallthru
      _
    %v23 = vld [vmem:[#allocation2] sm:$0xff]
    %v24 = vld [vmem:[#allocation2 + $0x8] sm:$0xff]
    %v25 = vld [vmem:[%s0] sm:$0xf]
    %v26 = vld [vmem:[%s0 + $0x4] sm:$0xf]
    %v27 = vld [vmem:[%s1] sm:$0xf]
    %v28 = vld [vmem:[%s1 + $0x4] sm:$0xf]
    %v29 = vld [vmem:[%s1 + $0x8] sm:$0xf]
    %v30 = vld [vmem:[%s1 + $0xc] sm:$0xf]
    %v33 = vunpack.c.l.b16 %v25
    %v34 = vunpack.c.l.b16 %v26
    %v35 = vpack.c.b16 %v34, %v33
    %v40 = vunpack.c.l.b16 %v27
    %v41 = vunpack.c.l.b16 %v28
    %v42 = vunpack.c.l.b16 %v29
    %v43 = vunpack.c.l.b16 %v30
    %v44 = vpack.c.b16 %v41, %v40
    %v45 = vpack.c.b16 %v43, %v42
    %vm48 = vcmask 261120
    %v50 = vsel %vm48, %v35, 0
    %52 = vmatprep.subr.bf16.mxu0 0
    %53 = vmatpush1.bf16.msra.mxu0 %v44
    %54 = vmatprep.subr.bf16.mxu0 0
    %55 = vmatpush1.bf16.msra.mxu0 %v45
    %56 = vmatprep.subr.bf16.mxu0 0
    %57 = vmatpush1.bf16.msra.mxu0 0
    %58 = vmatprep.subr.bf16.mxu0 0
    %59 = vmatpush1.bf16.msra.mxu0 0
    %60 = vmatprep.subr.bf16.mxu0 0
    %61 = vmatpush1.bf16.msra.mxu0 0
    %62 = vmatprep.subr.bf16.mxu0 0
    %63 = vmatpush1.bf16.msra.mxu0 0
    %64 = vmatprep.subr.bf16.mxu0 0
    %65 = vmatpush1.bf16.msra.mxu0 0
    %66 = vmatprep.subr.bf16.mxu0 0
    %67 = vmatpush1.bf16.msra.mxu0 0
    %68 = vmatprep.subr.bf16.mxu0 0
    %69 = vmatpush1.bf16.msra.mxu0 0
    %70 = vmatprep.subr.bf16.mxu0 0
    %71 = vmatpush1.bf16.msra.mxu0 0
    %72 = vmatprep.subr.bf16.mxu0 0
    %73 = vmatpush1.bf16.msra.mxu0 0
    %74 = vmatprep.subr.bf16.mxu0 0
    %75 = vmatpush1.bf16.msra.mxu0 0
    %76 = vmatprep.subr.bf16.mxu0 0
    %77 = vmatpush1.bf16.msra.mxu0 0
    %78 = vmatprep.subr.bf16.mxu0 0
    %79 = vmatpush1.bf16.msra.mxu0 0
    %80 = vmatprep.subr.bf16.mxu0 0
    %81 = vmatpush1.bf16.msra.mxu0 0
    %82 = vmatprep.subr.bf16.mxu0 0
    %83 = vmatpush1.bf16.msra.mxu0 0
    %84 = vmatprep.mubr.bf16.mxu0 0
    %85 = vmatmul.mubr.bf16.gmra.mrb[0].mxu0 %v50
    %v86 = vpop.f32.mrb[0].mxu0
    %v87 = vadd.f32 0.0, %v86
    %v88 = vpop.f32.mrb[0].mxu0
    %v89 = vpop.f32.mrb[0].mxu0
    %v90 = vadd.f32 0.0, %v89
    %v91 = vpop.f32.mrb[0].mxu0
    %92 = vdwg.mxu0
    %v93 = vadd.f32 %v23, %v87
    %v94 = vadd.f32 %v24, %v90
    %vm95 = vcmask 523264
    %96 = vst.msk [vmem:[#allocation2] sm:$0xff] %vm95, %v93
    %97 = vst.msk [vmem:[#allocation2 + $0x8] sm:$0xff] %vm95, %v94
    // Predicated region
    $region18: #{moe_mamba_forward.23} parent=1 // pred_check
      %p98 = pneg %p16
    $region19: #{moe_mamba_forward.23} parent=1 // pred_check_branch
      %100 = sbr.rel (%p98) target = $region21
    $region20: #{moe_mamba_forward.23} parent=1 // pred_region
      %v101 = vld [vmem:[#allocation2] sm:$0xff]
      %v102 = vld [vmem:[#allocation2 + $0x8] sm:$0xff]
      %v103 = vld [vmem:[%s2] sm:$0x1]
      %v105 = vlaneseq
      %v106 = vshrl.u32 %v105, 7
      %v107 = vsub.s32 0, %v106
      %v108 = vrot.slane %v103, %v107
      %v110 = vadd.f32 %v101, %v108
      %v111 = vadd.f32 %v102, %v108
      %112 = vst.msk [vmem:[#allocation3] sm:$0xff] %vm95, %v110
      %113 = vst.msk [vmem:[#allocation3 + $0x8] sm:$0xff] %vm95, %v111
    $region21: #{moe_mamba_forward.23} parent=1 // pred_fallthru
      _
    // Predicated region
    $region22: #{moe_mamba_forward.23} parent=1 // pred_check
      _
    $region23: #{moe_mamba_forward.23} parent=1 // pred_check_branch
      %115 = sbr.rel (0) target = $region25
    $region24: #{moe_mamba_forward.23} parent=1 // pred_region
      %s117 = ssub.s32 256, 256
      %118 = vsyncadd [#allocation4], %s117
      %s119 = sshll.u32 [#allocation3], 4
      %s120 = int_to_ptr.vmem [resolvable:$true] %s119
      %125 = dma.vmem_to_hbm [thread:$0]  %s120, 256, %s3, [#allocation4], 128, 128, 8
    $region25: #{moe_mamba_forward.23} parent=1 // pred_fallthru
      _
    // Predicated region
    $region26: #{moe_mamba_forward.23} parent=1 // pred_check
      _
    $region27: #{moe_mamba_forward.23} parent=1 // pred_check_branch
      %127 = sbr.rel (0) target = $region29
    $region28: #{moe_mamba_forward.23} parent=1 // pred_region
      %128 = dma.done [#allocation4], 256
    $region29: #{moe_mamba_forward.23} parent=1 // pred_fallthru
      _
    %129 = vsyncpa [#allocation4], 1

</llo_original>
